<compile_context>
chip_gen: v6e
topology: v6e:2x2x1
jax: 0.10.0
libtpu: 0.0.40
codegen_flags: <defaults>
</compile_context>

<pallas_src>
import functools

import jax
import jax.numpy as jnp
import numpy as np
from jax import lax
from jax.experimental import pallas as pl
from jax.experimental.pallas import tpu as pltpu


def _round_up(x, m):
    return ((x + m - 1) // m) * m


# ----------------------------------------------------------------------------
# Fused Encoder kernel: one [C, TP] pixel tile (both streams) per grid step.
# ----------------------------------------------------------------------------
def _encoder_fused_kernel(
        x1_ref, x2_ref,
        ln_g_ref, ln_b_ref,
        w_in_x_ref, b_in_x_ref, w_in_z_ref, b_in_z_ref,
        w_out_ref, b_out_ref,
        ng_d_ref, ng_a_ref, nb_d_ref, nb_a_ref,
        cw_d_ref, cw_a_ref, cb_ref,
        o_ref,
        *, depth, eps, small_c, unroll_depth):
    c, tp = x1_ref.shape

    # Merge the two streams along the lane axis so the shared-weight depth
    # loop is executed once per tile ([C, 2*TP]); both offsets are multiples
    # of 128 so the later split is free.
    f = jnp.concatenate(
        [x1_ref[...].astype(jnp.float32), x2_ref[...].astype(jnp.float32)],
        axis=-1)                                                  # [C, 2*TP]

    def layer_norm_c(x, gamma, beta):
        # Per-pixel LayerNorm over the channel (sublane) axis.
        mu = jnp.mean(x, axis=0, keepdims=True)                   # [1, L]
        var = jnp.mean(jnp.square(x - mu), axis=0, keepdims=True)
        return (x - mu) * lax.rsqrt(var + eps) * gamma + beta

    def silu(v):
        return v * jax.nn.sigmoid(v)

    def channel_mix(w, h):
        # w: [C_out, C_in] (already in its MXU dtype), h: [C_in, L] f32.
        if small_c:
            # C <= 8: an MXU contraction would be ~97% padding; a handful of
            # broadcast FMAs on lane-dense rows avoids MXU push/pop latency.
            w32 = w.astype(jnp.float32)
            acc = w32[:, 0:1] * h[0:1, :]
            for j in range(1, w.shape[1]):
                acc = acc + w32[:, j:j + 1] * h[j:j + 1, :]
            return acc
        return jnp.dot(w, h.astype(w.dtype),
                       preferred_element_type=jnp.float32)

    def mamba_blk(x, gamma, beta, wx, bx, wz, bz, wo, bo):
        # TODO(synk): MambaBlk is referenced but not defined in the provided
        # source; stand-in = pre-LN gated (SiLU) channel mix + residual.  The
        # selective scan / causal depthwise conv1d of a real Mamba block
        # cannot be reproduced without its definition.
        h = layer_norm_c(x, gamma, beta)
        ux = channel_mix(wx, h) + bx
        uz = channel_mix(wz, h) + bz
        y = channel_mix(wo, silu(ux) * silu(uz)) + bo
        return x + y                                              # f32 residual

    def run_layer(d, x):
        return mamba_blk(x, ln_g_ref[d], ln_b_ref[d],
                         w_in_x_ref[d], b_in_x_ref[d],
                         w_in_z_ref[d], b_in_z_ref[d],
                         w_out_ref[d], b_out_ref[d])

    if unroll_depth:
        for d in range(depth):
            f = run_layer(d, f)
    else:
        # Bound vreg live ranges for deep stacks (dynamic weight-ref index).
        f = lax.fori_loop(0, depth, run_layer, f)

    # Split back into the two streams (static 128-multiple lane slices).
    f1 = f[:, :tp]
    f2 = f[:, tp:]

    # ---- tail: |diff| / add -> LayerNorm(2C) -> 1x1 conv --------------------
    diff = jnp.abs(f1 - f2)                                       # [C, TP]
    add = f1 + f2                                                 # [C, TP]

    # LayerNorm stats of the 2C-channel concat, computed from the two halves
    # (no concat materialised).
    c2 = 2.0 * c
    mu = (jnp.sum(diff, axis=0, keepdims=True) +
          jnp.sum(add, axis=0, keepdims=True)) / c2
    var = (jnp.sum(jnp.square(diff - mu), axis=0, keepdims=True) +
           jnp.sum(jnp.square(add - mu), axis=0, keepdims=True)) / c2
    inv = lax.rsqrt(var + eps)
    dn = (diff - mu) * inv * ng_d_ref[...] + nb_d_ref[...]
    an = (add - mu) * inv * ng_a_ref[...] + nb_a_ref[...]

    # 1x1 conv == channel matmul, accumulated over the two weight halves.
    out = channel_mix(cw_d_ref[...], dn) + channel_mix(cw_a_ref[...], an)
    out = out + cb_ref[...]
    o_ref[...] = out.astype(o_ref.dtype)


# ----------------------------------------------------------------------------
# Spec / sizing helpers.
# ----------------------------------------------------------------------------
def _weight_spec(shape, single_buffer):
    ndim = len(shape)
    index_map = lambda bi, pi: (0,) * ndim
    if single_buffer:
        # Constant-index blocks never change: double-buffering them is pure
        # VMEM waste (matters for production C/depth under v7x's 64 MiB VMEM).
        return pl.BlockSpec(shape, index_map, pipeline_mode=pl.Buffered(1))
    return pl.BlockSpec(shape, index_map)


def _choose_pixel_tile(hw, batch, max_tile):
    """Lane tile: multiple of 128, as large as the cap allows, preferring a
    tile that divides H*W exactly (no pad / output-slice HBM passes) and
    leaving >= 2 parallel grid steps when batch == 1 (v7x has 2 TensorCores)."""
    max_tile = max(128, (int(max_tile) // 128) * 128)
    if hw % 128 == 0:
        cap = hw if batch > 1 else max(128, (hw // 2 // 128) * 128)
        cand = min(max_tile, cap)
        while cand > 128 and hw % cand != 0:
            cand -= 128
        return max(cand, 128)
    # Ragged pixel count: fall back to zero padding (eps > 0 keeps padded
    # columns finite; they are sliced off in the wrapper).
    return min(max_tile, _round_up(hw, 128))


def _vmem_limit_bytes():
    cap = 64 * 1024 * 1024                       # conservative default (v7x)
    try:
        info = pltpu.get_tpu_info()
        cap = int(getattr(info, "vmem_capacity_bytes", cap)) or cap
    except Exception:
        pass
    # ~75% of physical VMEM: ~48 MiB on v7x (64 MiB), ~96 MiB on v5e/v6e.
    return int(min(max(cap * 3 // 4, 32 * 1024 * 1024), 96 * 1024 * 1024))


# ----------------------------------------------------------------------------
# pallas_call wrapper.
# ----------------------------------------------------------------------------
@functools.partial(
    jax.jit,
    static_argnames=("pixel_tile", "depth", "small_c", "unroll_depth",
                     "single_buffer_weights", "vmem_limit"))
def _encoder_pallas(x1f, x2f, params, *, pixel_tile, depth, small_c,
                    unroll_depth, single_buffer_weights, vmem_limit):
    b, c, hw_pad = x1f.shape
    tp = pixel_tile
    grid = (b, hw_pad // tp)

    kernel = functools.partial(_encoder_fused_kernel, depth=depth, eps=1e-5,
                               small_c=small_c, unroll_depth=unroll_depth)

    act_spec = pl.BlockSpec((None, c, tp), lambda bi, pi: (bi, 0, pi))
    wspec = functools.partial(_weight_spec, single_buffer=single_buffer_weights)

    return pl.pallas_call(
        kernel,
        out_shape=jax.ShapeDtypeStruct((b, c, hw_pad), x1f.dtype),
        grid=grid,
        in_specs=[
            act_spec, act_spec,
            wspec(params["ln_g"].shape), wspec(params["ln_b"].shape),
            wspec(params["w_in_x"].shape), wspec(params["b_in_x"].shape),
            wspec(params["w_in_z"].shape), wspec(params["b_in_z"].shape),
            wspec(params["w_out"].shape), wspec(params["b_out"].shape),
            wspec(params["norm_g_d"].shape), wspec(params["norm_g_a"].shape),
            wspec(params["norm_b_d"].shape), wspec(params["norm_b_a"].shape),
            wspec(params["conv_w_d"].shape), wspec(params["conv_w_a"].shape),
            wspec(params["conv_b"].shape),
        ],
        out_specs=pl.BlockSpec((None, c, tp), lambda bi, pi: (bi, 0, pi)),
        compiler_params=pltpu.CompilerParams(
            dimension_semantics=("parallel", "parallel"),
            vmem_limit_bytes=vmem_limit),
    )(x1f, x2f,
      params["ln_g"], params["ln_b"],
      params["w_in_x"], params["b_in_x"],
      params["w_in_z"], params["b_in_z"],
      params["w_out"], params["b_out"],
      params["norm_g_d"], params["norm_g_a"],
      params["norm_b_d"], params["norm_b_a"],
      params["conv_w_d"], params["conv_w_a"], params["conv_b"])


def encoder_forward(x1, x2, params, *, max_pixel_tile=2048):
    """x1, x2: NCHW float32 (B, C, H, W). Returns NCHW (B, C, H, W)."""
    b, c, h, w = x1.shape
    hw = h * w
    depth = int(params["ln_g"].shape[0])

    tp = _choose_pixel_tile(hw, b, max_pixel_tile)
    hw_pad = _round_up(hw, tp)

    # NCHW -> (B, C, H*W): free reshape; pixels become the lane axis.
    x1f = x1.reshape(b, c, hw)
    x2f = x2.reshape(b, c, hw)
    if hw_pad != hw:
        # Only for ragged H*W (not a multiple of 128).  Zero-padded pixels are
        # harmless because eps > 0 (LN of an all-zero column -> beta) and are
        # sliced off below.
        pad = ((0, 0), (0, 0), (0, hw_pad - hw))
        x1f = jnp.pad(x1f, pad)
        x2f = jnp.pad(x2f, pad)

    # bf16 MXU operands / f32 accumulation once the channel matmuls are big
    # enough to matter; the cast happens ONCE here (not per tile in-kernel),
    # halving weight DMA bytes / VMEM residency.  Elementwise math stays f32
    # everywhere (v5e has no bf16 VPU/EUP).
    if c >= 128:
        params = dict(params)
        for k in ("w_in_x", "w_in_z", "w_out", "conv_w_d", "conv_w_a"):
            params[k] = params[k].astype(jnp.bfloat16)

    kwargs = dict(pixel_tile=tp, depth=depth, small_c=(c <= 8),
                  unroll_depth=(depth <= 4), vmem_limit=_vmem_limit_bytes())
    try:
        out = _encoder_pallas(x1f, x2f, params,
                              single_buffer_weights=True, **kwargs)
        jax.block_until_ready(out)
    except Exception:
        # pl.Buffered(1) (single-buffered resident weights) unsupported on
        # this jax version -> fall back to default double-buffering.
        out = _encoder_pallas(x1f, x2f, params,
                              single_buffer_weights=False, **kwargs)

    if hw_pad != hw:
        out = out[:, :, :hw]
    return out.reshape(b, c, h, w)


# ----------------------------------------------------------------------------
# Deterministic parameter construction (PyTorch weight orientation).
# ----------------------------------------------------------------------------
def init_encoder_params(key, channels, depth=2):
    c = channels
    keys = jax.random.split(key, 8)
    p = {
        "ln_g": jnp.ones((depth, c, 1), jnp.float32),
        "ln_b": jnp.zeros((depth, c, 1), jnp.float32),
        "w_in_x": jax.random.normal(keys[0], (depth, c, c), jnp.float32) * 0.1,
        "b_in_x": jax.random.normal(keys[1], (depth, c, 1), jnp.float32) * 0.01,
        "w_in_z": jax.random.normal(keys[2], (depth, c, c), jnp.float32) * 0.1,
        "b_in_z": jax.random.normal(keys[3], (depth, c, 1), jnp.float32) * 0.01,
        "w_out": jax.random.normal(keys[4], (depth, c, c), jnp.float32) * 0.1,
        "b_out": jax.random.normal(keys[5], (depth, c, 1), jnp.float32) * 0.01,
        "norm_g_d": jnp.ones((c, 1), jnp.float32),
        "norm_g_a": jnp.ones((c, 1), jnp.float32),
        "norm_b_d": jnp.zeros((c, 1), jnp.float32),
        "norm_b_a": jnp.zeros((c, 1), jnp.float32),
    }
    # nn.Conv2d(2C, C, 1) weight is (C_out=C, C_in=2C, 1, 1) -> (C, 2C);
    # split into the |diff| (first C inputs) and add (last C) halves.
    conv_w = jax.random.normal(keys[6], (c, 2 * c), jnp.float32) * 0.1
    p["conv_w_d"] = conv_w[:, :c]
    p["conv_w_a"] = conv_w[:, c:]
    p["conv_b"] = jax.random.normal(keys[7], (c, 1), jnp.float32) * 0.01
    return p


# ----------------------------------------------------------------------------
# Pure-JAX reference (PyTorch pixel-major / channels-last layout) for checking.
# ----------------------------------------------------------------------------
def encoder_reference(x1, x2, params, eps=1e-5):
    b, c, h, w = x1.shape
    f1 = jnp.transpose(x1, (0, 2, 3, 1)).reshape(-1, c)
    f2 = jnp.transpose(x2, (0, 2, 3, 1)).reshape(-1, c)
    depth = params["ln_g"].shape[0]

    def ln(x, g, bta):
        mu = x.mean(-1, keepdims=True)
        var = jnp.square(x - mu).mean(-1, keepdims=True)
        return (x - mu) * lax.rsqrt(var + eps) * g + bta

    def silu(v):
        return v * jax.nn.sigmoid(v)

    def blk(x, d):
        hh = ln(x, params["ln_g"][d][:, 0], params["ln_b"][d][:, 0])
        ux = hh @ params["w_in_x"][d].T + params["b_in_x"][d][:, 0]
        uz = hh @ params["w_in_z"][d].T + params["b_in_z"][d][:, 0]
        y = (silu(ux) * silu(uz)) @ params["w_out"][d].T + params["b_out"][d][:, 0]
        return x + y

    for d in range(depth):
        f1 = blk(f1, d)
        f2 = blk(f2, d)

    diff = jnp.abs(f1 - f2)
    add = f1 + f2
    cat = jnp.concatenate([diff, add], axis=-1)
    g = jnp.concatenate([params["norm_g_d"][:, 0], params["norm_g_a"][:, 0]])
    bta = jnp.concatenate([params["norm_b_d"][:, 0], params["norm_b_a"][:, 0]])
    cat = ln(cat, g, bta)
    wcat = jnp.concatenate([params["conv_w_d"], params["conv_w_a"]], axis=1)
    out = cat @ wcat.T + params["conv_b"][:, 0]
    return jnp.transpose(out.reshape(b, h, w, c), (0, 3, 1, 2))


if __name__ == "__main__":
    B, C, H, W = 2, 4, 16, 16
    depth = 2

    key = jax.random.PRNGKey(0)
    key, kx1, kx2, kp = jax.random.split(key, 4)
    x1 = jax.random.normal(kx1, (B, C, H, W), jnp.float32)
    x2 = jax.random.normal(kx2, (B, C, H, W), jnp.float32)
    params = init_encoder_params(kp, C, depth=depth)

    out = encoder_forward(x1, x2, params)
    jax.block_until_ready(out)
    assert out.shape == (B, C, H, W), out.shape

    ref = encoder_reference(x1, x2, params)
    np.testing.assert_allclose(np.asarray(out), np.asarray(ref),
                               rtol=1e-3, atol=1e-3)
    print("KERNEL_OK")
</pallas_src>

<mosaic_0001>
module attributes {stable_mosaic.version = 11 : i64} {
  func.func @_encoder_fused_kernel(%arg0: i32, %arg1: i32, %arg2: memref<1x4x256xf32, #tpu.memory_space<vmem>>, %arg3: memref<1x4x256xf32, #tpu.memory_space<vmem>>, %arg4: memref<2x4x1xf32, #tpu.memory_space<vmem>>, %arg5: memref<2x4x1xf32, #tpu.memory_space<vmem>>, %arg6: memref<2x4x4xf32, #tpu.memory_space<vmem>>, %arg7: memref<2x4x1xf32, #tpu.memory_space<vmem>>, %arg8: memref<2x4x4xf32, #tpu.memory_space<vmem>>, %arg9: memref<2x4x1xf32, #tpu.memory_space<vmem>>, %arg10: memref<2x4x4xf32, #tpu.memory_space<vmem>>, %arg11: memref<2x4x1xf32, #tpu.memory_space<vmem>>, %arg12: memref<4x1xf32, #tpu.memory_space<vmem>>, %arg13: memref<4x1xf32, #tpu.memory_space<vmem>>, %arg14: memref<4x1xf32, #tpu.memory_space<vmem>>, %arg15: memref<4x1xf32, #tpu.memory_space<vmem>>, %arg16: memref<4x4xf32, #tpu.memory_space<vmem>>, %arg17: memref<4x4xf32, #tpu.memory_space<vmem>>, %arg18: memref<4x1xf32, #tpu.memory_space<vmem>>, %arg19: memref<1x4x256xf32, #tpu.memory_space<vmem>>) attributes {dimension_semantics = [#tpu.dimension_semantics<parallel>, #tpu.dimension_semantics<parallel>], iteration_bounds = array<i64: 2, 1>, scalar_prefetch = 0 : i64, scratch_operands = 0 : i64, tpu.core_type = #tpu.core_type<tc>, window_params = [{transform_indices = @transform_0, window_bounds = array<i64: 1, 4, 256>}, {transform_indices = @transform_1, window_bounds = array<i64: 1, 4, 256>}, {pipeline_mode = #tpu.pipeline_mode<synchronous>, transform_indices = @transform_2, window_bounds = array<i64: 2, 4, 1>}, {pipeline_mode = #tpu.pipeline_mode<synchronous>, transform_indices = @transform_3, window_bounds = array<i64: 2, 4, 1>}, {pipeline_mode = #tpu.pipeline_mode<synchronous>, transform_indices = @transform_4, window_bounds = array<i64: 2, 4, 4>}, {pipeline_mode = #tpu.pipeline_mode<synchronous>, transform_indices = @transform_5, window_bounds = array<i64: 2, 4, 1>}, {pipeline_mode = #tpu.pipeline_mode<synchronous>, transform_indices = @transform_6, window_bounds = array<i64: 2, 4, 4>}, {pipeline_mode = #tpu.pipeline_mode<synchronous>, transform_indices = @transform_7, window_bounds = array<i64: 2, 4, 1>}, {pipeline_mode = #tpu.pipeline_mode<synchronous>, transform_indices = @transform_8, window_bounds = array<i64: 2, 4, 4>}, {pipeline_mode = #tpu.pipeline_mode<synchronous>, transform_indices = @transform_9, window_bounds = array<i64: 2, 4, 1>}, {pipeline_mode = #tpu.pipeline_mode<synchronous>, transform_indices = @transform_10, window_bounds = array<i64: 4, 1>}, {pipeline_mode = #tpu.pipeline_mode<synchronous>, transform_indices = @transform_11, window_bounds = array<i64: 4, 1>}, {pipeline_mode = #tpu.pipeline_mode<synchronous>, transform_indices = @transform_12, window_bounds = array<i64: 4, 1>}, {pipeline_mode = #tpu.pipeline_mode<synchronous>, transform_indices = @transform_13, window_bounds = array<i64: 4, 1>}, {pipeline_mode = #tpu.pipeline_mode<synchronous>, transform_indices = @transform_14, window_bounds = array<i64: 4, 4>}, {pipeline_mode = #tpu.pipeline_mode<synchronous>, transform_indices = @transform_15, window_bounds = array<i64: 4, 4>}, {pipeline_mode = #tpu.pipeline_mode<synchronous>, transform_indices = @transform_16, window_bounds = array<i64: 4, 1>}, {transform_indices = @transform_17, window_bounds = array<i64: 1, 4, 256>}]} {
    %c0 = arith.constant 0 : index
    %c0_0 = arith.constant 0 : index
    %c0_1 = arith.constant 0 : index
    %0 = vector.load %arg2[%c0, %c0_0, %c0_1] : memref<1x4x256xf32, #tpu.memory_space<vmem>>, vector<1x4x256xf32>
    %1 = vector.shape_cast %0 : vector<1x4x256xf32> to vector<4x256xf32>
    %c0_2 = arith.constant 0 : index
    %c0_3 = arith.constant 0 : index
    %c0_4 = arith.constant 0 : index
    %2 = vector.load %arg3[%c0_2, %c0_3, %c0_4] : memref<1x4x256xf32, #tpu.memory_space<vmem>>, vector<1x4x256xf32>
    %3 = vector.shape_cast %2 : vector<1x4x256xf32> to vector<4x256xf32>
    %4 = tpu.concatenate %1, %3 in 1 : vector<4x256xf32>, vector<4x256xf32> -> vector<4x512xf32>
    %c0_5 = arith.constant 0 : index
    %c0_6 = arith.constant 0 : index
    %c0_7 = arith.constant 0 : index
    %5 = vector.load %arg4[%c0_5, %c0_6, %c0_7] : memref<2x4x1xf32, #tpu.memory_space<vmem>>, vector<1x4x1xf32>
    %6 = vector.shape_cast %5 : vector<1x4x1xf32> to vector<4x1xf32>
    %c0_8 = arith.constant 0 : index
    %c0_9 = arith.constant 0 : index
    %c0_10 = arith.constant 0 : index
    %7 = vector.load %arg5[%c0_8, %c0_9, %c0_10] : memref<2x4x1xf32, #tpu.memory_space<vmem>>, vector<1x4x1xf32>
    %8 = vector.shape_cast %7 : vector<1x4x1xf32> to vector<4x1xf32>
    %c0_11 = arith.constant 0 : index
    %c0_12 = arith.constant 0 : index
    %c0_13 = arith.constant 0 : index
    %9 = vector.load %arg6[%c0_11, %c0_12, %c0_13] : memref<2x4x4xf32, #tpu.memory_space<vmem>>, vector<1x4x4xf32>
    %10 = vector.shape_cast %9 : vector<1x4x4xf32> to vector<4x4xf32>
    %c0_14 = arith.constant 0 : index
    %c0_15 = arith.constant 0 : index
    %c0_16 = arith.constant 0 : index
    %11 = vector.load %arg7[%c0_14, %c0_15, %c0_16] : memref<2x4x1xf32, #tpu.memory_space<vmem>>, vector<1x4x1xf32>
    %12 = vector.shape_cast %11 : vector<1x4x1xf32> to vector<4x1xf32>
    %c0_17 = arith.constant 0 : index
    %c0_18 = arith.constant 0 : index
    %c0_19 = arith.constant 0 : index
    %13 = vector.load %arg8[%c0_17, %c0_18, %c0_19] : memref<2x4x4xf32, #tpu.memory_space<vmem>>, vector<1x4x4xf32>
    %14 = vector.shape_cast %13 : vector<1x4x4xf32> to vector<4x4xf32>
    %c0_20 = arith.constant 0 : index
    %c0_21 = arith.constant 0 : index
    %c0_22 = arith.constant 0 : index
    %15 = vector.load %arg9[%c0_20, %c0_21, %c0_22] : memref<2x4x1xf32, #tpu.memory_space<vmem>>, vector<1x4x1xf32>
    %16 = vector.shape_cast %15 : vector<1x4x1xf32> to vector<4x1xf32>
    %c0_23 = arith.constant 0 : index
    %c0_24 = arith.constant 0 : index
    %c0_25 = arith.constant 0 : index
    %17 = vector.load %arg10[%c0_23, %c0_24, %c0_25] : memref<2x4x4xf32, #tpu.memory_space<vmem>>, vector<1x4x4xf32>
    %18 = vector.shape_cast %17 : vector<1x4x4xf32> to vector<4x4xf32>
    %c0_26 = arith.constant 0 : index
    %c0_27 = arith.constant 0 : index
    %c0_28 = arith.constant 0 : index
    %19 = vector.load %arg11[%c0_26, %c0_27, %c0_28] : memref<2x4x1xf32, #tpu.memory_space<vmem>>, vector<1x4x1xf32>
    %20 = vector.shape_cast %19 : vector<1x4x1xf32> to vector<4x1xf32>
    %cst = arith.constant dense<0.000000e+00> : vector<512xf32>
    %21 = vector.multi_reduction <add>, %4, %cst [0] : vector<4x512xf32> to vector<512xf32>
    %22 = vector.shape_cast %21 : vector<512xf32> to vector<1x512xf32>
    %cst_29 = arith.constant 4.000000e+00 : f32
    %23 = vector.broadcast %cst_29 : f32 to vector<1x512xf32>
    %24 = arith.divf %22, %23 : vector<1x512xf32>
    %25 = vector.broadcast %24 : vector<1x512xf32> to vector<4x512xf32>
    %26 = arith.subf %4, %25 : vector<4x512xf32>
    %27 = arith.mulf %26, %26 : vector<4x512xf32>
    %cst_30 = arith.constant dense<0.000000e+00> : vector<512xf32>
    %28 = vector.multi_reduction <add>, %27, %cst_30 [0] : vector<4x512xf32> to vector<512xf32>
    %29 = vector.shape_cast %28 : vector<512xf32> to vector<1x512xf32>
    %cst_31 = arith.constant 4.000000e+00 : f32
    %30 = vector.broadcast %cst_31 : f32 to vector<1x512xf32>
    %31 = arith.divf %29, %30 : vector<1x512xf32>
    %32 = vector.broadcast %24 : vector<1x512xf32> to vector<4x512xf32>
    %33 = arith.subf %4, %32 : vector<4x512xf32>
    %cst_32 = arith.constant 9.99999974E-6 : f32
    %34 = vector.broadcast %cst_32 : f32 to vector<1x512xf32>
    %35 = arith.addf %31, %34 : vector<1x512xf32>
    %36 = math.rsqrt %35 : vector<1x512xf32>
    %37 = vector.broadcast %36 : vector<1x512xf32> to vector<4x512xf32>
    %38 = arith.mulf %33, %37 : vector<4x512xf32>
    %39 = vector.broadcast %6 : vector<4x1xf32> to vector<4x512xf32>
    %40 = arith.mulf %38, %39 : vector<4x512xf32>
    %41 = vector.broadcast %8 : vector<4x1xf32> to vector<4x512xf32>
    %42 = arith.addf %40, %41 : vector<4x512xf32>
    %43 = vector.extract_strided_slice %10 {offsets = [0, 0], sizes = [4, 1], strides = [1, 1]} : vector<4x4xf32> to vector<4x1xf32>
    %44 = vector.extract_strided_slice %42 {offsets = [0, 0], sizes = [1, 512], strides = [1, 1]} : vector<4x512xf32> to vector<1x512xf32>
    %45 = vector.broadcast %43 : vector<4x1xf32> to vector<4x512xf32>
    %46 = vector.broadcast %44 : vector<1x512xf32> to vector<4x512xf32>
    %47 = arith.mulf %45, %46 : vector<4x512xf32>
    %48 = vector.extract_strided_slice %10 {offsets = [0, 1], sizes = [4, 1], strides = [1, 1]} : vector<4x4xf32> to vector<4x1xf32>
    %49 = vector.extract_strided_slice %42 {offsets = [1, 0], sizes = [1, 512], strides = [1, 1]} : vector<4x512xf32> to vector<1x512xf32>
    %50 = vector.broadcast %48 : vector<4x1xf32> to vector<4x512xf32>
    %51 = vector.broadcast %49 : vector<1x512xf32> to vector<4x512xf32>
    %52 = arith.mulf %50, %51 : vector<4x512xf32>
    %53 = arith.addf %47, %52 : vector<4x512xf32>
    %54 = vector.extract_strided_slice %10 {offsets = [0, 2], sizes = [4, 1], strides = [1, 1]} : vector<4x4xf32> to vector<4x1xf32>
    %55 = vector.extract_strided_slice %42 {offsets = [2, 0], sizes = [1, 512], strides = [1, 1]} : vector<4x512xf32> to vector<1x512xf32>
    %56 = vector.broadcast %54 : vector<4x1xf32> to vector<4x512xf32>
    %57 = vector.broadcast %55 : vector<1x512xf32> to vector<4x512xf32>
    %58 = arith.mulf %56, %57 : vector<4x512xf32>
    %59 = arith.addf %53, %58 : vector<4x512xf32>
    %60 = vector.extract_strided_slice %10 {offsets = [0, 3], sizes = [4, 1], strides = [1, 1]} : vector<4x4xf32> to vector<4x1xf32>
    %61 = vector.extract_strided_slice %42 {offsets = [3, 0], sizes = [1, 512], strides = [1, 1]} : vector<4x512xf32> to vector<1x512xf32>
    %62 = vector.broadcast %60 : vector<4x1xf32> to vector<4x512xf32>
    %63 = vector.broadcast %61 : vector<1x512xf32> to vector<4x512xf32>
    %64 = arith.mulf %62, %63 : vector<4x512xf32>
    %65 = arith.addf %59, %64 : vector<4x512xf32>
    %66 = vector.broadcast %12 : vector<4x1xf32> to vector<4x512xf32>
    %67 = arith.addf %65, %66 : vector<4x512xf32>
    %68 = vector.extract_strided_slice %14 {offsets = [0, 0], sizes = [4, 1], strides = [1, 1]} : vector<4x4xf32> to vector<4x1xf32>
    %69 = vector.extract_strided_slice %42 {offsets = [0, 0], sizes = [1, 512], strides = [1, 1]} : vector<4x512xf32> to vector<1x512xf32>
    %70 = vector.broadcast %68 : vector<4x1xf32> to vector<4x512xf32>
    %71 = vector.broadcast %69 : vector<1x512xf32> to vector<4x512xf32>
    %72 = arith.mulf %70, %71 : vector<4x512xf32>
    %73 = vector.extract_strided_slice %14 {offsets = [0, 1], sizes = [4, 1], strides = [1, 1]} : vector<4x4xf32> to vector<4x1xf32>
    %74 = vector.extract_strided_slice %42 {offsets = [1, 0], sizes = [1, 512], strides = [1, 1]} : vector<4x512xf32> to vector<1x512xf32>
    %75 = vector.broadcast %73 : vector<4x1xf32> to vector<4x512xf32>
    %76 = vector.broadcast %74 : vector<1x512xf32> to vector<4x512xf32>
    %77 = arith.mulf %75, %76 : vector<4x512xf32>
    %78 = arith.addf %72, %77 : vector<4x512xf32>
    %79 = vector.extract_strided_slice %14 {offsets = [0, 2], sizes = [4, 1], strides = [1, 1]} : vector<4x4xf32> to vector<4x1xf32>
    %80 = vector.extract_strided_slice %42 {offsets = [2, 0], sizes = [1, 512], strides = [1, 1]} : vector<4x512xf32> to vector<1x512xf32>
    %81 = vector.broadcast %79 : vector<4x1xf32> to vector<4x512xf32>
    %82 = vector.broadcast %80 : vector<1x512xf32> to vector<4x512xf32>
    %83 = arith.mulf %81, %82 : vector<4x512xf32>
    %84 = arith.addf %78, %83 : vector<4x512xf32>
    %85 = vector.extract_strided_slice %14 {offsets = [0, 3], sizes = [4, 1], strides = [1, 1]} : vector<4x4xf32> to vector<4x1xf32>
    %86 = vector.extract_strided_slice %42 {offsets = [3, 0], sizes = [1, 512], strides = [1, 1]} : vector<4x512xf32> to vector<1x512xf32>
    %87 = vector.broadcast %85 : vector<4x1xf32> to vector<4x512xf32>
    %88 = vector.broadcast %86 : vector<1x512xf32> to vector<4x512xf32>
    %89 = arith.mulf %87, %88 : vector<4x512xf32>
    %90 = arith.addf %84, %89 : vector<4x512xf32>
    %91 = vector.broadcast %16 : vector<4x1xf32> to vector<4x512xf32>
    %92 = arith.addf %90, %91 : vector<4x512xf32>
    %93 = arith.negf %67 : vector<4x512xf32>
    %94 = math.exp %93 : vector<4x512xf32>
    %cst_33 = arith.constant 1.000000e+00 : f32
    %95 = vector.broadcast %cst_33 : f32 to vector<4x512xf32>
    %96 = arith.addf %95, %94 : vector<4x512xf32>
    %97 = arith.divf %95, %96 : vector<4x512xf32>
    %98 = arith.mulf %67, %97 : vector<4x512xf32>
    %99 = arith.negf %92 : vector<4x512xf32>
    %100 = math.exp %99 : vector<4x512xf32>
    %cst_34 = arith.constant 1.000000e+00 : f32
    %101 = vector.broadcast %cst_34 : f32 to vector<4x512xf32>
    %102 = arith.addf %101, %100 : vector<4x512xf32>
    %103 = arith.divf %101, %102 : vector<4x512xf32>
    %104 = arith.mulf %92, %103 : vector<4x512xf32>
    %105 = arith.mulf %98, %104 : vector<4x512xf32>
    %106 = vector.extract_strided_slice %18 {offsets = [0, 0], sizes = [4, 1], strides = [1, 1]} : vector<4x4xf32> to vector<4x1xf32>
    %107 = vector.extract_strided_slice %105 {offsets = [0, 0], sizes = [1, 512], strides = [1, 1]} : vector<4x512xf32> to vector<1x512xf32>
    %108 = vector.broadcast %106 : vector<4x1xf32> to vector<4x512xf32>
    %109 = vector.broadcast %107 : vector<1x512xf32> to vector<4x512xf32>
    %110 = arith.mulf %108, %109 : vector<4x512xf32>
    %111 = vector.extract_strided_slice %18 {offsets = [0, 1], sizes = [4, 1], strides = [1, 1]} : vector<4x4xf32> to vector<4x1xf32>
    %112 = vector.extract_strided_slice %105 {offsets = [1, 0], sizes = [1, 512], strides = [1, 1]} : vector<4x512xf32> to vector<1x512xf32>
    %113 = vector.broadcast %111 : vector<4x1xf32> to vector<4x512xf32>
    %114 = vector.broadcast %112 : vector<1x512xf32> to vector<4x512xf32>
    %115 = arith.mulf %113, %114 : vector<4x512xf32>
    %116 = arith.addf %110, %115 : vector<4x512xf32>
    %117 = vector.extract_strided_slice %18 {offsets = [0, 2], sizes = [4, 1], strides = [1, 1]} : vector<4x4xf32> to vector<4x1xf32>
    %118 = vector.extract_strided_slice %105 {offsets = [2, 0], sizes = [1, 512], strides = [1, 1]} : vector<4x512xf32> to vector<1x512xf32>
    %119 = vector.broadcast %117 : vector<4x1xf32> to vector<4x512xf32>
    %120 = vector.broadcast %118 : vector<1x512xf32> to vector<4x512xf32>
    %121 = arith.mulf %119, %120 : vector<4x512xf32>
    %122 = arith.addf %116, %121 : vector<4x512xf32>
    %123 = vector.extract_strided_slice %18 {offsets = [0, 3], sizes = [4, 1], strides = [1, 1]} : vector<4x4xf32> to vector<4x1xf32>
    %124 = vector.extract_strided_slice %105 {offsets = [3, 0], sizes = [1, 512], strides = [1, 1]} : vector<4x512xf32> to vector<1x512xf32>
    %125 = vector.broadcast %123 : vector<4x1xf32> to vector<4x512xf32>
    %126 = vector.broadcast %124 : vector<1x512xf32> to vector<4x512xf32>
    %127 = arith.mulf %125, %126 : vector<4x512xf32>
    %128 = arith.addf %122, %127 : vector<4x512xf32>
    %129 = vector.broadcast %20 : vector<4x1xf32> to vector<4x512xf32>
    %130 = arith.addf %128, %129 : vector<4x512xf32>
    %131 = arith.addf %4, %130 : vector<4x512xf32>
    %c1 = arith.constant 1 : index
    %c0_35 = arith.constant 0 : index
    %c0_36 = arith.constant 0 : index
    %132 = vector.load %arg4[%c1, %c0_35, %c0_36] : memref<2x4x1xf32, #tpu.memory_space<vmem>>, vector<1x4x1xf32>
    %133 = vector.shape_cast %132 : vector<1x4x1xf32> to vector<4x1xf32>
    %c1_37 = arith.constant 1 : index
    %c0_38 = arith.constant 0 : index
    %c0_39 = arith.constant 0 : index
    %134 = vector.load %arg5[%c1_37, %c0_38, %c0_39] : memref<2x4x1xf32, #tpu.memory_space<vmem>>, vector<1x4x1xf32>
    %135 = vector.shape_cast %134 : vector<1x4x1xf32> to vector<4x1xf32>
    %c1_40 = arith.constant 1 : index
    %c0_41 = arith.constant 0 : index
    %c0_42 = arith.constant 0 : index
    %136 = vector.load %arg6[%c1_40, %c0_41, %c0_42] : memref<2x4x4xf32, #tpu.memory_space<vmem>>, vector<1x4x4xf32>
    %137 = vector.shape_cast %136 : vector<1x4x4xf32> to vector<4x4xf32>
    %c1_43 = arith.constant 1 : index
    %c0_44 = arith.constant 0 : index
    %c0_45 = arith.constant 0 : index
    %138 = vector.load %arg7[%c1_43, %c0_44, %c0_45] : memref<2x4x1xf32, #tpu.memory_space<vmem>>, vector<1x4x1xf32>
    %139 = vector.shape_cast %138 : vector<1x4x1xf32> to vector<4x1xf32>
    %c1_46 = arith.constant 1 : index
    %c0_47 = arith.constant 0 : index
    %c0_48 = arith.constant 0 : index
    %140 = vector.load %arg8[%c1_46, %c0_47, %c0_48] : memref<2x4x4xf32, #tpu.memory_space<vmem>>, vector<1x4x4xf32>
    %141 = vector.shape_cast %140 : vector<1x4x4xf32> to vector<4x4xf32>
    %c1_49 = arith.constant 1 : index
    %c0_50 = arith.constant 0 : index
    %c0_51 = arith.constant 0 : index
    %142 = vector.load %arg9[%c1_49, %c0_50, %c0_51] : memref<2x4x1xf32, #tpu.memory_space<vmem>>, vector<1x4x1xf32>
    %143 = vector.shape_cast %142 : vector<1x4x1xf32> to vector<4x1xf32>
    %c1_52 = arith.constant 1 : index
    %c0_53 = arith.constant 0 : index
    %c0_54 = arith.constant 0 : index
    %144 = vector.load %arg10[%c1_52, %c0_53, %c0_54] : memref<2x4x4xf32, #tpu.memory_space<vmem>>, vector<1x4x4xf32>
    %145 = vector.shape_cast %144 : vector<1x4x4xf32> to vector<4x4xf32>
    %c1_55 = arith.constant 1 : index
    %c0_56 = arith.constant 0 : index
    %c0_57 = arith.constant 0 : index
    %146 = vector.load %arg11[%c1_55, %c0_56, %c0_57] : memref<2x4x1xf32, #tpu.memory_space<vmem>>, vector<1x4x1xf32>
    %147 = vector.shape_cast %146 : vector<1x4x1xf32> to vector<4x1xf32>
    %cst_58 = arith.constant dense<0.000000e+00> : vector<512xf32>
    %148 = vector.multi_reduction <add>, %131, %cst_58 [0] : vector<4x512xf32> to vector<512xf32>
    %149 = vector.shape_cast %148 : vector<512xf32> to vector<1x512xf32>
    %cst_59 = arith.constant 4.000000e+00 : f32
    %150 = vector.broadcast %cst_59 : f32 to vector<1x512xf32>
    %151 = arith.divf %149, %150 : vector<1x512xf32>
    %152 = vector.broadcast %151 : vector<1x512xf32> to vector<4x512xf32>
    %153 = arith.subf %131, %152 : vector<4x512xf32>
    %154 = arith.mulf %153, %153 : vector<4x512xf32>
    %cst_60 = arith.constant dense<0.000000e+00> : vector<512xf32>
    %155 = vector.multi_reduction <add>, %154, %cst_60 [0] : vector<4x512xf32> to vector<512xf32>
    %156 = vector.shape_cast %155 : vector<512xf32> to vector<1x512xf32>
    %cst_61 = arith.constant 4.000000e+00 : f32
    %157 = vector.broadcast %cst_61 : f32 to vector<1x512xf32>
    %158 = arith.divf %156, %157 : vector<1x512xf32>
    %159 = vector.broadcast %151 : vector<1x512xf32> to vector<4x512xf32>
    %160 = arith.subf %131, %159 : vector<4x512xf32>
    %cst_62 = arith.constant 9.99999974E-6 : f32
    %161 = vector.broadcast %cst_62 : f32 to vector<1x512xf32>
    %162 = arith.addf %158, %161 : vector<1x512xf32>
    %163 = math.rsqrt %162 : vector<1x512xf32>
    %164 = vector.broadcast %163 : vector<1x512xf32> to vector<4x512xf32>
    %165 = arith.mulf %160, %164 : vector<4x512xf32>
    %166 = vector.broadcast %133 : vector<4x1xf32> to vector<4x512xf32>
    %167 = arith.mulf %165, %166 : vector<4x512xf32>
    %168 = vector.broadcast %135 : vector<4x1xf32> to vector<4x512xf32>
    %169 = arith.addf %167, %168 : vector<4x512xf32>
    %170 = vector.extract_strided_slice %137 {offsets = [0, 0], sizes = [4, 1], strides = [1, 1]} : vector<4x4xf32> to vector<4x1xf32>
    %171 = vector.extract_strided_slice %169 {offsets = [0, 0], sizes = [1, 512], strides = [1, 1]} : vector<4x512xf32> to vector<1x512xf32>
    %172 = vector.broadcast %170 : vector<4x1xf32> to vector<4x512xf32>
    %173 = vector.broadcast %171 : vector<1x512xf32> to vector<4x512xf32>
    %174 = arith.mulf %172, %173 : vector<4x512xf32>
    %175 = vector.extract_strided_slice %137 {offsets = [0, 1], sizes = [4, 1], strides = [1, 1]} : vector<4x4xf32> to vector<4x1xf32>
    %176 = vector.extract_strided_slice %169 {offsets = [1, 0], sizes = [1, 512], strides = [1, 1]} : vector<4x512xf32> to vector<1x512xf32>
    %177 = vector.broadcast %175 : vector<4x1xf32> to vector<4x512xf32>
    %178 = vector.broadcast %176 : vector<1x512xf32> to vector<4x512xf32>
    %179 = arith.mulf %177, %178 : vector<4x512xf32>
    %180 = arith.addf %174, %179 : vector<4x512xf32>
    %181 = vector.extract_strided_slice %137 {offsets = [0, 2], sizes = [4, 1], strides = [1, 1]} : vector<4x4xf32> to vector<4x1xf32>
    %182 = vector.extract_strided_slice %169 {offsets = [2, 0], sizes = [1, 512], strides = [1, 1]} : vector<4x512xf32> to vector<1x512xf32>
    %183 = vector.broadcast %181 : vector<4x1xf32> to vector<4x512xf32>
    %184 = vector.broadcast %182 : vector<1x512xf32> to vector<4x512xf32>
    %185 = arith.mulf %183, %184 : vector<4x512xf32>
    %186 = arith.addf %180, %185 : vector<4x512xf32>
    %187 = vector.extract_strided_slice %137 {offsets = [0, 3], sizes = [4, 1], strides = [1, 1]} : vector<4x4xf32> to vector<4x1xf32>
    %188 = vector.extract_strided_slice %169 {offsets = [3, 0], sizes = [1, 512], strides = [1, 1]} : vector<4x512xf32> to vector<1x512xf32>
    %189 = vector.broadcast %187 : vector<4x1xf32> to vector<4x512xf32>
    %190 = vector.broadcast %188 : vector<1x512xf32> to vector<4x512xf32>
    %191 = arith.mulf %189, %190 : vector<4x512xf32>
    %192 = arith.addf %186, %191 : vector<4x512xf32>
    %193 = vector.broadcast %139 : vector<4x1xf32> to vector<4x512xf32>
    %194 = arith.addf %192, %193 : vector<4x512xf32>
    %195 = vector.extract_strided_slice %141 {offsets = [0, 0], sizes = [4, 1], strides = [1, 1]} : vector<4x4xf32> to vector<4x1xf32>
    %196 = vector.extract_strided_slice %169 {offsets = [0, 0], sizes = [1, 512], strides = [1, 1]} : vector<4x512xf32> to vector<1x512xf32>
    %197 = vector.broadcast %195 : vector<4x1xf32> to vector<4x512xf32>
    %198 = vector.broadcast %196 : vector<1x512xf32> to vector<4x512xf32>
    %199 = arith.mulf %197, %198 : vector<4x512xf32>
    %200 = vector.extract_strided_slice %141 {offsets = [0, 1], sizes = [4, 1], strides = [1, 1]} : vector<4x4xf32> to vector<4x1xf32>
    %201 = vector.extract_strided_slice %169 {offsets = [1, 0], sizes = [1, 512], strides = [1, 1]} : vector<4x512xf32> to vector<1x512xf32>
    %202 = vector.broadcast %200 : vector<4x1xf32> to vector<4x512xf32>
    %203 = vector.broadcast %201 : vector<1x512xf32> to vector<4x512xf32>
    %204 = arith.mulf %202, %203 : vector<4x512xf32>
    %205 = arith.addf %199, %204 : vector<4x512xf32>
    %206 = vector.extract_strided_slice %141 {offsets = [0, 2], sizes = [4, 1], strides = [1, 1]} : vector<4x4xf32> to vector<4x1xf32>
    %207 = vector.extract_strided_slice %169 {offsets = [2, 0], sizes = [1, 512], strides = [1, 1]} : vector<4x512xf32> to vector<1x512xf32>
    %208 = vector.broadcast %206 : vector<4x1xf32> to vector<4x512xf32>
    %209 = vector.broadcast %207 : vector<1x512xf32> to vector<4x512xf32>
    %210 = arith.mulf %208, %209 : vector<4x512xf32>
    %211 = arith.addf %205, %210 : vector<4x512xf32>
    %212 = vector.extract_strided_slice %141 {offsets = [0, 3], sizes = [4, 1], strides = [1, 1]} : vector<4x4xf32> to vector<4x1xf32>
    %213 = vector.extract_strided_slice %169 {offsets = [3, 0], sizes = [1, 512], strides = [1, 1]} : vector<4x512xf32> to vector<1x512xf32>
    %214 = vector.broadcast %212 : vector<4x1xf32> to vector<4x512xf32>
    %215 = vector.broadcast %213 : vector<1x512xf32> to vector<4x512xf32>
    %216 = arith.mulf %214, %215 : vector<4x512xf32>
    %217 = arith.addf %211, %216 : vector<4x512xf32>
    %218 = vector.broadcast %143 : vector<4x1xf32> to vector<4x512xf32>
    %219 = arith.addf %217, %218 : vector<4x512xf32>
    %220 = arith.negf %194 : vector<4x512xf32>
    %221 = math.exp %220 : vector<4x512xf32>
    %cst_63 = arith.constant 1.000000e+00 : f32
    %222 = vector.broadcast %cst_63 : f32 to vector<4x512xf32>
    %223 = arith.addf %222, %221 : vector<4x512xf32>
    %224 = arith.divf %222, %223 : vector<4x512xf32>
    %225 = arith.mulf %194, %224 : vector<4x512xf32>
    %226 = arith.negf %219 : vector<4x512xf32>
    %227 = math.exp %226 : vector<4x512xf32>
    %cst_64 = arith.constant 1.000000e+00 : f32
    %228 = vector.broadcast %cst_64 : f32 to vector<4x512xf32>
    %229 = arith.addf %228, %227 : vector<4x512xf32>
    %230 = arith.divf %228, %229 : vector<4x512xf32>
    %231 = arith.mulf %219, %230 : vector<4x512xf32>
    %232 = arith.mulf %225, %231 : vector<4x512xf32>
    %233 = vector.extract_strided_slice %145 {offsets = [0, 0], sizes = [4, 1], strides = [1, 1]} : vector<4x4xf32> to vector<4x1xf32>
    %234 = vector.extract_strided_slice %232 {offsets = [0, 0], sizes = [1, 512], strides = [1, 1]} : vector<4x512xf32> to vector<1x512xf32>
    %235 = vector.broadcast %233 : vector<4x1xf32> to vector<4x512xf32>
    %236 = vector.broadcast %234 : vector<1x512xf32> to vector<4x512xf32>
    %237 = arith.mulf %235, %236 : vector<4x512xf32>
    %238 = vector.extract_strided_slice %145 {offsets = [0, 1], sizes = [4, 1], strides = [1, 1]} : vector<4x4xf32> to vector<4x1xf32>
    %239 = vector.extract_strided_slice %232 {offsets = [1, 0], sizes = [1, 512], strides = [1, 1]} : vector<4x512xf32> to vector<1x512xf32>
    %240 = vector.broadcast %238 : vector<4x1xf32> to vector<4x512xf32>
    %241 = vector.broadcast %239 : vector<1x512xf32> to vector<4x512xf32>
    %242 = arith.mulf %240, %241 : vector<4x512xf32>
    %243 = arith.addf %237, %242 : vector<4x512xf32>
    %244 = vector.extract_strided_slice %145 {offsets = [0, 2], sizes = [4, 1], strides = [1, 1]} : vector<4x4xf32> to vector<4x1xf32>
    %245 = vector.extract_strided_slice %232 {offsets = [2, 0], sizes = [1, 512], strides = [1, 1]} : vector<4x512xf32> to vector<1x512xf32>
    %246 = vector.broadcast %244 : vector<4x1xf32> to vector<4x512xf32>
    %247 = vector.broadcast %245 : vector<1x512xf32> to vector<4x512xf32>
    %248 = arith.mulf %246, %247 : vector<4x512xf32>
    %249 = arith.addf %243, %248 : vector<4x512xf32>
    %250 = vector.extract_strided_slice %145 {offsets = [0, 3], sizes = [4, 1], strides = [1, 1]} : vector<4x4xf32> to vector<4x1xf32>
    %251 = vector.extract_strided_slice %232 {offsets = [3, 0], sizes = [1, 512], strides = [1, 1]} : vector<4x512xf32> to vector<1x512xf32>
    %252 = vector.broadcast %250 : vector<4x1xf32> to vector<4x512xf32>
    %253 = vector.broadcast %251 : vector<1x512xf32> to vector<4x512xf32>
    %254 = arith.mulf %252, %253 : vector<4x512xf32>
    %255 = arith.addf %249, %254 : vector<4x512xf32>
    %256 = vector.broadcast %147 : vector<4x1xf32> to vector<4x512xf32>
    %257 = arith.addf %255, %256 : vector<4x512xf32>
    %258 = arith.addf %131, %257 : vector<4x512xf32>
    %259 = vector.extract_strided_slice %258 {offsets = [0, 0], sizes = [4, 256], strides = [1, 1]} : vector<4x512xf32> to vector<4x256xf32>
    %260 = vector.extract_strided_slice %258 {offsets = [0, 256], sizes = [4, 256], strides = [1, 1]} : vector<4x512xf32> to vector<4x256xf32>
    %261 = arith.subf %259, %260 : vector<4x256xf32>
    %262 = math.absf %261 : vector<4x256xf32>
    %263 = arith.addf %259, %260 : vector<4x256xf32>
    %cst_65 = arith.constant dense<0.000000e+00> : vector<256xf32>
    %264 = vector.multi_reduction <add>, %262, %cst_65 [0] : vector<4x256xf32> to vector<256xf32>
    %265 = vector.shape_cast %264 : vector<256xf32> to vector<1x256xf32>
    %cst_66 = arith.constant dense<0.000000e+00> : vector<256xf32>
    %266 = vector.multi_reduction <add>, %263, %cst_66 [0] : vector<4x256xf32> to vector<256xf32>
    %267 = vector.shape_cast %266 : vector<256xf32> to vector<1x256xf32>
    %268 = arith.addf %265, %267 : vector<1x256xf32>
    %cst_67 = arith.constant 8.000000e+00 : f32
    %269 = vector.broadcast %cst_67 : f32 to vector<1x256xf32>
    %270 = arith.divf %268, %269 : vector<1x256xf32>
    %271 = vector.broadcast %270 : vector<1x256xf32> to vector<4x256xf32>
    %272 = arith.subf %262, %271 : vector<4x256xf32>
    %273 = arith.mulf %272, %272 : vector<4x256xf32>
    %cst_68 = arith.constant dense<0.000000e+00> : vector<256xf32>
    %274 = vector.multi_reduction <add>, %273, %cst_68 [0] : vector<4x256xf32> to vector<256xf32>
    %275 = vector.shape_cast %274 : vector<256xf32> to vector<1x256xf32>
    %276 = vector.broadcast %270 : vector<1x256xf32> to vector<4x256xf32>
    %277 = arith.subf %263, %276 : vector<4x256xf32>
    %278 = arith.mulf %277, %277 : vector<4x256xf32>
    %cst_69 = arith.constant dense<0.000000e+00> : vector<256xf32>
    %279 = vector.multi_reduction <add>, %278, %cst_69 [0] : vector<4x256xf32> to vector<256xf32>
    %280 = vector.shape_cast %279 : vector<256xf32> to vector<1x256xf32>
    %281 = arith.addf %275, %280 : vector<1x256xf32>
    %cst_70 = arith.constant 8.000000e+00 : f32
    %282 = vector.broadcast %cst_70 : f32 to vector<1x256xf32>
    %283 = arith.divf %281, %282 : vector<1x256xf32>
    %cst_71 = arith.constant 9.99999974E-6 : f32
    %284 = vector.broadcast %cst_71 : f32 to vector<1x256xf32>
    %285 = arith.addf %283, %284 : vector<1x256xf32>
    %286 = math.rsqrt %285 : vector<1x256xf32>
    %287 = vector.broadcast %270 : vector<1x256xf32> to vector<4x256xf32>
    %288 = arith.subf %262, %287 : vector<4x256xf32>
    %289 = vector.broadcast %286 : vector<1x256xf32> to vector<4x256xf32>
    %290 = arith.mulf %288, %289 : vector<4x256xf32>
    %c0_72 = arith.constant 0 : index
    %c0_73 = arith.constant 0 : index
    %291 = vector.load %arg12[%c0_72, %c0_73] : memref<4x1xf32, #tpu.memory_space<vmem>>, vector<4x1xf32>
    %292 = vector.broadcast %291 : vector<4x1xf32> to vector<4x256xf32>
    %293 = arith.mulf %290, %292 : vector<4x256xf32>
    %c0_74 = arith.constant 0 : index
    %c0_75 = arith.constant 0 : index
    %294 = vector.load %arg14[%c0_74, %c0_75] : memref<4x1xf32, #tpu.memory_space<vmem>>, vector<4x1xf32>
    %295 = vector.broadcast %294 : vector<4x1xf32> to vector<4x256xf32>
    %296 = arith.addf %293, %295 : vector<4x256xf32>
    %297 = vector.broadcast %270 : vector<1x256xf32> to vector<4x256xf32>
    %298 = arith.subf %263, %297 : vector<4x256xf32>
    %299 = vector.broadcast %286 : vector<1x256xf32> to vector<4x256xf32>
    %300 = arith.mulf %298, %299 : vector<4x256xf32>
    %c0_76 = arith.constant 0 : index
    %c0_77 = arith.constant 0 : index
    %301 = vector.load %arg13[%c0_76, %c0_77] : memref<4x1xf32, #tpu.memory_space<vmem>>, vector<4x1xf32>
    %302 = vector.broadcast %301 : vector<4x1xf32> to vector<4x256xf32>
    %303 = arith.mulf %300, %302 : vector<4x256xf32>
    %c0_78 = arith.constant 0 : index
    %c0_79 = arith.constant 0 : index
    %304 = vector.load %arg15[%c0_78, %c0_79] : memref<4x1xf32, #tpu.memory_space<vmem>>, vector<4x1xf32>
    %305 = vector.broadcast %304 : vector<4x1xf32> to vector<4x256xf32>
    %306 = arith.addf %303, %305 : vector<4x256xf32>
    %c0_80 = arith.constant 0 : index
    %c0_81 = arith.constant 0 : index
    %307 = vector.load %arg16[%c0_80, %c0_81] : memref<4x4xf32, #tpu.memory_space<vmem>>, vector<4x4xf32>
    %308 = vector.extract_strided_slice %307 {offsets = [0, 0], sizes = [4, 1], strides = [1, 1]} : vector<4x4xf32> to vector<4x1xf32>
    %309 = vector.extract_strided_slice %296 {offsets = [0, 0], sizes = [1, 256], strides = [1, 1]} : vector<4x256xf32> to vector<1x256xf32>
    %310 = vector.broadcast %308 : vector<4x1xf32> to vector<4x256xf32>
    %311 = vector.broadcast %309 : vector<1x256xf32> to vector<4x256xf32>
    %312 = arith.mulf %310, %311 : vector<4x256xf32>
    %313 = vector.extract_strided_slice %307 {offsets = [0, 1], sizes = [4, 1], strides = [1, 1]} : vector<4x4xf32> to vector<4x1xf32>
    %314 = vector.extract_strided_slice %296 {offsets = [1, 0], sizes = [1, 256], strides = [1, 1]} : vector<4x256xf32> to vector<1x256xf32>
    %315 = vector.broadcast %313 : vector<4x1xf32> to vector<4x256xf32>
    %316 = vector.broadcast %314 : vector<1x256xf32> to vector<4x256xf32>
    %317 = arith.mulf %315, %316 : vector<4x256xf32>
    %318 = arith.addf %312, %317 : vector<4x256xf32>
    %319 = vector.extract_strided_slice %307 {offsets = [0, 2], sizes = [4, 1], strides = [1, 1]} : vector<4x4xf32> to vector<4x1xf32>
    %320 = vector.extract_strided_slice %296 {offsets = [2, 0], sizes = [1, 256], strides = [1, 1]} : vector<4x256xf32> to vector<1x256xf32>
    %321 = vector.broadcast %319 : vector<4x1xf32> to vector<4x256xf32>
    %322 = vector.broadcast %320 : vector<1x256xf32> to vector<4x256xf32>
    %323 = arith.mulf %321, %322 : vector<4x256xf32>
    %324 = arith.addf %318, %323 : vector<4x256xf32>
    %325 = vector.extract_strided_slice %307 {offsets = [0, 3], sizes = [4, 1], strides = [1, 1]} : vector<4x4xf32> to vector<4x1xf32>
    %326 = vector.extract_strided_slice %296 {offsets = [3, 0], sizes = [1, 256], strides = [1, 1]} : vector<4x256xf32> to vector<1x256xf32>
    %327 = vector.broadcast %325 : vector<4x1xf32> to vector<4x256xf32>
    %328 = vector.broadcast %326 : vector<1x256xf32> to vector<4x256xf32>
    %329 = arith.mulf %327, %328 : vector<4x256xf32>
    %330 = arith.addf %324, %329 : vector<4x256xf32>
    %c0_82 = arith.constant 0 : index
    %c0_83 = arith.constant 0 : index
    %331 = vector.load %arg17[%c0_82, %c0_83] : memref<4x4xf32, #tpu.memory_space<vmem>>, vector<4x4xf32>
    %332 = vector.extract_strided_slice %331 {offsets = [0, 0], sizes = [4, 1], strides = [1, 1]} : vector<4x4xf32> to vector<4x1xf32>
    %333 = vector.extract_strided_slice %306 {offsets = [0, 0], sizes = [1, 256], strides = [1, 1]} : vector<4x256xf32> to vector<1x256xf32>
    %334 = vector.broadcast %332 : vector<4x1xf32> to vector<4x256xf32>
    %335 = vector.broadcast %333 : vector<1x256xf32> to vector<4x256xf32>
    %336 = arith.mulf %334, %335 : vector<4x256xf32>
    %337 = vector.extract_strided_slice %331 {offsets = [0, 1], sizes = [4, 1], strides = [1, 1]} : vector<4x4xf32> to vector<4x1xf32>
    %338 = vector.extract_strided_slice %306 {offsets = [1, 0], sizes = [1, 256], strides = [1, 1]} : vector<4x256xf32> to vector<1x256xf32>
    %339 = vector.broadcast %337 : vector<4x1xf32> to vector<4x256xf32>
    %340 = vector.broadcast %338 : vector<1x256xf32> to vector<4x256xf32>
    %341 = arith.mulf %339, %340 : vector<4x256xf32>
    %342 = arith.addf %336, %341 : vector<4x256xf32>
    %343 = vector.extract_strided_slice %331 {offsets = [0, 2], sizes = [4, 1], strides = [1, 1]} : vector<4x4xf32> to vector<4x1xf32>
    %344 = vector.extract_strided_slice %306 {offsets = [2, 0], sizes = [1, 256], strides = [1, 1]} : vector<4x256xf32> to vector<1x256xf32>
    %345 = vector.broadcast %343 : vector<4x1xf32> to vector<4x256xf32>
    %346 = vector.broadcast %344 : vector<1x256xf32> to vector<4x256xf32>
    %347 = arith.mulf %345, %346 : vector<4x256xf32>
    %348 = arith.addf %342, %347 : vector<4x256xf32>
    %349 = vector.extract_strided_slice %331 {offsets = [0, 3], sizes = [4, 1], strides = [1, 1]} : vector<4x4xf32> to vector<4x1xf32>
    %350 = vector.extract_strided_slice %306 {offsets = [3, 0], sizes = [1, 256], strides = [1, 1]} : vector<4x256xf32> to vector<1x256xf32>
    %351 = vector.broadcast %349 : vector<4x1xf32> to vector<4x256xf32>
    %352 = vector.broadcast %350 : vector<1x256xf32> to vector<4x256xf32>
    %353 = arith.mulf %351, %352 : vector<4x256xf32>
    %354 = arith.addf %348, %353 : vector<4x256xf32>
    %355 = arith.addf %330, %354 : vector<4x256xf32>
    %c0_84 = arith.constant 0 : index
    %c0_85 = arith.constant 0 : index
    %356 = vector.load %arg18[%c0_84, %c0_85] : memref<4x1xf32, #tpu.memory_space<vmem>>, vector<4x1xf32>
    %357 = vector.broadcast %356 : vector<4x1xf32> to vector<4x256xf32>
    %358 = arith.addf %355, %357 : vector<4x256xf32>
    %c0_86 = arith.constant 0 : index
    %c0_87 = arith.constant 0 : index
    %c0_88 = arith.constant 0 : index
    %359 = vector.load %arg19[%c0_86, %c0_87, %c0_88] : memref<1x4x256xf32, #tpu.memory_space<vmem>>, vector<1x4x256xf32>
    %360 = vector.shape_cast %359 : vector<1x4x256xf32> to vector<4x256xf32>
    %361 = vector.shape_cast %358 : vector<4x256xf32> to vector<1x4x256xf32>
    tpu.vector_store %arg19[%c0_86, %c0_87, %c0_88], %361 {strides = array<i32>} : memref<1x4x256xf32, #tpu.memory_space<vmem>>, vector<1x4x256xf32>,
    return
  }
  func.func @transform_0(%arg0: i32, %arg1: i32) -> (i32, i32, i32) {
    %c0_i32 = arith.constant 0 : i32
    %c0_i32_0 = arith.constant 0 : i32
    return %arg0, %c0_i32, %arg1 : i32, i32, i32
  }
  func.func @transform_1(%arg0: i32, %arg1: i32) -> (i32, i32, i32) {
    %c0_i32 = arith.constant 0 : i32
    %c0_i32_0 = arith.constant 0 : i32
    return %arg0, %c0_i32, %arg1 : i32, i32, i32
  }
  func.func @transform_2(%arg0: i32, %arg1: i32) -> (i32, i32, i32) {
    %c0_i32 = arith.constant 0 : i32
    %c0_i32_0 = arith.constant 0 : i32
    %c0_i32_1 = arith.constant 0 : i32
    %c0_i32_2 = arith.constant 0 : i32
    return %c0_i32, %c0_i32_0, %c0_i32_1 : i32, i32, i32
  }
  func.func @transform_3(%arg0: i32, %arg1: i32) -> (i32, i32, i32) {
    %c0_i32 = arith.constant 0 : i32
    %c0_i32_0 = arith.constant 0 : i32
    %c0_i32_1 = arith.constant 0 : i32
    %c0_i32_2 = arith.constant 0 : i32
    return %c0_i32, %c0_i32_0, %c0_i32_1 : i32, i32, i32
  }
  func.func @transform_4(%arg0: i32, %arg1: i32) -> (i32, i32, i32) {
    %c0_i32 = arith.constant 0 : i32
    %c0_i32_0 = arith.constant 0 : i32
    %c0_i32_1 = arith.constant 0 : i32
    %c0_i32_2 = arith.constant 0 : i32
    return %c0_i32, %c0_i32_0, %c0_i32_1 : i32, i32, i32
  }
  func.func @transform_5(%arg0: i32, %arg1: i32) -> (i32, i32, i32) {
    %c0_i32 = arith.constant 0 : i32
    %c0_i32_0 = arith.constant 0 : i32
    %c0_i32_1 = arith.constant 0 : i32
    %c0_i32_2 = arith.constant 0 : i32
    return %c0_i32, %c0_i32_0, %c0_i32_1 : i32, i32, i32
  }
  func.func @transform_6(%arg0: i32, %arg1: i32) -> (i32, i32, i32) {
    %c0_i32 = arith.constant 0 : i32
    %c0_i32_0 = arith.constant 0 : i32
    %c0_i32_1 = arith.constant 0 : i32
    %c0_i32_2 = arith.constant 0 : i32
    return %c0_i32, %c0_i32_0, %c0_i32_1 : i32, i32, i32
  }
  func.func @transform_7(%arg0: i32, %arg1: i32) -> (i32, i32, i32) {
    %c0_i32 = arith.constant 0 : i32
    %c0_i32_0 = arith.constant 0 : i32
    %c0_i32_1 = arith.constant 0 : i32
    %c0_i32_2 = arith.constant 0 : i32
    return %c0_i32, %c0_i32_0, %c0_i32_1 : i32, i32, i32
  }
  func.func @transform_8(%arg0: i32, %arg1: i32) -> (i32, i32, i32) {
    %c0_i32 = arith.constant 0 : i32
    %c0_i32_0 = arith.constant 0 : i32
    %c0_i32_1 = arith.constant 0 : i32
    %c0_i32_2 = arith.constant 0 : i32
    return %c0_i32, %c0_i32_0, %c0_i32_1 : i32, i32, i32
  }
  func.func @transform_9(%arg0: i32, %arg1: i32) -> (i32, i32, i32) {
    %c0_i32 = arith.constant 0 : i32
    %c0_i32_0 = arith.constant 0 : i32
    %c0_i32_1 = arith.constant 0 : i32
    %c0_i32_2 = arith.constant 0 : i32
    return %c0_i32, %c0_i32_0, %c0_i32_1 : i32, i32, i32
  }
  func.func @transform_10(%arg0: i32, %arg1: i32) -> (i32, i32) {
    %c0_i32 = arith.constant 0 : i32
    %c0_i32_0 = arith.constant 0 : i32
    %c0_i32_1 = arith.constant 0 : i32
    return %c0_i32, %c0_i32_0 : i32, i32
  }
  func.func @transform_11(%arg0: i32, %arg1: i32) -> (i32, i32) {
    %c0_i32 = arith.constant 0 : i32
    %c0_i32_0 = arith.constant 0 : i32
    %c0_i32_1 = arith.constant 0 : i32
    return %c0_i32, %c0_i32_0 : i32, i32
  }
  func.func @transform_12(%arg0: i32, %arg1: i32) -> (i32, i32) {
    %c0_i32 = arith.constant 0 : i32
    %c0_i32_0 = arith.constant 0 : i32
    %c0_i32_1 = arith.constant 0 : i32
    return %c0_i32, %c0_i32_0 : i32, i32
  }
  func.func @transform_13(%arg0: i32, %arg1: i32) -> (i32, i32) {
    %c0_i32 = arith.constant 0 : i32
    %c0_i32_0 = arith.constant 0 : i32
    %c0_i32_1 = arith.constant 0 : i32
    return %c0_i32, %c0_i32_0 : i32, i32
  }
  func.func @transform_14(%arg0: i32, %arg1: i32) -> (i32, i32) {
    %c0_i32 = arith.constant 0 : i32
    %c0_i32_0 = arith.constant 0 : i32
    %c0_i32_1 = arith.constant 0 : i32
    return %c0_i32, %c0_i32_0 : i32, i32
  }
  func.func @transform_15(%arg0: i32, %arg1: i32) -> (i32, i32) {
    %c0_i32 = arith.constant 0 : i32
    %c0_i32_0 = arith.constant 0 : i32
    %c0_i32_1 = arith.constant 0 : i32
    return %c0_i32, %c0_i32_0 : i32, i32
  }
  func.func @transform_16(%arg0: i32, %arg1: i32) -> (i32, i32) {
    %c0_i32 = arith.constant 0 : i32
    %c0_i32_0 = arith.constant 0 : i32
    %c0_i32_1 = arith.constant 0 : i32
    return %c0_i32, %c0_i32_0 : i32, i32
  }
  func.func @transform_17(%arg0: i32, %arg1: i32) -> (i32, i32, i32) {
    %c0_i32 = arith.constant 0 : i32
    %c0_i32_0 = arith.constant 0 : i32
    return %arg0, %c0_i32, %arg1 : i32, i32, i32
  }
}

module attributes {stable_mosaic.version = 11 : i64} {
  func.func @_encoder_fused_kernel(%arg0: i32, %arg1: i32, %arg2: memref<1x4x256xf32, #tpu.memory_space<vmem>>, %arg3: memref<1x4x256xf32, #tpu.memory_space<vmem>>, %arg4: memref<2x4x1xf32, #tpu.memory_space<vmem>>, %arg5: memref<2x4x1xf32, #tpu.memory_space<vmem>>, %arg6: memref<2x4x4xf32, #tpu.memory_space<vmem>>, %arg7: memref<2x4x1xf32, #tpu.memory_space<vmem>>, %arg8: memref<2x4x4xf32, #tpu.memory_space<vmem>>, %arg9: memref<2x4x1xf32, #tpu.memory_space<vmem>>, %arg10: memref<2x4x4xf32, #tpu.memory_space<vmem>>, %arg11: memref<2x4x1xf32, #tpu.memory_space<vmem>>, %arg12: memref<4x1xf32, #tpu.memory_space<vmem>>, %arg13: memref<4x1xf32, #tpu.memory_space<vmem>>, %arg14: memref<4x1xf32, #tpu.memory_space<vmem>>, %arg15: memref<4x1xf32, #tpu.memory_space<vmem>>, %arg16: memref<4x4xf32, #tpu.memory_space<vmem>>, %arg17: memref<4x4xf32, #tpu.memory_space<vmem>>, %arg18: memref<4x1xf32, #tpu.memory_space<vmem>>, %arg19: memref<1x4x256xf32, #tpu.memory_space<vmem>>) attributes {dimension_semantics = [#tpu.dimension_semantics<parallel>, #tpu.dimension_semantics<parallel>], iteration_bounds = array<i64: 2, 1>, scalar_prefetch = 0 : i64, scratch_operands = 0 : i64, tpu.core_type = #tpu.core_type<tc>, window_params = [{transform_indices = @transform_0, window_bounds = array<i64: 1, 4, 256>}, {transform_indices = @transform_1, window_bounds = array<i64: 1, 4, 256>}, {pipeline_mode = #tpu.pipeline_mode<synchronous>, transform_indices = @transform_2, window_bounds = array<i64: 2, 4, 1>}, {pipeline_mode = #tpu.pipeline_mode<synchronous>, transform_indices = @transform_3, window_bounds = array<i64: 2, 4, 1>}, {pipeline_mode = #tpu.pipeline_mode<synchronous>, transform_indices = @transform_4, window_bounds = array<i64: 2, 4, 4>}, {pipeline_mode = #tpu.pipeline_mode<synchronous>, transform_indices = @transform_5, window_bounds = array<i64: 2, 4, 1>}, {pipeline_mode = #tpu.pipeline_mode<synchronous>, transform_indices = @transform_6, window_bounds = array<i64: 2, 4, 4>}, {pipeline_mode = #tpu.pipeline_mode<synchronous>, transform_indices = @transform_7, window_bounds = array<i64: 2, 4, 1>}, {pipeline_mode = #tpu.pipeline_mode<synchronous>, transform_indices = @transform_8, window_bounds = array<i64: 2, 4, 4>}, {pipeline_mode = #tpu.pipeline_mode<synchronous>, transform_indices = @transform_9, window_bounds = array<i64: 2, 4, 1>}, {pipeline_mode = #tpu.pipeline_mode<synchronous>, transform_indices = @transform_10, window_bounds = array<i64: 4, 1>}, {pipeline_mode = #tpu.pipeline_mode<synchronous>, transform_indices = @transform_11, window_bounds = array<i64: 4, 1>}, {pipeline_mode = #tpu.pipeline_mode<synchronous>, transform_indices = @transform_12, window_bounds = array<i64: 4, 1>}, {pipeline_mode = #tpu.pipeline_mode<synchronous>, transform_indices = @transform_13, window_bounds = array<i64: 4, 1>}, {pipeline_mode = #tpu.pipeline_mode<synchronous>, transform_indices = @transform_14, window_bounds = array<i64: 4, 4>}, {pipeline_mode = #tpu.pipeline_mode<synchronous>, transform_indices = @transform_15, window_bounds = array<i64: 4, 4>}, {pipeline_mode = #tpu.pipeline_mode<synchronous>, transform_indices = @transform_16, window_bounds = array<i64: 4, 1>}, {transform_indices = @transform_17, window_bounds = array<i64: 1, 4, 256>}]} {
    %c0 = arith.constant 0 : index
    %c0_0 = arith.constant 0 : index
    %c0_1 = arith.constant 0 : index
    %0 = vector.load %arg2[%c0, %c0_0, %c0_1] : memref<1x4x256xf32, #tpu.memory_space<vmem>>, vector<1x4x256xf32>
    %1 = vector.shape_cast %0 : vector<1x4x256xf32> to vector<4x256xf32>
    %c0_2 = arith.constant 0 : index
    %c0_3 = arith.constant 0 : index
    %c0_4 = arith.constant 0 : index
    %2 = vector.load %arg3[%c0_2, %c0_3, %c0_4] : memref<1x4x256xf32, #tpu.memory_space<vmem>>, vector<1x4x256xf32>
    %3 = vector.shape_cast %2 : vector<1x4x256xf32> to vector<4x256xf32>
    %4 = tpu.concatenate %1, %3 in 1 : vector<4x256xf32>, vector<4x256xf32> -> vector<4x512xf32>
    %c0_5 = arith.constant 0 : index
    %c0_6 = arith.constant 0 : index
    %c0_7 = arith.constant 0 : index
    %5 = vector.load %arg4[%c0_5, %c0_6, %c0_7] : memref<2x4x1xf32, #tpu.memory_space<vmem>>, vector<1x4x1xf32>
    %6 = vector.shape_cast %5 : vector<1x4x1xf32> to vector<4x1xf32>
    %c0_8 = arith.constant 0 : index
    %c0_9 = arith.constant 0 : index
    %c0_10 = arith.constant 0 : index
    %7 = vector.load %arg5[%c0_8, %c0_9, %c0_10] : memref<2x4x1xf32, #tpu.memory_space<vmem>>, vector<1x4x1xf32>
    %8 = vector.shape_cast %7 : vector<1x4x1xf32> to vector<4x1xf32>
    %c0_11 = arith.constant 0 : index
    %c0_12 = arith.constant 0 : index
    %c0_13 = arith.constant 0 : index
    %9 = vector.load %arg6[%c0_11, %c0_12, %c0_13] : memref<2x4x4xf32, #tpu.memory_space<vmem>>, vector<1x4x4xf32>
    %10 = vector.shape_cast %9 : vector<1x4x4xf32> to vector<4x4xf32>
    %c0_14 = arith.constant 0 : index
    %c0_15 = arith.constant 0 : index
    %c0_16 = arith.constant 0 : index
    %11 = vector.load %arg7[%c0_14, %c0_15, %c0_16] : memref<2x4x1xf32, #tpu.memory_space<vmem>>, vector<1x4x1xf32>
    %12 = vector.shape_cast %11 : vector<1x4x1xf32> to vector<4x1xf32>
    %c0_17 = arith.constant 0 : index
    %c0_18 = arith.constant 0 : index
    %c0_19 = arith.constant 0 : index
    %13 = vector.load %arg8[%c0_17, %c0_18, %c0_19] : memref<2x4x4xf32, #tpu.memory_space<vmem>>, vector<1x4x4xf32>
    %14 = vector.shape_cast %13 : vector<1x4x4xf32> to vector<4x4xf32>
    %c0_20 = arith.constant 0 : index
    %c0_21 = arith.constant 0 : index
    %c0_22 = arith.constant 0 : index
    %15 = vector.load %arg9[%c0_20, %c0_21, %c0_22] : memref<2x4x1xf32, #tpu.memory_space<vmem>>, vector<1x4x1xf32>
    %16 = vector.shape_cast %15 : vector<1x4x1xf32> to vector<4x1xf32>
    %c0_23 = arith.constant 0 : index
    %c0_24 = arith.constant 0 : index
    %c0_25 = arith.constant 0 : index
    %17 = vector.load %arg10[%c0_23, %c0_24, %c0_25] : memref<2x4x4xf32, #tpu.memory_space<vmem>>, vector<1x4x4xf32>
    %18 = vector.shape_cast %17 : vector<1x4x4xf32> to vector<4x4xf32>
    %c0_26 = arith.constant 0 : index
    %c0_27 = arith.constant 0 : index
    %c0_28 = arith.constant 0 : index
    %19 = vector.load %arg11[%c0_26, %c0_27, %c0_28] : memref<2x4x1xf32, #tpu.memory_space<vmem>>, vector<1x4x1xf32>
    %20 = vector.shape_cast %19 : vector<1x4x1xf32> to vector<4x1xf32>
    %cst = arith.constant dense<0.000000e+00> : vector<512xf32>
    %21 = vector.multi_reduction <add>, %4, %cst [0] : vector<4x512xf32> to vector<512xf32>
    %22 = vector.shape_cast %21 : vector<512xf32> to vector<1x512xf32>
    %cst_29 = arith.constant 4.000000e+00 : f32
    %23 = vector.broadcast %cst_29 : f32 to vector<1x512xf32>
    %24 = arith.divf %22, %23 : vector<1x512xf32>
    %25 = vector.broadcast %24 : vector<1x512xf32> to vector<4x512xf32>
    %26 = arith.subf %4, %25 : vector<4x512xf32>
    %27 = arith.mulf %26, %26 : vector<4x512xf32>
    %cst_30 = arith.constant dense<0.000000e+00> : vector<512xf32>
    %28 = vector.multi_reduction <add>, %27, %cst_30 [0] : vector<4x512xf32> to vector<512xf32>
    %29 = vector.shape_cast %28 : vector<512xf32> to vector<1x512xf32>
    %cst_31 = arith.constant 4.000000e+00 : f32
    %30 = vector.broadcast %cst_31 : f32 to vector<1x512xf32>
    %31 = arith.divf %29, %30 : vector<1x512xf32>
    %32 = vector.broadcast %24 : vector<1x512xf32> to vector<4x512xf32>
    %33 = arith.subf %4, %32 : vector<4x512xf32>
    %cst_32 = arith.constant 9.99999974E-6 : f32
    %34 = vector.broadcast %cst_32 : f32 to vector<1x512xf32>
    %35 = arith.addf %31, %34 : vector<1x512xf32>
    %36 = math.rsqrt %35 : vector<1x512xf32>
    %37 = vector.broadcast %36 : vector<1x512xf32> to vector<4x512xf32>
    %38 = arith.mulf %33, %37 : vector<4x512xf32>
    %39 = vector.broadcast %6 : vector<4x1xf32> to vector<4x512xf32>
    %40 = arith.mulf %38, %39 : vector<4x512xf32>
    %41 = vector.broadcast %8 : vector<4x1xf32> to vector<4x512xf32>
    %42 = arith.addf %40, %41 : vector<4x512xf32>
    %43 = vector.extract_strided_slice %10 {offsets = [0, 0], sizes = [4, 1], strides = [1, 1]} : vector<4x4xf32> to vector<4x1xf32>
    %44 = vector.extract_strided_slice %42 {offsets = [0, 0], sizes = [1, 512], strides = [1, 1]} : vector<4x512xf32> to vector<1x512xf32>
    %45 = vector.broadcast %43 : vector<4x1xf32> to vector<4x512xf32>
    %46 = vector.broadcast %44 : vector<1x512xf32> to vector<4x512xf32>
    %47 = arith.mulf %45, %46 : vector<4x512xf32>
    %48 = vector.extract_strided_slice %10 {offsets = [0, 1], sizes = [4, 1], strides = [1, 1]} : vector<4x4xf32> to vector<4x1xf32>
    %49 = vector.extract_strided_slice %42 {offsets = [1, 0], sizes = [1, 512], strides = [1, 1]} : vector<4x512xf32> to vector<1x512xf32>
    %50 = vector.broadcast %48 : vector<4x1xf32> to vector<4x512xf32>
    %51 = vector.broadcast %49 : vector<1x512xf32> to vector<4x512xf32>
    %52 = arith.mulf %50, %51 : vector<4x512xf32>
    %53 = arith.addf %47, %52 : vector<4x512xf32>
    %54 = vector.extract_strided_slice %10 {offsets = [0, 2], sizes = [4, 1], strides = [1, 1]} : vector<4x4xf32> to vector<4x1xf32>
    %55 = vector.extract_strided_slice %42 {offsets = [2, 0], sizes = [1, 512], strides = [1, 1]} : vector<4x512xf32> to vector<1x512xf32>
    %56 = vector.broadcast %54 : vector<4x1xf32> to vector<4x512xf32>
    %57 = vector.broadcast %55 : vector<1x512xf32> to vector<4x512xf32>
    %58 = arith.mulf %56, %57 : vector<4x512xf32>
    %59 = arith.addf %53, %58 : vector<4x512xf32>
    %60 = vector.extract_strided_slice %10 {offsets = [0, 3], sizes = [4, 1], strides = [1, 1]} : vector<4x4xf32> to vector<4x1xf32>
    %61 = vector.extract_strided_slice %42 {offsets = [3, 0], sizes = [1, 512], strides = [1, 1]} : vector<4x512xf32> to vector<1x512xf32>
    %62 = vector.broadcast %60 : vector<4x1xf32> to vector<4x512xf32>
    %63 = vector.broadcast %61 : vector<1x512xf32> to vector<4x512xf32>
    %64 = arith.mulf %62, %63 : vector<4x512xf32>
    %65 = arith.addf %59, %64 : vector<4x512xf32>
    %66 = vector.broadcast %12 : vector<4x1xf32> to vector<4x512xf32>
    %67 = arith.addf %65, %66 : vector<4x512xf32>
    %68 = vector.extract_strided_slice %14 {offsets = [0, 0], sizes = [4, 1], strides = [1, 1]} : vector<4x4xf32> to vector<4x1xf32>
    %69 = vector.extract_strided_slice %42 {offsets = [0, 0], sizes = [1, 512], strides = [1, 1]} : vector<4x512xf32> to vector<1x512xf32>
    %70 = vector.broadcast %68 : vector<4x1xf32> to vector<4x512xf32>
    %71 = vector.broadcast %69 : vector<1x512xf32> to vector<4x512xf32>
    %72 = arith.mulf %70, %71 : vector<4x512xf32>
    %73 = vector.extract_strided_slice %14 {offsets = [0, 1], sizes = [4, 1], strides = [1, 1]} : vector<4x4xf32> to vector<4x1xf32>
    %74 = vector.extract_strided_slice %42 {offsets = [1, 0], sizes = [1, 512], strides = [1, 1]} : vector<4x512xf32> to vector<1x512xf32>
    %75 = vector.broadcast %73 : vector<4x1xf32> to vector<4x512xf32>
    %76 = vector.broadcast %74 : vector<1x512xf32> to vector<4x512xf32>
    %77 = arith.mulf %75, %76 : vector<4x512xf32>
    %78 = arith.addf %72, %77 : vector<4x512xf32>
    %79 = vector.extract_strided_slice %14 {offsets = [0, 2], sizes = [4, 1], strides = [1, 1]} : vector<4x4xf32> to vector<4x1xf32>
    %80 = vector.extract_strided_slice %42 {offsets = [2, 0], sizes = [1, 512], strides = [1, 1]} : vector<4x512xf32> to vector<1x512xf32>
    %81 = vector.broadcast %79 : vector<4x1xf32> to vector<4x512xf32>
    %82 = vector.broadcast %80 : vector<1x512xf32> to vector<4x512xf32>
    %83 = arith.mulf %81, %82 : vector<4x512xf32>
    %84 = arith.addf %78, %83 : vector<4x512xf32>
    %85 = vector.extract_strided_slice %14 {offsets = [0, 3], sizes = [4, 1], strides = [1, 1]} : vector<4x4xf32> to vector<4x1xf32>
    %86 = vector.extract_strided_slice %42 {offsets = [3, 0], sizes = [1, 512], strides = [1, 1]} : vector<4x512xf32> to vector<1x512xf32>
    %87 = vector.broadcast %85 : vector<4x1xf32> to vector<4x512xf32>
    %88 = vector.broadcast %86 : vector<1x512xf32> to vector<4x512xf32>
    %89 = arith.mulf %87, %88 : vector<4x512xf32>
    %90 = arith.addf %84, %89 : vector<4x512xf32>
    %91 = vector.broadcast %16 : vector<4x1xf32> to vector<4x512xf32>
    %92 = arith.addf %90, %91 : vector<4x512xf32>
    %93 = arith.negf %67 : vector<4x512xf32>
    %94 = math.exp %93 : vector<4x512xf32>
    %cst_33 = arith.constant 1.000000e+00 : f32
    %95 = vector.broadcast %cst_33 : f32 to vector<4x512xf32>
    %96 = arith.addf %95, %94 : vector<4x512xf32>
    %97 = arith.divf %95, %96 : vector<4x512xf32>
    %98 = arith.mulf %67, %97 : vector<4x512xf32>
    %99 = arith.negf %92 : vector<4x512xf32>
    %100 = math.exp %99 : vector<4x512xf32>
    %cst_34 = arith.constant 1.000000e+00 : f32
    %101 = vector.broadcast %cst_34 : f32 to vector<4x512xf32>
    %102 = arith.addf %101, %100 : vector<4x512xf32>
    %103 = arith.divf %101, %102 : vector<4x512xf32>
    %104 = arith.mulf %92, %103 : vector<4x512xf32>
    %105 = arith.mulf %98, %104 : vector<4x512xf32>
    %106 = vector.extract_strided_slice %18 {offsets = [0, 0], sizes = [4, 1], strides = [1, 1]} : vector<4x4xf32> to vector<4x1xf32>
    %107 = vector.extract_strided_slice %105 {offsets = [0, 0], sizes = [1, 512], strides = [1, 1]} : vector<4x512xf32> to vector<1x512xf32>
    %108 = vector.broadcast %106 : vector<4x1xf32> to vector<4x512xf32>
    %109 = vector.broadcast %107 : vector<1x512xf32> to vector<4x512xf32>
    %110 = arith.mulf %108, %109 : vector<4x512xf32>
    %111 = vector.extract_strided_slice %18 {offsets = [0, 1], sizes = [4, 1], strides = [1, 1]} : vector<4x4xf32> to vector<4x1xf32>
    %112 = vector.extract_strided_slice %105 {offsets = [1, 0], sizes = [1, 512], strides = [1, 1]} : vector<4x512xf32> to vector<1x512xf32>
    %113 = vector.broadcast %111 : vector<4x1xf32> to vector<4x512xf32>
    %114 = vector.broadcast %112 : vector<1x512xf32> to vector<4x512xf32>
    %115 = arith.mulf %113, %114 : vector<4x512xf32>
    %116 = arith.addf %110, %115 : vector<4x512xf32>
    %117 = vector.extract_strided_slice %18 {offsets = [0, 2], sizes = [4, 1], strides = [1, 1]} : vector<4x4xf32> to vector<4x1xf32>
    %118 = vector.extract_strided_slice %105 {offsets = [2, 0], sizes = [1, 512], strides = [1, 1]} : vector<4x512xf32> to vector<1x512xf32>
    %119 = vector.broadcast %117 : vector<4x1xf32> to vector<4x512xf32>
    %120 = vector.broadcast %118 : vector<1x512xf32> to vector<4x512xf32>
    %121 = arith.mulf %119, %120 : vector<4x512xf32>
    %122 = arith.addf %116, %121 : vector<4x512xf32>
    %123 = vector.extract_strided_slice %18 {offsets = [0, 3], sizes = [4, 1], strides = [1, 1]} : vector<4x4xf32> to vector<4x1xf32>
    %124 = vector.extract_strided_slice %105 {offsets = [3, 0], sizes = [1, 512], strides = [1, 1]} : vector<4x512xf32> to vector<1x512xf32>
    %125 = vector.broadcast %123 : vector<4x1xf32> to vector<4x512xf32>
    %126 = vector.broadcast %124 : vector<1x512xf32> to vector<4x512xf32>
    %127 = arith.mulf %125, %126 : vector<4x512xf32>
    %128 = arith.addf %122, %127 : vector<4x512xf32>
    %129 = vector.broadcast %20 : vector<4x1xf32> to vector<4x512xf32>
    %130 = arith.addf %128, %129 : vector<4x512xf32>
    %131 = arith.addf %4, %130 : vector<4x512xf32>
    %c1 = arith.constant 1 : index
    %c0_35 = arith.constant 0 : index
    %c0_36 = arith.constant 0 : index
    %132 = vector.load %arg4[%c1, %c0_35, %c0_36] : memref<2x4x1xf32, #tpu.memory_space<vmem>>, vector<1x4x1xf32>
    %133 = vector.shape_cast %132 : vector<1x4x1xf32> to vector<4x1xf32>
    %c1_37 = arith.constant 1 : index
    %c0_38 = arith.constant 0 : index
    %c0_39 = arith.constant 0 : index
    %134 = vector.load %arg5[%c1_37, %c0_38, %c0_39] : memref<2x4x1xf32, #tpu.memory_space<vmem>>, vector<1x4x1xf32>
    %135 = vector.shape_cast %134 : vector<1x4x1xf32> to vector<4x1xf32>
    %c1_40 = arith.constant 1 : index
    %c0_41 = arith.constant 0 : index
    %c0_42 = arith.constant 0 : index
    %136 = vector.load %arg6[%c1_40, %c0_41, %c0_42] : memref<2x4x4xf32, #tpu.memory_space<vmem>>, vector<1x4x4xf32>
    %137 = vector.shape_cast %136 : vector<1x4x4xf32> to vector<4x4xf32>
    %c1_43 = arith.constant 1 : index
    %c0_44 = arith.constant 0 : index
    %c0_45 = arith.constant 0 : index
    %138 = vector.load %arg7[%c1_43, %c0_44, %c0_45] : memref<2x4x1xf32, #tpu.memory_space<vmem>>, vector<1x4x1xf32>
    %139 = vector.shape_cast %138 : vector<1x4x1xf32> to vector<4x1xf32>
    %c1_46 = arith.constant 1 : index
    %c0_47 = arith.constant 0 : index
    %c0_48 = arith.constant 0 : index
    %140 = vector.load %arg8[%c1_46, %c0_47, %c0_48] : memref<2x4x4xf32, #tpu.memory_space<vmem>>, vector<1x4x4xf32>
    %141 = vector.shape_cast %140 : vector<1x4x4xf32> to vector<4x4xf32>
    %c1_49 = arith.constant 1 : index
    %c0_50 = arith.constant 0 : index
    %c0_51 = arith.constant 0 : index
    %142 = vector.load %arg9[%c1_49, %c0_50, %c0_51] : memref<2x4x1xf32, #tpu.memory_space<vmem>>, vector<1x4x1xf32>
    %143 = vector.shape_cast %142 : vector<1x4x1xf32> to vector<4x1xf32>
    %c1_52 = arith.constant 1 : index
    %c0_53 = arith.constant 0 : index
    %c0_54 = arith.constant 0 : index
    %144 = vector.load %arg10[%c1_52, %c0_53, %c0_54] : memref<2x4x4xf32, #tpu.memory_space<vmem>>, vector<1x4x4xf32>
    %145 = vector.shape_cast %144 : vector<1x4x4xf32> to vector<4x4xf32>
    %c1_55 = arith.constant 1 : index
    %c0_56 = arith.constant 0 : index
    %c0_57 = arith.constant 0 : index
    %146 = vector.load %arg11[%c1_55, %c0_56, %c0_57] : memref<2x4x1xf32, #tpu.memory_space<vmem>>, vector<1x4x1xf32>
    %147 = vector.shape_cast %146 : vector<1x4x1xf32> to vector<4x1xf32>
    %cst_58 = arith.constant dense<0.000000e+00> : vector<512xf32>
    %148 = vector.multi_reduction <add>, %131, %cst_58 [0] : vector<4x512xf32> to vector<512xf32>
    %149 = vector.shape_cast %148 : vector<512xf32> to vector<1x512xf32>
    %cst_59 = arith.constant 4.000000e+00 : f32
    %150 = vector.broadcast %cst_59 : f32 to vector<1x512xf32>
    %151 = arith.divf %149, %150 : vector<1x512xf32>
    %152 = vector.broadcast %151 : vector<1x512xf32> to vector<4x512xf32>
    %153 = arith.subf %131, %152 : vector<4x512xf32>
    %154 = arith.mulf %153, %153 : vector<4x512xf32>
    %cst_60 = arith.constant dense<0.000000e+00> : vector<512xf32>
    %155 = vector.multi_reduction <add>, %154, %cst_60 [0] : vector<4x512xf32> to vector<512xf32>
    %156 = vector.shape_cast %155 : vector<512xf32> to vector<1x512xf32>
    %cst_61 = arith.constant 4.000000e+00 : f32
    %157 = vector.broadcast %cst_61 : f32 to vector<1x512xf32>
    %158 = arith.divf %156, %157 : vector<1x512xf32>
    %159 = vector.broadcast %151 : vector<1x512xf32> to vector<4x512xf32>
    %160 = arith.subf %131, %159 : vector<4x512xf32>
    %cst_62 = arith.constant 9.99999974E-6 : f32
    %161 = vector.broadcast %cst_62 : f32 to vector<1x512xf32>
    %162 = arith.addf %158, %161 : vector<1x512xf32>
    %163 = math.rsqrt %162 : vector<1x512xf32>
    %164 = vector.broadcast %163 : vector<1x512xf32> to vector<4x512xf32>
    %165 = arith.mulf %160, %164 : vector<4x512xf32>
    %166 = vector.broadcast %133 : vector<4x1xf32> to vector<4x512xf32>
    %167 = arith.mulf %165, %166 : vector<4x512xf32>
    %168 = vector.broadcast %135 : vector<4x1xf32> to vector<4x512xf32>
    %169 = arith.addf %167, %168 : vector<4x512xf32>
    %170 = vector.extract_strided_slice %137 {offsets = [0, 0], sizes = [4, 1], strides = [1, 1]} : vector<4x4xf32> to vector<4x1xf32>
    %171 = vector.extract_strided_slice %169 {offsets = [0, 0], sizes = [1, 512], strides = [1, 1]} : vector<4x512xf32> to vector<1x512xf32>
    %172 = vector.broadcast %170 : vector<4x1xf32> to vector<4x512xf32>
    %173 = vector.broadcast %171 : vector<1x512xf32> to vector<4x512xf32>
    %174 = arith.mulf %172, %173 : vector<4x512xf32>
    %175 = vector.extract_strided_slice %137 {offsets = [0, 1], sizes = [4, 1], strides = [1, 1]} : vector<4x4xf32> to vector<4x1xf32>
    %176 = vector.extract_strided_slice %169 {offsets = [1, 0], sizes = [1, 512], strides = [1, 1]} : vector<4x512xf32> to vector<1x512xf32>
    %177 = vector.broadcast %175 : vector<4x1xf32> to vector<4x512xf32>
    %178 = vector.broadcast %176 : vector<1x512xf32> to vector<4x512xf32>
    %179 = arith.mulf %177, %178 : vector<4x512xf32>
    %180 = arith.addf %174, %179 : vector<4x512xf32>
    %181 = vector.extract_strided_slice %137 {offsets = [0, 2], sizes = [4, 1], strides = [1, 1]} : vector<4x4xf32> to vector<4x1xf32>
    %182 = vector.extract_strided_slice %169 {offsets = [2, 0], sizes = [1, 512], strides = [1, 1]} : vector<4x512xf32> to vector<1x512xf32>
    %183 = vector.broadcast %181 : vector<4x1xf32> to vector<4x512xf32>
    %184 = vector.broadcast %182 : vector<1x512xf32> to vector<4x512xf32>
    %185 = arith.mulf %183, %184 : vector<4x512xf32>
    %186 = arith.addf %180, %185 : vector<4x512xf32>
    %187 = vector.extract_strided_slice %137 {offsets = [0, 3], sizes = [4, 1], strides = [1, 1]} : vector<4x4xf32> to vector<4x1xf32>
    %188 = vector.extract_strided_slice %169 {offsets = [3, 0], sizes = [1, 512], strides = [1, 1]} : vector<4x512xf32> to vector<1x512xf32>
    %189 = vector.broadcast %187 : vector<4x1xf32> to vector<4x512xf32>
    %190 = vector.broadcast %188 : vector<1x512xf32> to vector<4x512xf32>
    %191 = arith.mulf %189, %190 : vector<4x512xf32>
    %192 = arith.addf %186, %191 : vector<4x512xf32>
    %193 = vector.broadcast %139 : vector<4x1xf32> to vector<4x512xf32>
    %194 = arith.addf %192, %193 : vector<4x512xf32>
    %195 = vector.extract_strided_slice %141 {offsets = [0, 0], sizes = [4, 1], strides = [1, 1]} : vector<4x4xf32> to vector<4x1xf32>
    %196 = vector.extract_strided_slice %169 {offsets = [0, 0], sizes = [1, 512], strides = [1, 1]} : vector<4x512xf32> to vector<1x512xf32>
    %197 = vector.broadcast %195 : vector<4x1xf32> to vector<4x512xf32>
    %198 = vector.broadcast %196 : vector<1x512xf32> to vector<4x512xf32>
    %199 = arith.mulf %197, %198 : vector<4x512xf32>
    %200 = vector.extract_strided_slice %141 {offsets = [0, 1], sizes = [4, 1], strides = [1, 1]} : vector<4x4xf32> to vector<4x1xf32>
    %201 = vector.extract_strided_slice %169 {offsets = [1, 0], sizes = [1, 512], strides = [1, 1]} : vector<4x512xf32> to vector<1x512xf32>
    %202 = vector.broadcast %200 : vector<4x1xf32> to vector<4x512xf32>
    %203 = vector.broadcast %201 : vector<1x512xf32> to vector<4x512xf32>
    %204 = arith.mulf %202, %203 : vector<4x512xf32>
    %205 = arith.addf %199, %204 : vector<4x512xf32>
    %206 = vector.extract_strided_slice %141 {offsets = [0, 2], sizes = [4, 1], strides = [1, 1]} : vector<4x4xf32> to vector<4x1xf32>
    %207 = vector.extract_strided_slice %169 {offsets = [2, 0], sizes = [1, 512], strides = [1, 1]} : vector<4x512xf32> to vector<1x512xf32>
    %208 = vector.broadcast %206 : vector<4x1xf32> to vector<4x512xf32>
    %209 = vector.broadcast %207 : vector<1x512xf32> to vector<4x512xf32>
    %210 = arith.mulf %208, %209 : vector<4x512xf32>
    %211 = arith.addf %205, %210 : vector<4x512xf32>
    %212 = vector.extract_strided_slice %141 {offsets = [0, 3], sizes = [4, 1], strides = [1, 1]} : vector<4x4xf32> to vector<4x1xf32>
    %213 = vector.extract_strided_slice %169 {offsets = [3, 0], sizes = [1, 512], strides = [1, 1]} : vector<4x512xf32> to vector<1x512xf32>
    %214 = vector.broadcast %212 : vector<4x1xf32> to vector<4x512xf32>
    %215 = vector.broadcast %213 : vector<1x512xf32> to vector<4x512xf32>
    %216 = arith.mulf %214, %215 : vector<4x512xf32>
    %217 = arith.addf %211, %216 : vector<4x512xf32>
    %218 = vector.broadcast %143 : vector<4x1xf32> to vector<4x512xf32>
    %219 = arith.addf %217, %218 : vector<4x512xf32>
    %220 = arith.negf %194 : vector<4x512xf32>
    %221 = math.exp %220 : vector<4x512xf32>
    %cst_63 = arith.constant 1.000000e+00 : f32
    %222 = vector.broadcast %cst_63 : f32 to vector<4x512xf32>
    %223 = arith.addf %222, %221 : vector<4x512xf32>
    %224 = arith.divf %222, %223 : vector<4x512xf32>
    %225 = arith.mulf %194, %224 : vector<4x512xf32>
    %226 = arith.negf %219 : vector<4x512xf32>
    %227 = math.exp %226 : vector<4x512xf32>
    %cst_64 = arith.constant 1.000000e+00 : f32
    %228 = vector.broadcast %cst_64 : f32 to vector<4x512xf32>
    %229 = arith.addf %228, %227 : vector<4x512xf32>
    %230 = arith.divf %228, %229 : vector<4x512xf32>
    %231 = arith.mulf %219, %230 : vector<4x512xf32>
    %232 = arith.mulf %225, %231 : vector<4x512xf32>
    %233 = vector.extract_strided_slice %145 {offsets = [0, 0], sizes = [4, 1], strides = [1, 1]} : vector<4x4xf32> to vector<4x1xf32>
    %234 = vector.extract_strided_slice %232 {offsets = [0, 0], sizes = [1, 512], strides = [1, 1]} : vector<4x512xf32> to vector<1x512xf32>
    %235 = vector.broadcast %233 : vector<4x1xf32> to vector<4x512xf32>
    %236 = vector.broadcast %234 : vector<1x512xf32> to vector<4x512xf32>
    %237 = arith.mulf %235, %236 : vector<4x512xf32>
    %238 = vector.extract_strided_slice %145 {offsets = [0, 1], sizes = [4, 1], strides = [1, 1]} : vector<4x4xf32> to vector<4x1xf32>
    %239 = vector.extract_strided_slice %232 {offsets = [1, 0], sizes = [1, 512], strides = [1, 1]} : vector<4x512xf32> to vector<1x512xf32>
    %240 = vector.broadcast %238 : vector<4x1xf32> to vector<4x512xf32>
    %241 = vector.broadcast %239 : vector<1x512xf32> to vector<4x512xf32>
    %242 = arith.mulf %240, %241 : vector<4x512xf32>
    %243 = arith.addf %237, %242 : vector<4x512xf32>
    %244 = vector.extract_strided_slice %145 {offsets = [0, 2], sizes = [4, 1], strides = [1, 1]} : vector<4x4xf32> to vector<4x1xf32>
    %245 = vector.extract_strided_slice %232 {offsets = [2, 0], sizes = [1, 512], strides = [1, 1]} : vector<4x512xf32> to vector<1x512xf32>
    %246 = vector.broadcast %244 : vector<4x1xf32> to vector<4x512xf32>
    %247 = vector.broadcast %245 : vector<1x512xf32> to vector<4x512xf32>
    %248 = arith.mulf %246, %247 : vector<4x512xf32>
    %249 = arith.addf %243, %248 : vector<4x512xf32>
    %250 = vector.extract_strided_slice %145 {offsets = [0, 3], sizes = [4, 1], strides = [1, 1]} : vector<4x4xf32> to vector<4x1xf32>
    %251 = vector.extract_strided_slice %232 {offsets = [3, 0], sizes = [1, 512], strides = [1, 1]} : vector<4x512xf32> to vector<1x512xf32>
    %252 = vector.broadcast %250 : vector<4x1xf32> to vector<4x512xf32>
    %253 = vector.broadcast %251 : vector<1x512xf32> to vector<4x512xf32>
    %254 = arith.mulf %252, %253 : vector<4x512xf32>
    %255 = arith.addf %249, %254 : vector<4x512xf32>
    %256 = vector.broadcast %147 : vector<4x1xf32> to vector<4x512xf32>
    %257 = arith.addf %255, %256 : vector<4x512xf32>
    %258 = arith.addf %131, %257 : vector<4x512xf32>
    %259 = vector.extract_strided_slice %258 {offsets = [0, 0], sizes = [4, 256], strides = [1, 1]} : vector<4x512xf32> to vector<4x256xf32>
    %260 = vector.extract_strided_slice %258 {offsets = [0, 256], sizes = [4, 256], strides = [1, 1]} : vector<4x512xf32> to vector<4x256xf32>
    %261 = arith.subf %259, %260 : vector<4x256xf32>
    %262 = math.absf %261 : vector<4x256xf32>
    %263 = arith.addf %259, %260 : vector<4x256xf32>
    %cst_65 = arith.constant dense<0.000000e+00> : vector<256xf32>
    %264 = vector.multi_reduction <add>, %262, %cst_65 [0] : vector<4x256xf32> to vector<256xf32>
    %265 = vector.shape_cast %264 : vector<256xf32> to vector<1x256xf32>
    %cst_66 = arith.constant dense<0.000000e+00> : vector<256xf32>
    %266 = vector.multi_reduction <add>, %263, %cst_66 [0] : vector<4x256xf32> to vector<256xf32>
    %267 = vector.shape_cast %266 : vector<256xf32> to vector<1x256xf32>
    %268 = arith.addf %265, %267 : vector<1x256xf32>
    %cst_67 = arith.constant 8.000000e+00 : f32
    %269 = vector.broadcast %cst_67 : f32 to vector<1x256xf32>
    %270 = arith.divf %268, %269 : vector<1x256xf32>
    %271 = vector.broadcast %270 : vector<1x256xf32> to vector<4x256xf32>
    %272 = arith.subf %262, %271 : vector<4x256xf32>
    %273 = arith.mulf %272, %272 : vector<4x256xf32>
    %cst_68 = arith.constant dense<0.000000e+00> : vector<256xf32>
    %274 = vector.multi_reduction <add>, %273, %cst_68 [0] : vector<4x256xf32> to vector<256xf32>
    %275 = vector.shape_cast %274 : vector<256xf32> to vector<1x256xf32>
    %276 = vector.broadcast %270 : vector<1x256xf32> to vector<4x256xf32>
    %277 = arith.subf %263, %276 : vector<4x256xf32>
    %278 = arith.mulf %277, %277 : vector<4x256xf32>
    %cst_69 = arith.constant dense<0.000000e+00> : vector<256xf32>
    %279 = vector.multi_reduction <add>, %278, %cst_69 [0] : vector<4x256xf32> to vector<256xf32>
    %280 = vector.shape_cast %279 : vector<256xf32> to vector<1x256xf32>
    %281 = arith.addf %275, %280 : vector<1x256xf32>
    %cst_70 = arith.constant 8.000000e+00 : f32
    %282 = vector.broadcast %cst_70 : f32 to vector<1x256xf32>
    %283 = arith.divf %281, %282 : vector<1x256xf32>
    %cst_71 = arith.constant 9.99999974E-6 : f32
    %284 = vector.broadcast %cst_71 : f32 to vector<1x256xf32>
    %285 = arith.addf %283, %284 : vector<1x256xf32>
    %286 = math.rsqrt %285 : vector<1x256xf32>
    %287 = vector.broadcast %270 : vector<1x256xf32> to vector<4x256xf32>
    %288 = arith.subf %262, %287 : vector<4x256xf32>
    %289 = vector.broadcast %286 : vector<1x256xf32> to vector<4x256xf32>
    %290 = arith.mulf %288, %289 : vector<4x256xf32>
    %c0_72 = arith.constant 0 : index
    %c0_73 = arith.constant 0 : index
    %291 = vector.load %arg12[%c0_72, %c0_73] : memref<4x1xf32, #tpu.memory_space<vmem>>, vector<4x1xf32>
    %292 = vector.broadcast %291 : vector<4x1xf32> to vector<4x256xf32>
    %293 = arith.mulf %290, %292 : vector<4x256xf32>
    %c0_74 = arith.constant 0 : index
    %c0_75 = arith.constant 0 : index
    %294 = vector.load %arg14[%c0_74, %c0_75] : memref<4x1xf32, #tpu.memory_space<vmem>>, vector<4x1xf32>
    %295 = vector.broadcast %294 : vector<4x1xf32> to vector<4x256xf32>
    %296 = arith.addf %293, %295 : vector<4x256xf32>
    %297 = vector.broadcast %270 : vector<1x256xf32> to vector<4x256xf32>
    %298 = arith.subf %263, %297 : vector<4x256xf32>
    %299 = vector.broadcast %286 : vector<1x256xf32> to vector<4x256xf32>
    %300 = arith.mulf %298, %299 : vector<4x256xf32>
    %c0_76 = arith.constant 0 : index
    %c0_77 = arith.constant 0 : index
    %301 = vector.load %arg13[%c0_76, %c0_77] : memref<4x1xf32, #tpu.memory_space<vmem>>, vector<4x1xf32>
    %302 = vector.broadcast %301 : vector<4x1xf32> to vector<4x256xf32>
    %303 = arith.mulf %300, %302 : vector<4x256xf32>
    %c0_78 = arith.constant 0 : index
    %c0_79 = arith.constant 0 : index
    %304 = vector.load %arg15[%c0_78, %c0_79] : memref<4x1xf32, #tpu.memory_space<vmem>>, vector<4x1xf32>
    %305 = vector.broadcast %304 : vector<4x1xf32> to vector<4x256xf32>
    %306 = arith.addf %303, %305 : vector<4x256xf32>
    %c0_80 = arith.constant 0 : index
    %c0_81 = arith.constant 0 : index
    %307 = vector.load %arg16[%c0_80, %c0_81] : memref<4x4xf32, #tpu.memory_space<vmem>>, vector<4x4xf32>
    %308 = vector.extract_strided_slice %307 {offsets = [0, 0], sizes = [4, 1], strides = [1, 1]} : vector<4x4xf32> to vector<4x1xf32>
    %309 = vector.extract_strided_slice %296 {offsets = [0, 0], sizes = [1, 256], strides = [1, 1]} : vector<4x256xf32> to vector<1x256xf32>
    %310 = vector.broadcast %308 : vector<4x1xf32> to vector<4x256xf32>
    %311 = vector.broadcast %309 : vector<1x256xf32> to vector<4x256xf32>
    %312 = arith.mulf %310, %311 : vector<4x256xf32>
    %313 = vector.extract_strided_slice %307 {offsets = [0, 1], sizes = [4, 1], strides = [1, 1]} : vector<4x4xf32> to vector<4x1xf32>
    %314 = vector.extract_strided_slice %296 {offsets = [1, 0], sizes = [1, 256], strides = [1, 1]} : vector<4x256xf32> to vector<1x256xf32>
    %315 = vector.broadcast %313 : vector<4x1xf32> to vector<4x256xf32>
    %316 = vector.broadcast %314 : vector<1x256xf32> to vector<4x256xf32>
    %317 = arith.mulf %315, %316 : vector<4x256xf32>
    %318 = arith.addf %312, %317 : vector<4x256xf32>
    %319 = vector.extract_strided_slice %307 {offsets = [0, 2], sizes = [4, 1], strides = [1, 1]} : vector<4x4xf32> to vector<4x1xf32>
    %320 = vector.extract_strided_slice %296 {offsets = [2, 0], sizes = [1, 256], strides = [1, 1]} : vector<4x256xf32> to vector<1x256xf32>
    %321 = vector.broadcast %319 : vector<4x1xf32> to vector<4x256xf32>
    %322 = vector.broadcast %320 : vector<1x256xf32> to vector<4x256xf32>
    %323 = arith.mulf %321, %322 : vector<4x256xf32>
    %324 = arith.addf %318, %323 : vector<4x256xf32>
    %325 = vector.extract_strided_slice %307 {offsets = [0, 3], sizes = [4, 1], strides = [1, 1]} : vector<4x4xf32> to vector<4x1xf32>
    %326 = vector.extract_strided_slice %296 {offsets = [3, 0], sizes = [1, 256], strides = [1, 1]} : vector<4x256xf32> to vector<1x256xf32>
    %327 = vector.broadcast %325 : vector<4x1xf32> to vector<4x256xf32>
    %328 = vector.broadcast %326 : vector<1x256xf32> to vector<4x256xf32>
    %329 = arith.mulf %327, %328 : vector<4x256xf32>
    %330 = arith.addf %324, %329 : vector<4x256xf32>
    %c0_82 = arith.constant 0 : index
    %c0_83 = arith.constant 0 : index
    %331 = vector.load %arg17[%c0_82, %c0_83] : memref<4x4xf32, #tpu.memory_space<vmem>>, vector<4x4xf32>
    %332 = vector.extract_strided_slice %331 {offsets = [0, 0], sizes = [4, 1], strides = [1, 1]} : vector<4x4xf32> to vector<4x1xf32>
    %333 = vector.extract_strided_slice %306 {offsets = [0, 0], sizes = [1, 256], strides = [1, 1]} : vector<4x256xf32> to vector<1x256xf32>
    %334 = vector.broadcast %332 : vector<4x1xf32> to vector<4x256xf32>
    %335 = vector.broadcast %333 : vector<1x256xf32> to vector<4x256xf32>
    %336 = arith.mulf %334, %335 : vector<4x256xf32>
    %337 = vector.extract_strided_slice %331 {offsets = [0, 1], sizes = [4, 1], strides = [1, 1]} : vector<4x4xf32> to vector<4x1xf32>
    %338 = vector.extract_strided_slice %306 {offsets = [1, 0], sizes = [1, 256], strides = [1, 1]} : vector<4x256xf32> to vector<1x256xf32>
    %339 = vector.broadcast %337 : vector<4x1xf32> to vector<4x256xf32>
    %340 = vector.broadcast %338 : vector<1x256xf32> to vector<4x256xf32>
    %341 = arith.mulf %339, %340 : vector<4x256xf32>
    %342 = arith.addf %336, %341 : vector<4x256xf32>
    %343 = vector.extract_strided_slice %331 {offsets = [0, 2], sizes = [4, 1], strides = [1, 1]} : vector<4x4xf32> to vector<4x1xf32>
    %344 = vector.extract_strided_slice %306 {offsets = [2, 0], sizes = [1, 256], strides = [1, 1]} : vector<4x256xf32> to vector<1x256xf32>
    %345 = vector.broadcast %343 : vector<4x1xf32> to vector<4x256xf32>
    %346 = vector.broadcast %344 : vector<1x256xf32> to vector<4x256xf32>
    %347 = arith.mulf %345, %346 : vector<4x256xf32>
    %348 = arith.addf %342, %347 : vector<4x256xf32>
    %349 = vector.extract_strided_slice %331 {offsets = [0, 3], sizes = [4, 1], strides = [1, 1]} : vector<4x4xf32> to vector<4x1xf32>
    %350 = vector.extract_strided_slice %306 {offsets = [3, 0], sizes = [1, 256], strides = [1, 1]} : vector<4x256xf32> to vector<1x256xf32>
    %351 = vector.broadcast %349 : vector<4x1xf32> to vector<4x256xf32>
    %352 = vector.broadcast %350 : vector<1x256xf32> to vector<4x256xf32>
    %353 = arith.mulf %351, %352 : vector<4x256xf32>
    %354 = arith.addf %348, %353 : vector<4x256xf32>
    %355 = arith.addf %330, %354 : vector<4x256xf32>
    %c0_84 = arith.constant 0 : index
    %c0_85 = arith.constant 0 : index
    %356 = vector.load %arg18[%c0_84, %c0_85] : memref<4x1xf32, #tpu.memory_space<vmem>>, vector<4x1xf32>
    %357 = vector.broadcast %356 : vector<4x1xf32> to vector<4x256xf32>
    %358 = arith.addf %355, %357 : vector<4x256xf32>
    %c0_86 = arith.constant 0 : index
    %c0_87 = arith.constant 0 : index
    %c0_88 = arith.constant 0 : index
    %359 = vector.load %arg19[%c0_86, %c0_87, %c0_88] : memref<1x4x256xf32, #tpu.memory_space<vmem>>, vector<1x4x256xf32>
    %360 = vector.shape_cast %359 : vector<1x4x256xf32> to vector<4x256xf32>
    %361 = vector.shape_cast %358 : vector<4x256xf32> to vector<1x4x256xf32>
    tpu.vector_store %arg19[%c0_86, %c0_87, %c0_88], %361 {strides = array<i32>} : memref<1x4x256xf32, #tpu.memory_space<vmem>>, vector<1x4x256xf32>,
    return
  }
  func.func @transform_0(%arg0: i32, %arg1: i32) -> (i32, i32, i32) {
    %c0_i32 = arith.constant 0 : i32
    %c0_i32_0 = arith.constant 0 : i32
    return %arg0, %c0_i32, %arg1 : i32, i32, i32
  }
  func.func @transform_1(%arg0: i32, %arg1: i32) -> (i32, i32, i32) {
    %c0_i32 = arith.constant 0 : i32
    %c0_i32_0 = arith.constant 0 : i32
    return %arg0, %c0_i32, %arg1 : i32, i32, i32
  }
  func.func @transform_2(%arg0: i32, %arg1: i32) -> (i32, i32, i32) {
    %c0_i32 = arith.constant 0 : i32
    %c0_i32_0 = arith.constant 0 : i32
    %c0_i32_1 = arith.constant 0 : i32
    %c0_i32_2 = arith.constant 0 : i32
    return %c0_i32, %c0_i32_0, %c0_i32_1 : i32, i32, i32
  }
  func.func @transform_3(%arg0: i32, %arg1: i32) -> (i32, i32, i32) {
    %c0_i32 = arith.constant 0 : i32
    %c0_i32_0 = arith.constant 0 : i32
    %c0_i32_1 = arith.constant 0 : i32
    %c0_i32_2 = arith.constant 0 : i32
    return %c0_i32, %c0_i32_0, %c0_i32_1 : i32, i32, i32
  }
  func.func @transform_4(%arg0: i32, %arg1: i32) -> (i32, i32, i32) {
    %c0_i32 = arith.constant 0 : i32
    %c0_i32_0 = arith.constant 0 : i32
    %c0_i32_1 = arith.constant 0 : i32
    %c0_i32_2 = arith.constant 0 : i32
    return %c0_i32, %c0_i32_0, %c0_i32_1 : i32, i32, i32
  }
  func.func @transform_5(%arg0: i32, %arg1: i32) -> (i32, i32, i32) {
    %c0_i32 = arith.constant 0 : i32
    %c0_i32_0 = arith.constant 0 : i32
    %c0_i32_1 = arith.constant 0 : i32
    %c0_i32_2 = arith.constant 0 : i32
    return %c0_i32, %c0_i32_0, %c0_i32_1 : i32, i32, i32
  }
  func.func @transform_6(%arg0: i32, %arg1: i32) -> (i32, i32, i32) {
    %c0_i32 = arith.constant 0 : i32
    %c0_i32_0 = arith.constant 0 : i32
    %c0_i32_1 = arith.constant 0 : i32
    %c0_i32_2 = arith.constant 0 : i32
    return %c0_i32, %c0_i32_0, %c0_i32_1 : i32, i32, i32
  }
  func.func @transform_7(%arg0: i32, %arg1: i32) -> (i32, i32, i32) {
    %c0_i32 = arith.constant 0 : i32
    %c0_i32_0 = arith.constant 0 : i32
    %c0_i32_1 = arith.constant 0 : i32
    %c0_i32_2 = arith.constant 0 : i32
    return %c0_i32, %c0_i32_0, %c0_i32_1 : i32, i32, i32
  }
  func.func @transform_8(%arg0: i32, %arg1: i32) -> (i32, i32, i32) {
    %c0_i32 = arith.constant 0 : i32
    %c0_i32_0 = arith.constant 0 : i32
    %c0_i32_1 = arith.constant 0 : i32
    %c0_i32_2 = arith.constant 0 : i32
    return %c0_i32, %c0_i32_0, %c0_i32_1 : i32, i32, i32
  }
  func.func @transform_9(%arg0: i32, %arg1: i32) -> (i32, i32, i32) {
    %c0_i32 = arith.constant 0 : i32
    %c0_i32_0 = arith.constant 0 : i32
    %c0_i32_1 = arith.constant 0 : i32
    %c0_i32_2 = arith.constant 0 : i32
    return %c0_i32, %c0_i32_0, %c0_i32_1 : i32, i32, i32
  }
  func.func @transform_10(%arg0: i32, %arg1: i32) -> (i32, i32) {
    %c0_i32 = arith.constant 0 : i32
    %c0_i32_0 = arith.constant 0 : i32
    %c0_i32_1 = arith.constant 0 : i32
    return %c0_i32, %c0_i32_0 : i32, i32
  }
  func.func @transform_11(%arg0: i32, %arg1: i32) -> (i32, i32) {
    %c0_i32 = arith.constant 0 : i32
    %c0_i32_0 = arith.constant 0 : i32
    %c0_i32_1 = arith.constant 0 : i32
    return %c0_i32, %c0_i32_0 : i32, i32
  }
  func.func @transform_12(%arg0: i32, %arg1: i32) -> (i32, i32) {
    %c0_i32 = arith.constant 0 : i32
    %c0_i32_0 = arith.constant 0 : i32
    %c0_i32_1 = arith.constant 0 : i32
    return %c0_i32, %c0_i32_0 : i32, i32
  }
  func.func @transform_13(%arg0: i32, %arg1: i32) -> (i32, i32) {
    %c0_i32 = arith.constant 0 : i32
    %c0_i32_0 = arith.constant 0 : i32
    %c0_i32_1 = arith.constant 0 : i32
    return %c0_i32, %c0_i32_0 : i32, i32
  }
  func.func @transform_14(%arg0: i32, %arg1: i32) -> (i32, i32) {
    %c0_i32 = arith.constant 0 : i32
    %c0_i32_0 = arith.constant 0 : i32
    %c0_i32_1 = arith.constant 0 : i32
    return %c0_i32, %c0_i32_0 : i32, i32
  }
  func.func @transform_15(%arg0: i32, %arg1: i32) -> (i32, i32) {
    %c0_i32 = arith.constant 0 : i32
    %c0_i32_0 = arith.constant 0 : i32
    %c0_i32_1 = arith.constant 0 : i32
    return %c0_i32, %c0_i32_0 : i32, i32
  }
  func.func @transform_16(%arg0: i32, %arg1: i32) -> (i32, i32) {
    %c0_i32 = arith.constant 0 : i32
    %c0_i32_0 = arith.constant 0 : i32
    %c0_i32_1 = arith.constant 0 : i32
    return %c0_i32, %c0_i32_0 : i32, i32
  }
  func.func @transform_17(%arg0: i32, %arg1: i32) -> (i32, i32, i32) {
    %c0_i32 = arith.constant 0 : i32
    %c0_i32_0 = arith.constant 0 : i32
    return %arg0, %c0_i32, %arg1 : i32, i32, i32
  }
}

</mosaic_0001>

<llo_original>
// kernel: _encoder_pallas.1
$region0: #{_encoder_pallas.1}
  #allocation0 [shape = 'u32[]', space=smem, size = 0x4, offset = 0x4, fixed_abs, tag = 'smem constant byte address 0x4 - core index']
  #allocation1 [shape = 'u32[144,128]{1,0:T(1,128)}', space=vmem, size = 0x12000, scoped, tag = 'internal scratch']
  %s0 = inlined_call_operand.vmem [shape: f32[2,4,256], index: 0, kind: input, shape index: {}]
  %s1 = inlined_call_operand.vmem [shape: f32[2,4,256], index: 1, kind: input, shape index: {}]
  %s2 = inlined_call_operand.vmem [shape: f32[2,4,1], index: 2, kind: input, shape index: {}]
  %s3 = inlined_call_operand.vmem [shape: f32[2,4,1], index: 3, kind: input, shape index: {}]
  %s4 = inlined_call_operand.vmem [shape: f32[2,4,4], index: 4, kind: input, shape index: {}]
  %s5 = inlined_call_operand.vmem [shape: f32[2,4,1], index: 5, kind: input, shape index: {}]
  %s6 = inlined_call_operand.vmem [shape: f32[2,4,4], index: 6, kind: input, shape index: {}]
  %s7 = inlined_call_operand.vmem [shape: f32[2,4,1], index: 7, kind: input, shape index: {}]
  %s8 = inlined_call_operand.vmem [shape: f32[2,4,4], index: 8, kind: input, shape index: {}]
  %s9 = inlined_call_operand.vmem [shape: f32[2,4,1], index: 9, kind: input, shape index: {}]
  %s10 = inlined_call_operand.vmem [shape: f32[4,1], index: 10, kind: input, shape index: {}]
  %s11 = inlined_call_operand.vmem [shape: f32[4,1], index: 11, kind: input, shape index: {}]
  %s12 = inlined_call_operand.vmem [shape: f32[4,1], index: 12, kind: input, shape index: {}]
  %s13 = inlined_call_operand.vmem [shape: f32[4,1], index: 13, kind: input, shape index: {}]
  %s14 = inlined_call_operand.vmem [shape: f32[4,4], index: 14, kind: input, shape index: {}]
  %s15 = inlined_call_operand.vmem [shape: f32[4,4], index: 15, kind: input, shape index: {}]
  %s16 = inlined_call_operand.vmem [shape: f32[4,1], index: 16, kind: input, shape index: {}]
  %s17 = inlined_call_operand.hbm [shape: f32[2,4,256], index: 17, kind: output, shape index: {}]
  %s18 = sld [smem:[#allocation0]]
  $region101: #{_encoder_pallas.1} parent=0
    _
  %s20 = ssub.s32 1, %s18
  %s21 = scalar_select 0, %s20, %s18
  $region1: #{_encoder_pallas.1} parent=0
    #allocation2 [shape = 'u8[8192]{0}', space=vmem, size = 0x2000, scoped, tag = 'output window, operand 0']
    #allocation3 [shape = 's32[2]{0}', space=sflag, size = 0x8, scoped, tag = 'scoped memory for _encoder_pallas.1']
    %22 = vsyncpa [#allocation3], 0
    %s23 = scalar_lea.sflag [#allocation3], 1
    %24 = vsyncpa %s23, 0
    loop: start=0, step=1, limit=4
    $region2: #{_encoder_pallas.1} parent=1 // loop_pre_header
      _
    $region3: #{_encoder_pallas.1} parent=1 // loop_header
      %s26 = sphi 0, %s30
      %p27 = scmp.ge.s32.totalorder %s26, 4
      %s33 = sphi 0, %s45
      %s34 = sphi 0, %s41
      %s35 = sphi 0, %s33
      %s36 = sphi 0, %s34
      %s37 = sphi 0, %s35
      %s38 = sphi 0, %s36
      %s50 = sphi 0, %s52
      %s53 = sphi 0, %s50
      %s54 = sphi 0, %s53
      %s70 = sphi 0, %s54
      %s78 = sphi 0, %s80
      %s81 = sphi 0, %s78
      %s82 = sphi 0, %s81
      %s98 = sphi 0, %s82
      %s102 = sphi 0, %s102
      %s104 = sphi 0, %s102
      %s105 = sphi 0, %s104
      %s119 = sphi 0, %s105
      %s123 = sphi 0, %s123
      %s125 = sphi 0, %s123
      %s126 = sphi 0, %s125
      %s140 = sphi 0, %s126
      %s144 = sphi 0, %s144
      %s146 = sphi 0, %s144
      %s147 = sphi 0, %s146
      %s161 = sphi 0, %s147
      %s165 = sphi 0, %s165
      %s167 = sphi 0, %s165
      %s168 = sphi 0, %s167
      %s182 = sphi 0, %s168
      %s186 = sphi 0, %s186
      %s188 = sphi 0, %s186
      %s189 = sphi 0, %s188
      %s203 = sphi 0, %s189
      %s207 = sphi 0, %s207
      %s209 = sphi 0, %s207
      %s210 = sphi 0, %s209
      %s224 = sphi 0, %s210
      %s228 = sphi 0, %s228
      %s230 = sphi 0, %s228
      %s231 = sphi 0, %s230
      %s245 = sphi 0, %s231
      %s249 = sphi 0, %s249
      %s251 = sphi 0, %s249
      %s252 = sphi 0, %s251
      %s266 = sphi 0, %s252
      %s270 = sphi 0, %s270
      %s272 = sphi 0, %s270
      %s273 = sphi 0, %s272
      %s287 = sphi 0, %s273
      %s291 = sphi 0, %s291
      %s293 = sphi 0, %s291
      %s294 = sphi 0, %s293
      %s308 = sphi 0, %s294
      %s312 = sphi 0, %s312
      %s314 = sphi 0, %s312
      %s315 = sphi 0, %s314
      %s329 = sphi 0, %s315
      %s333 = sphi 0, %s333
      %s335 = sphi 0, %s333
      %s336 = sphi 0, %s335
      %s350 = sphi 0, %s336
      %s354 = sphi 0, %s354
      %s356 = sphi 0, %s354
      %s357 = sphi 0, %s356
      %s371 = sphi 0, %s357
      %s375 = sphi 0, %s375
      %s377 = sphi 0, %s375
      %s378 = sphi 0, %s377
      %s392 = sphi 0, %s378
      %s396 = sphi 0, %s396
      %s398 = sphi 0, %s396
      %s399 = sphi 0, %s398
      %s413 = sphi 0, %s399
      %s421 = sphi 0, %s423
      %s424 = sphi 0, %s421
      %s425 = sphi 0, %s424
      %s441 = sphi 0, %s425
    $region4: #{_encoder_pallas.1} parent=1 // loop_header_branch
      %29 = sbr.rel (%p27) target = $region8
    $region5: #{_encoder_pallas.1} parent=1 // loop_body
      %s31 = ssub.s32 %s26, 1
      %s32 = ssub.s32 %s26, 2
      %s39 = sadd.s32 1, %s34
      %p40 = scmp.ge.s32.totalorder %s39, 1
      %s41 = scalar_select %p40, 0, %s39
      %s42 = sadd.s32 1, %s33
      %s43 = scalar_select %p40, %s42, %s33
      %p44 = scmp.ge.s32.totalorder %s43, 2
      %s45 = scalar_select %p44, 0, %s43
      %s46 = ssub.s32 %s33, %s45
      %s47 = ssub.s32 %s34, %s41
      %s48 = sor.u32 %s46, %s47
      %p49 = scmp.eq.s32.totalorder %s48, 0
      %s51 = sadd.s32 %s50, 1
      %s52 = scalar_select %p49, %s50, %s51
      %p55 = pneg %p49
      %p56 = scmp.eq.s32.totalorder %s26, 1
      %p57 = por %p55, %p56
      %p58 = scmp.ne.s32.totalorder %s50, %s53
      %p59 = scmp.eq.s32.totalorder %s26, 0
      %p60 = por %p58, %p59
      %p61 = scmp.ne.s32.totalorder %s50, %s53
      %p62 = scmp.eq.s32.totalorder %s31, 1
      %p63 = por %p61, %p62
      %p64 = scmp.ne.s32.totalorder %s53, %s54
      %p65 = scmp.eq.s32.totalorder %s31, 0
      %p66 = por %p64, %p65
      %p67 = scmp.ne.s32.totalorder %s53, %s54
      %p68 = scmp.eq.s32.totalorder %s32, 1
      %p69 = por %p67, %p68
      %p71 = scmp.ne.s32.totalorder %s54, %s70
      %p72 = scmp.eq.s32.totalorder %s32, 0
      %p73 = por %p71, %p72
      %s74 = ssub.s32 %s33, %s45
      %s75 = ssub.s32 %s34, %s41
      %s76 = sor.u32 %s74, %s75
      %p77 = scmp.eq.s32.totalorder %s76, 0
      %s79 = sadd.s32 %s78, 1
      %s80 = scalar_select %p77, %s78, %s79
      %p83 = pneg %p77
      %p84 = scmp.eq.s32.totalorder %s26, 1
      %p85 = por %p83, %p84
      %p86 = scmp.ne.s32.totalorder %s78, %s81
      %p87 = scmp.eq.s32.totalorder %s26, 0
      %p88 = por %p86, %p87
      %p89 = scmp.ne.s32.totalorder %s78, %s81
      %p90 = scmp.eq.s32.totalorder %s31, 1
      %p91 = por %p89, %p90
      %p92 = scmp.ne.s32.totalorder %s81, %s82
      %p93 = scmp.eq.s32.totalorder %s31, 0
      %p94 = por %p92, %p93
      %p95 = scmp.ne.s32.totalorder %s81, %s82
      %p96 = scmp.eq.s32.totalorder %s32, 1
      %p97 = por %p95, %p96
      %p99 = scmp.ne.s32.totalorder %s82, %s98
      %p100 = scmp.eq.s32.totalorder %s32, 0
      %p101 = por %p99, %p100
      %s103 = sadd.s32 %s102, 1
      %p106 = scmp.eq.s32.totalorder %s26, 1
      %p107 = scmp.ne.s32.totalorder %s102, %s104
      %p108 = scmp.eq.s32.totalorder %s26, 0
      %p109 = por %p107, %p108
      %p110 = scmp.ne.s32.totalorder %s102, %s104
      %p111 = scmp.eq.s32.totalorder %s31, 1
      %p112 = por %p110, %p111
      %p113 = scmp.ne.s32.totalorder %s104, %s105
      %p114 = scmp.eq.s32.totalorder %s31, 0
      %p115 = por %p113, %p114
      %p116 = scmp.ne.s32.totalorder %s104, %s105
      %p117 = scmp.eq.s32.totalorder %s32, 1
      %p118 = por %p116, %p117
      %p120 = scmp.ne.s32.totalorder %s105, %s119
      %p121 = scmp.eq.s32.totalorder %s32, 0
      %p122 = por %p120, %p121
      %s124 = sadd.s32 %s123, 1
      %p127 = scmp.eq.s32.totalorder %s26, 1
      %p128 = scmp.ne.s32.totalorder %s123, %s125
      %p129 = scmp.eq.s32.totalorder %s26, 0
      %p130 = por %p128, %p129
      %p131 = scmp.ne.s32.totalorder %s123, %s125
      %p132 = scmp.eq.s32.totalorder %s31, 1
      %p133 = por %p131, %p132
      %p134 = scmp.ne.s32.totalorder %s125, %s126
      %p135 = scmp.eq.s32.totalorder %s31, 0
      %p136 = por %p134, %p135
      %p137 = scmp.ne.s32.totalorder %s125, %s126
      %p138 = scmp.eq.s32.totalorder %s32, 1
      %p139 = por %p137, %p138
      %p141 = scmp.ne.s32.totalorder %s126, %s140
      %p142 = scmp.eq.s32.totalorder %s32, 0
      %p143 = por %p141, %p142
      %s145 = sadd.s32 %s144, 1
      %p148 = scmp.eq.s32.totalorder %s26, 1
      %p149 = scmp.ne.s32.totalorder %s144, %s146
      %p150 = scmp.eq.s32.totalorder %s26, 0
      %p151 = por %p149, %p150
      %p152 = scmp.ne.s32.totalorder %s144, %s146
      %p153 = scmp.eq.s32.totalorder %s31, 1
      %p154 = por %p152, %p153
      %p155 = scmp.ne.s32.totalorder %s146, %s147
      %p156 = scmp.eq.s32.totalorder %s31, 0
      %p157 = por %p155, %p156
      %p158 = scmp.ne.s32.totalorder %s146, %s147
      %p159 = scmp.eq.s32.totalorder %s32, 1
      %p160 = por %p158, %p159
      %p162 = scmp.ne.s32.totalorder %s147, %s161
      %p163 = scmp.eq.s32.totalorder %s32, 0
      %p164 = por %p162, %p163
      %s166 = sadd.s32 %s165, 1
      %p169 = scmp.eq.s32.totalorder %s26, 1
      %p170 = scmp.ne.s32.totalorder %s165, %s167
      %p171 = scmp.eq.s32.totalorder %s26, 0
      %p172 = por %p170, %p171
      %p173 = scmp.ne.s32.totalorder %s165, %s167
      %p174 = scmp.eq.s32.totalorder %s31, 1
      %p175 = por %p173, %p174
      %p176 = scmp.ne.s32.totalorder %s167, %s168
      %p177 = scmp.eq.s32.totalorder %s31, 0
      %p178 = por %p176, %p177
      %p179 = scmp.ne.s32.totalorder %s167, %s168
      %p180 = scmp.eq.s32.totalorder %s32, 1
      %p181 = por %p179, %p180
      %p183 = scmp.ne.s32.totalorder %s168, %s182
      %p184 = scmp.eq.s32.totalorder %s32, 0
      %p185 = por %p183, %p184
      %s187 = sadd.s32 %s186, 1
      %p190 = scmp.eq.s32.totalorder %s26, 1
      %p191 = scmp.ne.s32.totalorder %s186, %s188
      %p192 = scmp.eq.s32.totalorder %s26, 0
      %p193 = por %p191, %p192
      %p194 = scmp.ne.s32.totalorder %s186, %s188
      %p195 = scmp.eq.s32.totalorder %s31, 1
      %p196 = por %p194, %p195
      %p197 = scmp.ne.s32.totalorder %s188, %s189
      %p198 = scmp.eq.s32.totalorder %s31, 0
      %p199 = por %p197, %p198
      %p200 = scmp.ne.s32.totalorder %s188, %s189
      %p201 = scmp.eq.s32.totalorder %s32, 1
      %p202 = por %p200, %p201
      %p204 = scmp.ne.s32.totalorder %s189, %s203
      %p205 = scmp.eq.s32.totalorder %s32, 0
      %p206 = por %p204, %p205
      %s208 = sadd.s32 %s207, 1
      %p211 = scmp.eq.s32.totalorder %s26, 1
      %p212 = scmp.ne.s32.totalorder %s207, %s209
      %p213 = scmp.eq.s32.totalorder %s26, 0
      %p214 = por %p212, %p213
      %p215 = scmp.ne.s32.totalorder %s207, %s209
      %p216 = scmp.eq.s32.totalorder %s31, 1
      %p217 = por %p215, %p216
      %p218 = scmp.ne.s32.totalorder %s209, %s210
      %p219 = scmp.eq.s32.totalorder %s31, 0
      %p220 = por %p218, %p219
      %p221 = scmp.ne.s32.totalorder %s209, %s210
      %p222 = scmp.eq.s32.totalorder %s32, 1
      %p223 = por %p221, %p222
      %p225 = scmp.ne.s32.totalorder %s210, %s224
      %p226 = scmp.eq.s32.totalorder %s32, 0
      %p227 = por %p225, %p226
      %s229 = sadd.s32 %s228, 1
      %p232 = scmp.eq.s32.totalorder %s26, 1
      %p233 = scmp.ne.s32.totalorder %s228, %s230
      %p234 = scmp.eq.s32.totalorder %s26, 0
      %p235 = por %p233, %p234
      %p236 = scmp.ne.s32.totalorder %s228, %s230
      %p237 = scmp.eq.s32.totalorder %s31, 1
      %p238 = por %p236, %p237
      %p239 = scmp.ne.s32.totalorder %s230, %s231
      %p240 = scmp.eq.s32.totalorder %s31, 0
      %p241 = por %p239, %p240
      %p242 = scmp.ne.s32.totalorder %s230, %s231
      %p243 = scmp.eq.s32.totalorder %s32, 1
      %p244 = por %p242, %p243
      %p246 = scmp.ne.s32.totalorder %s231, %s245
      %p247 = scmp.eq.s32.totalorder %s32, 0
      %p248 = por %p246, %p247
      %s250 = sadd.s32 %s249, 1
      %p253 = scmp.eq.s32.totalorder %s26, 1
      %p254 = scmp.ne.s32.totalorder %s249, %s251
      %p255 = scmp.eq.s32.totalorder %s26, 0
      %p256 = por %p254, %p255
      %p257 = scmp.ne.s32.totalorder %s249, %s251
      %p258 = scmp.eq.s32.totalorder %s31, 1
      %p259 = por %p257, %p258
      %p260 = scmp.ne.s32.totalorder %s251, %s252
      %p261 = scmp.eq.s32.totalorder %s31, 0
      %p262 = por %p260, %p261
      %p263 = scmp.ne.s32.totalorder %s251, %s252
      %p264 = scmp.eq.s32.totalorder %s32, 1
      %p265 = por %p263, %p264
      %p267 = scmp.ne.s32.totalorder %s252, %s266
      %p268 = scmp.eq.s32.totalorder %s32, 0
      %p269 = por %p267, %p268
      %s271 = sadd.s32 %s270, 1
      %p274 = scmp.eq.s32.totalorder %s26, 1
      %p275 = scmp.ne.s32.totalorder %s270, %s272
      %p276 = scmp.eq.s32.totalorder %s26, 0
      %p277 = por %p275, %p276
      %p278 = scmp.ne.s32.totalorder %s270, %s272
      %p279 = scmp.eq.s32.totalorder %s31, 1
      %p280 = por %p278, %p279
      %p281 = scmp.ne.s32.totalorder %s272, %s273
      %p282 = scmp.eq.s32.totalorder %s31, 0
      %p283 = por %p281, %p282
      %p284 = scmp.ne.s32.totalorder %s272, %s273
      %p285 = scmp.eq.s32.totalorder %s32, 1
      %p286 = por %p284, %p285
      %p288 = scmp.ne.s32.totalorder %s273, %s287
      %p289 = scmp.eq.s32.totalorder %s32, 0
      %p290 = por %p288, %p289
      %s292 = sadd.s32 %s291, 1
      %p295 = scmp.eq.s32.totalorder %s26, 1
      %p296 = scmp.ne.s32.totalorder %s291, %s293
      %p297 = scmp.eq.s32.totalorder %s26, 0
      %p298 = por %p296, %p297
      %p299 = scmp.ne.s32.totalorder %s291, %s293
      %p300 = scmp.eq.s32.totalorder %s31, 1
      %p301 = por %p299, %p300
      %p302 = scmp.ne.s32.totalorder %s293, %s294
      %p303 = scmp.eq.s32.totalorder %s31, 0
      %p304 = por %p302, %p303
      %p305 = scmp.ne.s32.totalorder %s293, %s294
      %p306 = scmp.eq.s32.totalorder %s32, 1
      %p307 = por %p305, %p306
      %p309 = scmp.ne.s32.totalorder %s294, %s308
      %p310 = scmp.eq.s32.totalorder %s32, 0
      %p311 = por %p309, %p310
      %s313 = sadd.s32 %s312, 1
      %p316 = scmp.eq.s32.totalorder %s26, 1
      %p317 = scmp.ne.s32.totalorder %s312, %s314
      %p318 = scmp.eq.s32.totalorder %s26, 0
      %p319 = por %p317, %p318
      %p320 = scmp.ne.s32.totalorder %s312, %s314
      %p321 = scmp.eq.s32.totalorder %s31, 1
      %p322 = por %p320, %p321
      %p323 = scmp.ne.s32.totalorder %s314, %s315
      %p324 = scmp.eq.s32.totalorder %s31, 0
      %p325 = por %p323, %p324
      %p326 = scmp.ne.s32.totalorder %s314, %s315
      %p327 = scmp.eq.s32.totalorder %s32, 1
      %p328 = por %p326, %p327
      %p330 = scmp.ne.s32.totalorder %s315, %s329
      %p331 = scmp.eq.s32.totalorder %s32, 0
      %p332 = por %p330, %p331
      %s334 = sadd.s32 %s333, 1
      %p337 = scmp.eq.s32.totalorder %s26, 1
      %p338 = scmp.ne.s32.totalorder %s333, %s335
      %p339 = scmp.eq.s32.totalorder %s26, 0
      %p340 = por %p338, %p339
      %p341 = scmp.ne.s32.totalorder %s333, %s335
      %p342 = scmp.eq.s32.totalorder %s31, 1
      %p343 = por %p341, %p342
      %p344 = scmp.ne.s32.totalorder %s335, %s336
      %p345 = scmp.eq.s32.totalorder %s31, 0
      %p346 = por %p344, %p345
      %p347 = scmp.ne.s32.totalorder %s335, %s336
      %p348 = scmp.eq.s32.totalorder %s32, 1
      %p349 = por %p347, %p348
      %p351 = scmp.ne.s32.totalorder %s336, %s350
      %p352 = scmp.eq.s32.totalorder %s32, 0
      %p353 = por %p351, %p352
      %s355 = sadd.s32 %s354, 1
      %p358 = scmp.eq.s32.totalorder %s26, 1
      %p359 = scmp.ne.s32.totalorder %s354, %s356
      %p360 = scmp.eq.s32.totalorder %s26, 0
      %p361 = por %p359, %p360
      %p362 = scmp.ne.s32.totalorder %s354, %s356
      %p363 = scmp.eq.s32.totalorder %s31, 1
      %p364 = por %p362, %p363
      %p365 = scmp.ne.s32.totalorder %s356, %s357
      %p366 = scmp.eq.s32.totalorder %s31, 0
      %p367 = por %p365, %p366
      %p368 = scmp.ne.s32.totalorder %s356, %s357
      %p369 = scmp.eq.s32.totalorder %s32, 1
      %p370 = por %p368, %p369
      %p372 = scmp.ne.s32.totalorder %s357, %s371
      %p373 = scmp.eq.s32.totalorder %s32, 0
      %p374 = por %p372, %p373
      %s376 = sadd.s32 %s375, 1
      %p379 = scmp.eq.s32.totalorder %s26, 1
      %p380 = scmp.ne.s32.totalorder %s375, %s377
      %p381 = scmp.eq.s32.totalorder %s26, 0
      %p382 = por %p380, %p381
      %p383 = scmp.ne.s32.totalorder %s375, %s377
      %p384 = scmp.eq.s32.totalorder %s31, 1
      %p385 = por %p383, %p384
      %p386 = scmp.ne.s32.totalorder %s377, %s378
      %p387 = scmp.eq.s32.totalorder %s31, 0
      %p388 = por %p386, %p387
      %p389 = scmp.ne.s32.totalorder %s377, %s378
      %p390 = scmp.eq.s32.totalorder %s32, 1
      %p391 = por %p389, %p390
      %p393 = scmp.ne.s32.totalorder %s378, %s392
      %p394 = scmp.eq.s32.totalorder %s32, 0
      %p395 = por %p393, %p394
      %s397 = sadd.s32 %s396, 1
      %p400 = scmp.eq.s32.totalorder %s26, 1
      %p401 = scmp.ne.s32.totalorder %s396, %s398
      %p402 = scmp.eq.s32.totalorder %s26, 0
      %p403 = por %p401, %p402
      %p404 = scmp.ne.s32.totalorder %s396, %s398
      %p405 = scmp.eq.s32.totalorder %s31, 1
      %p406 = por %p404, %p405
      %p407 = scmp.ne.s32.totalorder %s398, %s399
      %p408 = scmp.eq.s32.totalorder %s31, 0
      %p409 = por %p407, %p408
      %p410 = scmp.ne.s32.totalorder %s398, %s399
      %p411 = scmp.eq.s32.totalorder %s32, 1
      %p412 = por %p410, %p411
      %p414 = scmp.ne.s32.totalorder %s399, %s413
      %p415 = scmp.eq.s32.totalorder %s32, 0
      %p416 = por %p414, %p415
      %s417 = ssub.s32 %s33, %s45
      %s418 = ssub.s32 %s34, %s41
      %s419 = sor.u32 %s417, %s418
      %p420 = scmp.eq.s32.totalorder %s419, 0
      %s422 = sadd.s32 %s421, 1
      %s423 = scalar_select %p420, %s421, %s422
      %p426 = pneg %p420
      %p427 = scmp.eq.s32.totalorder %s26, 1
      %p428 = por %p426, %p427
      %p429 = scmp.ne.s32.totalorder %s421, %s424
      %p430 = scmp.eq.s32.totalorder %s26, 0
      %p431 = por %p429, %p430
      %p432 = scmp.ne.s32.totalorder %s421, %s424
      %p433 = scmp.eq.s32.totalorder %s31, 1
      %p434 = por %p432, %p433
      %p435 = scmp.ne.s32.totalorder %s424, %s425
      %p436 = scmp.eq.s32.totalorder %s31, 0
      %p437 = por %p435, %p436
      %p438 = scmp.ne.s32.totalorder %s424, %s425
      %p439 = scmp.eq.s32.totalorder %s32, 1
      %p440 = por %p438, %p439
      %p442 = scmp.ne.s32.totalorder %s425, %s441
      %p443 = scmp.eq.s32.totalorder %s32, 0
      %p444 = por %p442, %p443
      %p445 = scmp.le.s32.totalorder 1, %s26
      %p446 = scmp.lt.s32.totalorder %s26, 3
      %p447 = pnand %p445, %p446
      %p448 = pneg %p447
      // Predicated region
      $region9: #{_encoder_pallas.1} parent=5 // pred_check
        _
      $region10: #{_encoder_pallas.1} parent=5 // pred_check_branch
        %450 = sbr.rel (%p447) target = $region12
      $region11: #{_encoder_pallas.1} parent=5 // pred_region
        %s451 = ssub.s32 %s26, 1
        // Predicated region
        $region13: #{_encoder_pallas.1} parent=11 // pred_check
          %p452 = pneg %p115
        $region14: #{_encoder_pallas.1} parent=11 // pred_check_branch
          %454 = sbr.rel (%p452) target = $region16
        $region15: #{_encoder_pallas.1} parent=11 // pred_region
          _
        $region16: #{_encoder_pallas.1} parent=11 // pred_fallthru
          _
        // Predicated region
        $region17: #{_encoder_pallas.1} parent=11 // pred_check
          %p455 = pneg %p136
        $region18: #{_encoder_pallas.1} parent=11 // pred_check_branch
          %457 = sbr.rel (%p455) target = $region20
        $region19: #{_encoder_pallas.1} parent=11 // pred_region
          _
        $region20: #{_encoder_pallas.1} parent=11 // pred_fallthru
          _
        // Predicated region
        $region21: #{_encoder_pallas.1} parent=11 // pred_check
          %p458 = pneg %p157
        $region22: #{_encoder_pallas.1} parent=11 // pred_check_branch
          %460 = sbr.rel (%p458) target = $region24
        $region23: #{_encoder_pallas.1} parent=11 // pred_region
          _
        $region24: #{_encoder_pallas.1} parent=11 // pred_fallthru
          _
        // Predicated region
        $region25: #{_encoder_pallas.1} parent=11 // pred_check
          %p461 = pneg %p178
        $region26: #{_encoder_pallas.1} parent=11 // pred_check_branch
          %463 = sbr.rel (%p461) target = $region28
        $region27: #{_encoder_pallas.1} parent=11 // pred_region
          _
        $region28: #{_encoder_pallas.1} parent=11 // pred_fallthru
          _
        // Predicated region
        $region29: #{_encoder_pallas.1} parent=11 // pred_check
          %p464 = pneg %p199
        $region30: #{_encoder_pallas.1} parent=11 // pred_check_branch
          %466 = sbr.rel (%p464) target = $region32
        $region31: #{_encoder_pallas.1} parent=11 // pred_region
          _
        $region32: #{_encoder_pallas.1} parent=11 // pred_fallthru
          _
        // Predicated region
        $region33: #{_encoder_pallas.1} parent=11 // pred_check
          %p467 = pneg %p220
        $region34: #{_encoder_pallas.1} parent=11 // pred_check_branch
          %469 = sbr.rel (%p467) target = $region36
        $region35: #{_encoder_pallas.1} parent=11 // pred_region
          _
        $region36: #{_encoder_pallas.1} parent=11 // pred_fallthru
          _
        // Predicated region
        $region37: #{_encoder_pallas.1} parent=11 // pred_check
          %p470 = pneg %p241
        $region38: #{_encoder_pallas.1} parent=11 // pred_check_branch
          %472 = sbr.rel (%p470) target = $region40
        $region39: #{_encoder_pallas.1} parent=11 // pred_region
          _
        $region40: #{_encoder_pallas.1} parent=11 // pred_fallthru
          _
        // Predicated region
        $region41: #{_encoder_pallas.1} parent=11 // pred_check
          %p473 = pneg %p262
        $region42: #{_encoder_pallas.1} parent=11 // pred_check_branch
          %475 = sbr.rel (%p473) target = $region44
        $region43: #{_encoder_pallas.1} parent=11 // pred_region
          _
        $region44: #{_encoder_pallas.1} parent=11 // pred_fallthru
          _
        // Predicated region
        $region45: #{_encoder_pallas.1} parent=11 // pred_check
          %p476 = pneg %p283
        $region46: #{_encoder_pallas.1} parent=11 // pred_check_branch
          %478 = sbr.rel (%p476) target = $region48
        $region47: #{_encoder_pallas.1} parent=11 // pred_region
          _
        $region48: #{_encoder_pallas.1} parent=11 // pred_fallthru
          _
        // Predicated region
        $region49: #{_encoder_pallas.1} parent=11 // pred_check
          %p479 = pneg %p304
        $region50: #{_encoder_pallas.1} parent=11 // pred_check_branch
          %481 = sbr.rel (%p479) target = $region52
        $region51: #{_encoder_pallas.1} parent=11 // pred_region
          _
        $region52: #{_encoder_pallas.1} parent=11 // pred_fallthru
          _
        // Predicated region
        $region53: #{_encoder_pallas.1} parent=11 // pred_check
          %p482 = pneg %p325
        $region54: #{_encoder_pallas.1} parent=11 // pred_check_branch
          %484 = sbr.rel (%p482) target = $region56
        $region55: #{_encoder_pallas.1} parent=11 // pred_region
          _
        $region56: #{_encoder_pallas.1} parent=11 // pred_fallthru
          _
        // Predicated region
        $region57: #{_encoder_pallas.1} parent=11 // pred_check
          %p485 = pneg %p346
        $region58: #{_encoder_pallas.1} parent=11 // pred_check_branch
          %487 = sbr.rel (%p485) target = $region60
        $region59: #{_encoder_pallas.1} parent=11 // pred_region
          _
        $region60: #{_encoder_pallas.1} parent=11 // pred_fallthru
          _
        // Predicated region
        $region61: #{_encoder_pallas.1} parent=11 // pred_check
          %p488 = pneg %p367
        $region62: #{_encoder_pallas.1} parent=11 // pred_check_branch
          %490 = sbr.rel (%p488) target = $region64
        $region63: #{_encoder_pallas.1} parent=11 // pred_region
          _
        $region64: #{_encoder_pallas.1} parent=11 // pred_fallthru
          _
        // Predicated region
        $region65: #{_encoder_pallas.1} parent=11 // pred_check
          %p491 = pneg %p388
        $region66: #{_encoder_pallas.1} parent=11 // pred_check_branch
          %493 = sbr.rel (%p491) target = $region68
        $region67: #{_encoder_pallas.1} parent=11 // pred_region
          _
        $region68: #{_encoder_pallas.1} parent=11 // pred_fallthru
          _
        // Predicated region
        $region69: #{_encoder_pallas.1} parent=11 // pred_check
          %p494 = pneg %p409
        $region70: #{_encoder_pallas.1} parent=11 // pred_check_branch
          %496 = sbr.rel (%p494) target = $region72
        $region71: #{_encoder_pallas.1} parent=11 // pred_region
          _
        $region72: #{_encoder_pallas.1} parent=11 // pred_fallthru
          _
      $region12: #{_encoder_pallas.1} parent=5 // pred_fallthru
        _
      %p497 = scmp.lt.s32.totalorder %s26, 2
      // Predicated region
      $region73: #{_encoder_pallas.1} parent=5 // pred_check
        %p498 = pneg %p497
      $region74: #{_encoder_pallas.1} parent=5 // pred_check_branch
        %500 = sbr.rel (%p498) target = $region76
      $region75: #{_encoder_pallas.1} parent=5 // pred_region
        // Predicated region
        $region77: #{_encoder_pallas.1} parent=75 // pred_check
          %p501 = pneg %p60
        $region78: #{_encoder_pallas.1} parent=75 // pred_check_branch
          %503 = sbr.rel (%p501) target = $region80
        $region79: #{_encoder_pallas.1} parent=75 // pred_region
          %s504 = smul.u32 2, %s34
          %p505 = scmp.lt.s32.totalorder %s33, 1
          %s506 = scalar_select %p505, %s33, 1
          %p507 = scmp.lt.s32.totalorder %s504, 1
          %s508 = scalar_select %p507, %s504, 1
          %s509 = smul.addr %s506, 2
          %s510 = sadd.s32 %s508, %s509
          %s511 = smul.addr %s510, 4
          %s512 = scalar_lea.vmem %s0, %s511
          %s513 = smul.u32 2, %s34
        $region80: #{_encoder_pallas.1} parent=75 // pred_fallthru
          _
        // Predicated region
        $region81: #{_encoder_pallas.1} parent=75 // pred_check
          %p514 = pneg %p88
        $region82: #{_encoder_pallas.1} parent=75 // pred_check_branch
          %516 = sbr.rel (%p514) target = $region84
        $region83: #{_encoder_pallas.1} parent=75 // pred_region
          %s517 = smul.u32 2, %s34
          %p518 = scmp.lt.s32.totalorder %s33, 1
          %s519 = scalar_select %p518, %s33, 1
          %p520 = scmp.lt.s32.totalorder %s517, 1
          %s521 = scalar_select %p520, %s517, 1
          %s522 = smul.addr %s519, 2
          %s523 = sadd.s32 %s521, %s522
          %s524 = smul.addr %s523, 4
          %s525 = scalar_lea.vmem %s1, %s524
          %s526 = smul.u32 2, %s34
        $region84: #{_encoder_pallas.1} parent=75 // pred_fallthru
          _
      $region76: #{_encoder_pallas.1} parent=5 // pred_fallthru
        _
      %p527 = scmp.le.s32.totalorder 1, %s26
      %p528 = scmp.lt.s32.totalorder %s26, 3
      %p529 = pnand %p527, %p528
      %p530 = pneg %p529
      // Predicated region
      $region85: #{_encoder_pallas.1} parent=5 // pred_check
        _
      $region86: #{_encoder_pallas.1} parent=5 // pred_check_branch
        %532 = sbr.rel (%p529) target = $region88
      $region87: #{_encoder_pallas.1} parent=5 // pred_region
        %s533 = ssub.s32 %s26, 1
        %s534 = smul.u32 2, %s36
        %p535 = scmp.lt.s32.totalorder %s35, 1
        %s536 = scalar_select %p535, %s35, 1
        %p537 = scmp.lt.s32.totalorder %s534, 1
        %s538 = scalar_select %p537, %s534, 1
        %s539 = smul.addr %s536, 2
        %s540 = sadd.s32 %s538, %s539
        %s541 = smul.addr %s540, 4
        %s542 = scalar_lea.vmem %s0, %s541
        %p543 = pneg %p66
        %p544 = pneg %p63
        %s545 = smul.u32 2, %s36
        %p546 = scmp.lt.s32.totalorder %s35, 1
        %s547 = scalar_select %p546, %s35, 1
        %p548 = scmp.lt.s32.totalorder %s545, 1
        %s549 = scalar_select %p548, %s545, 1
        %s550 = smul.addr %s547, 2
        %s551 = sadd.s32 %s549, %s550
        %s552 = smul.addr %s551, 4
        %s553 = scalar_lea.vmem %s1, %s552
        %p554 = pneg %p94
        %p555 = pneg %p91
        %p556 = pneg %p115
        %p557 = pneg %p112
        %p558 = pneg %p136
        %p559 = pneg %p133
        %p560 = pneg %p157
        %p561 = pneg %p154
        %p562 = pneg %p178
        %p563 = pneg %p175
        %p564 = pneg %p199
        %p565 = pneg %p196
        %p566 = pneg %p220
        %p567 = pneg %p217
        %p568 = pneg %p241
        %p569 = pneg %p238
        %p570 = pneg %p262
        %p571 = pneg %p259
        %p572 = pneg %p283
        %p573 = pneg %p280
        %p574 = pneg %p304
        %p575 = pneg %p301
        %p576 = pneg %p325
        %p577 = pneg %p322
        %p578 = pneg %p346
        %p579 = pneg %p343
        %p580 = pneg %p367
        %p581 = pneg %p364
        %p582 = pneg %p388
        %p583 = pneg %p385
        %p584 = pneg %p409
        %p585 = pneg %p406
        %p586 = pneg %p437
        %p587 = pneg %p434
        %s588 = sand.u32 %s424, 1
        %s589 = scalar_lea.sflag [#allocation3], %s588
        %s590 = sand.u32 %s424, 1
        %s591 = smul.addr %s590, 8
        %s592 = scalar_lea.vmem [#allocation2], %s591
        %s593 = smul.u32 2, %s36
        %p594 = scmp.lt.s32.totalorder %s35, 1
        %s595 = scalar_select %p594, %s35, 1
        %p596 = scmp.lt.s32.totalorder %s593, 1
        %s597 = scalar_select %p596, %s593, 1
        %s598 = smul.addr %s595, 2
        %s599 = sadd.s32 %s597, %s598
        %s600 = smul.addr %s599, 4
        %s601 = scalar_lea.vmem %s0, %s600
        %s602 = smul.u32 2, %s36
        %s603 = smul.u32 2, %s36
        %p604 = scmp.lt.s32.totalorder %s35, 1
        %s605 = scalar_select %p604, %s35, 1
        %p606 = scmp.lt.s32.totalorder %s603, 1
        %s607 = scalar_select %p606, %s603, 1
        %s608 = smul.addr %s605, 2
        %s609 = sadd.s32 %s607, %s608
        %s610 = smul.addr %s609, 4
        %s611 = scalar_lea.vmem %s1, %s610
        %s612 = smul.u32 2, %s36
        %s613 = smul.u32 2, %s36
        %v614 = vld [vmem:[%s601] sm:$0xff]
        %v615 = vld [vmem:[%s611] sm:$0xff]
        %v617 = vcombine.high %v614, %v614
        %v620 = vcombine.high %v615, %v615
        %v622 = vld [vmem:[%s2] sm:$0xf]
        %v623 = vld [vmem:[%s3] sm:$0xf]
        %v624 = vld [vmem:[%s4] sm:$0xf]
        %v625 = vld [vmem:[%s5] sm:$0xf]
        %v626 = vld [vmem:[%s6] sm:$0xf]
        %v627 = vld [vmem:[%s7] sm:$0xf]
        %v628 = vld [vmem:[%s8] sm:$0xf]
        %v629 = vld [vmem:[%s9] sm:$0xf]
        %vm630 = vcmask 1043456
        %v631 = vsel %vm630, %v614, 0.0
        %v632 = vrot.slane %v631, 4
        %v633 = vadd.f32 %v631, %v632
        %v634 = vrot.slane %v633, 2
        %v635 = vadd.f32 %v633, %v634
        %v636 = vrot.slane %v635, 1
        %v637 = vadd.f32 %v635, %v636
        %v638 = vsel %vm630, %v617, 0.0
        %v639 = vrot.slane %v638, 4
        %v640 = vadd.f32 %v638, %v639
        %v641 = vrot.slane %v640, 2
        %v642 = vadd.f32 %v640, %v641
        %v643 = vrot.slane %v642, 1
        %v644 = vadd.f32 %v642, %v643
        %v645 = vsel %vm630, %v615, 0.0
        %v646 = vrot.slane %v645, 4
        %v647 = vadd.f32 %v645, %v646
        %v648 = vrot.slane %v647, 2
        %v649 = vadd.f32 %v647, %v648
        %v650 = vrot.slane %v649, 1
        %v651 = vadd.f32 %v649, %v650
        %v652 = vsel %vm630, %v620, 0.0
        %v653 = vrot.slane %v652, 4
        %v654 = vadd.f32 %v652, %v653
        %v655 = vrot.slane %v654, 2
        %v656 = vadd.f32 %v654, %v655
        %v657 = vrot.slane %v656, 1
        %v658 = vadd.f32 %v656, %v657
        %v659 = vrcp.pop 4.0
        %v660 = vmul.f32 %v637, %v659
        %v661 = vmul.f32 %v644, %v659
        %v662 = vmul.f32 %v651, %v659
        %v663 = vmul.f32 %v658, %v659
        %v664 = vsub.f32 %v614, %v660
        %v665 = vsub.f32 %v617, %v661
        %v666 = vsub.f32 %v615, %v662
        %v667 = vsub.f32 %v620, %v663
        %v668 = vmul.f32 %v664, %v664
        %v669 = vmul.f32 %v665, %v665
        %v670 = vmul.f32 %v666, %v666
        %v671 = vmul.f32 %v667, %v667
        %v672 = vsel %vm630, %v668, 0.0
        %v673 = vrot.slane %v672, 4
        %v674 = vadd.f32 %v672, %v673
        %v675 = vrot.slane %v674, 2
        %v676 = vadd.f32 %v674, %v675
        %v677 = vrot.slane %v676, 1
        %v678 = vadd.f32 %v676, %v677
        %v679 = vsel %vm630, %v669, 0.0
        %v680 = vrot.slane %v679, 4
        %v681 = vadd.f32 %v679, %v680
        %v682 = vrot.slane %v681, 2
        %v683 = vadd.f32 %v681, %v682
        %v684 = vrot.slane %v683, 1
        %v685 = vadd.f32 %v683, %v684
        %v686 = vsel %vm630, %v670, 0.0
        %v687 = vrot.slane %v686, 4
        %v688 = vadd.f32 %v686, %v687
        %v689 = vrot.slane %v688, 2
        %v690 = vadd.f32 %v688, %v689
        %v691 = vrot.slane %v690, 1
        %v692 = vadd.f32 %v690, %v691
        %v693 = vsel %vm630, %v671, 0.0
        %v694 = vrot.slane %v693, 4
        %v695 = vadd.f32 %v693, %v694
        %v696 = vrot.slane %v695, 2
        %v697 = vadd.f32 %v695, %v696
        %v698 = vrot.slane %v697, 1
        %v699 = vadd.f32 %v697, %v698
        %v700 = vmul.f32 %v678, %v659
        %v701 = vmul.f32 %v685, %v659
        %v702 = vmul.f32 %v692, %v659
        %v703 = vmul.f32 %v699, %v659
        %v704 = vadd.f32 %v700, 1e-05
        %v705 = vadd.f32 %v701, 1e-05
        %v706 = vadd.f32 %v702, 1e-05
        %v707 = vadd.f32 %v703, 1e-05
        %v708 = vrsqrt.pop %v704
        %v709 = vrsqrt.pop %v705
        %v710 = vrsqrt.pop %v706
        %v711 = vrsqrt.pop %v707
        %v712 = vmul.f32 %v664, %v708
        %v713 = vmul.f32 %v665, %v709
        %v714 = vmul.f32 %v666, %v710
        %v715 = vmul.f32 %v667, %v711
        %717 = vset.pattern.permute.xlu0 0
        %718 = vperm.xlu0 %717, %v622
        %v719 = vpop.permute.xlu0 %718
        %v721 = vmul.f32 %v712, %v719
        %v722 = vmul.f32 %v713, %v719
        %v723 = vmul.f32 %v714, %v719
        %v724 = vmul.f32 %v715, %v719
        %726 = vset.pattern.permute.xlu0 0
        %727 = vperm.xlu0 %726, %v623
        %v728 = vpop.permute.xlu0 %727
        %v730 = vadd.f32 %v721, %v728
        %v731 = vadd.f32 %v722, %v728
        %v732 = vadd.f32 %v723, %v728
        %v733 = vadd.f32 %v724, %v728
        %735 = vset.pattern.permute.xlu0 0
        %736 = vperm.xlu0 %735, %v624
        %v737 = vpop.permute.xlu0 %736
        %v739 = vlaneseq
        %v740 = vshrl.u32 %v739, 7
        %v741 = vsub.s32 0, %v740
        %v742 = vrot.slane %v730, %v741
        %v743 = vlaneseq
        %v744 = vshrl.u32 %v743, 7
        %v745 = vsub.s32 0, %v744
        %v746 = vrot.slane %v731, %v745
        %v747 = vlaneseq
        %v748 = vshrl.u32 %v747, 7
        %v749 = vsub.s32 0, %v748
        %v750 = vrot.slane %v732, %v749
        %v751 = vlaneseq
        %v752 = vshrl.u32 %v751, 7
        %v753 = vsub.s32 0, %v752
        %v754 = vrot.slane %v733, %v753
        %v755 = vmul.f32 %v737, %v742
        %v756 = vmul.f32 %v737, %v746
        %v757 = vmul.f32 %v737, %v750
        %v758 = vmul.f32 %v737, %v754
        %759 = vset.pattern.permute.xlu0 1
        %760 = vperm.xlu0 %759, %v624
        %v761 = vpop.permute.xlu0 %760
        %v763 = vlaneseq
        %v764 = vshrl.u32 %v763, 7
        %v765 = vsub.s32 1, %v764
        %v766 = vrot.slane %v730, %v765
        %v767 = vlaneseq
        %v768 = vshrl.u32 %v767, 7
        %v769 = vsub.s32 1, %v768
        %v770 = vrot.slane %v731, %v769
        %v771 = vlaneseq
        %v772 = vshrl.u32 %v771, 7
        %v773 = vsub.s32 1, %v772
        %v774 = vrot.slane %v732, %v773
        %v775 = vlaneseq
        %v776 = vshrl.u32 %v775, 7
        %v777 = vsub.s32 1, %v776
        %v778 = vrot.slane %v733, %v777
        %v779 = vmul.f32 %v761, %v766
        %v780 = vmul.f32 %v761, %v770
        %v781 = vmul.f32 %v761, %v774
        %v782 = vmul.f32 %v761, %v778
        %v783 = vadd.f32 %v755, %v779
        %v784 = vadd.f32 %v756, %v780
        %v785 = vadd.f32 %v757, %v781
        %v786 = vadd.f32 %v758, %v782
        %787 = vset.pattern.permute.xlu0 2
        %788 = vperm.xlu0 %787, %v624
        %v789 = vpop.permute.xlu0 %788
        %v791 = vlaneseq
        %v792 = vshrl.u32 %v791, 7
        %v793 = vsub.s32 2, %v792
        %v794 = vrot.slane %v730, %v793
        %v795 = vlaneseq
        %v796 = vshrl.u32 %v795, 7
        %v797 = vsub.s32 2, %v796
        %v798 = vrot.slane %v731, %v797
        %v799 = vlaneseq
        %v800 = vshrl.u32 %v799, 7
        %v801 = vsub.s32 2, %v800
        %v802 = vrot.slane %v732, %v801
        %v803 = vlaneseq
        %v804 = vshrl.u32 %v803, 7
        %v805 = vsub.s32 2, %v804
        %v806 = vrot.slane %v733, %v805
        %v807 = vmul.f32 %v789, %v794
        %v808 = vmul.f32 %v789, %v798
        %v809 = vmul.f32 %v789, %v802
        %v810 = vmul.f32 %v789, %v806
        %v811 = vadd.f32 %v783, %v807
        %v812 = vadd.f32 %v784, %v808
        %v813 = vadd.f32 %v785, %v809
        %v814 = vadd.f32 %v786, %v810
        %815 = vset.pattern.permute.xlu0 3
        %816 = vperm.xlu0 %815, %v624
        %v817 = vpop.permute.xlu0 %816
        %v819 = vlaneseq
        %v820 = vshrl.u32 %v819, 7
        %v821 = vsub.s32 3, %v820
        %v822 = vrot.slane %v730, %v821
        %v823 = vlaneseq
        %v824 = vshrl.u32 %v823, 7
        %v825 = vsub.s32 3, %v824
        %v826 = vrot.slane %v731, %v825
        %v827 = vlaneseq
        %v828 = vshrl.u32 %v827, 7
        %v829 = vsub.s32 3, %v828
        %v830 = vrot.slane %v732, %v829
        %v831 = vlaneseq
        %v832 = vshrl.u32 %v831, 7
        %v833 = vsub.s32 3, %v832
        %v834 = vrot.slane %v733, %v833
        %v835 = vmul.f32 %v817, %v822
        %v836 = vmul.f32 %v817, %v826
        %v837 = vmul.f32 %v817, %v830
        %v838 = vmul.f32 %v817, %v834
        %v839 = vadd.f32 %v811, %v835
        %v840 = vadd.f32 %v812, %v836
        %v841 = vadd.f32 %v813, %v837
        %v842 = vadd.f32 %v814, %v838
        %844 = vset.pattern.permute.xlu0 0
        %845 = vperm.xlu0 %844, %v625
        %v846 = vpop.permute.xlu0 %845
        %v848 = vadd.f32 %v839, %v846
        %v849 = vadd.f32 %v840, %v846
        %v850 = vadd.f32 %v841, %v846
        %v851 = vadd.f32 %v842, %v846
        %853 = vset.pattern.permute.xlu0 0
        %854 = vperm.xlu0 %853, %v626
        %v855 = vpop.permute.xlu0 %854
        %v857 = vmul.f32 %v855, %v742
        %v858 = vmul.f32 %v855, %v746
        %v859 = vmul.f32 %v855, %v750
        %v860 = vmul.f32 %v855, %v754
        %861 = vset.pattern.permute.xlu0 1
        %862 = vperm.xlu0 %861, %v626
        %v863 = vpop.permute.xlu0 %862
        %v865 = vmul.f32 %v863, %v766
        %v866 = vmul.f32 %v863, %v770
        %v867 = vmul.f32 %v863, %v774
        %v868 = vmul.f32 %v863, %v778
        %v869 = vadd.f32 %v857, %v865
        %v870 = vadd.f32 %v858, %v866
        %v871 = vadd.f32 %v859, %v867
        %v872 = vadd.f32 %v860, %v868
        %873 = vset.pattern.permute.xlu0 2
        %874 = vperm.xlu0 %873, %v626
        %v875 = vpop.permute.xlu0 %874
        %v877 = vmul.f32 %v875, %v794
        %v878 = vmul.f32 %v875, %v798
        %v879 = vmul.f32 %v875, %v802
        %v880 = vmul.f32 %v875, %v806
        %v881 = vadd.f32 %v869, %v877
        %v882 = vadd.f32 %v870, %v878
        %v883 = vadd.f32 %v871, %v879
        %v884 = vadd.f32 %v872, %v880
        %885 = vset.pattern.permute.xlu0 3
        %886 = vperm.xlu0 %885, %v626
        %v887 = vpop.permute.xlu0 %886
        %v889 = vmul.f32 %v887, %v822
        %v890 = vmul.f32 %v887, %v826
        %v891 = vmul.f32 %v887, %v830
        %v892 = vmul.f32 %v887, %v834
        %v893 = vadd.f32 %v881, %v889
        %v894 = vadd.f32 %v882, %v890
        %v895 = vadd.f32 %v883, %v891
        %v896 = vadd.f32 %v884, %v892
        %898 = vset.pattern.permute.xlu0 0
        %899 = vperm.xlu0 %898, %v627
        %v900 = vpop.permute.xlu0 %899
        %v902 = vadd.f32 %v893, %v900
        %v903 = vadd.f32 %v894, %v900
        %v904 = vadd.f32 %v895, %v900
        %v905 = vadd.f32 %v896, %v900
        %v906 = vxor.u32 %v848, 2147483648
        %v907 = vxor.u32 %v849, 2147483648
        %v908 = vxor.u32 %v850, 2147483648
        %v909 = vxor.u32 %v851, 2147483648
        %v910 = vmul.f32 %v906, 1.442695
        %v911 = vpow.pop %v910
        %v912 = vmul.f32 %v907, 1.442695
        %v913 = vpow.pop %v912
        %v914 = vmul.f32 %v908, 1.442695
        %v915 = vpow.pop %v914
        %v916 = vmul.f32 %v909, 1.442695
        %v917 = vpow.pop %v916
        %v918 = vadd.f32 %v911, 1.0
        %v919 = vadd.f32 %v913, 1.0
        %v920 = vadd.f32 %v915, 1.0
        %v921 = vadd.f32 %v917, 1.0
        %v922 = vrcp.pop %v918
        %v923 = vmul.f32 1.0, %v922
        %v924 = vrcp.pop %v919
        %v925 = vmul.f32 1.0, %v924
        %v926 = vrcp.pop %v920
        %v927 = vmul.f32 1.0, %v926
        %v928 = vrcp.pop %v921
        %v929 = vmul.f32 1.0, %v928
        %v930 = vmul.f32 %v848, %v923
        %v931 = vmul.f32 %v849, %v925
        %v932 = vmul.f32 %v850, %v927
        %v933 = vmul.f32 %v851, %v929
        %v934 = vxor.u32 %v902, 2147483648
        %v935 = vxor.u32 %v903, 2147483648
        %v936 = vxor.u32 %v904, 2147483648
        %v937 = vxor.u32 %v905, 2147483648
        %v938 = vmul.f32 %v934, 1.442695
        %v939 = vpow.pop %v938
        %v940 = vmul.f32 %v935, 1.442695
        %v941 = vpow.pop %v940
        %v942 = vmul.f32 %v936, 1.442695
        %v943 = vpow.pop %v942
        %v944 = vmul.f32 %v937, 1.442695
        %v945 = vpow.pop %v944
        %v946 = vadd.f32 %v939, 1.0
        %v947 = vadd.f32 %v941, 1.0
        %v948 = vadd.f32 %v943, 1.0
        %v949 = vadd.f32 %v945, 1.0
        %v950 = vrcp.pop %v946
        %v951 = vmul.f32 1.0, %v950
        %v952 = vrcp.pop %v947
        %v953 = vmul.f32 1.0, %v952
        %v954 = vrcp.pop %v948
        %v955 = vmul.f32 1.0, %v954
        %v956 = vrcp.pop %v949
        %v957 = vmul.f32 1.0, %v956
        %v958 = vmul.f32 %v902, %v951
        %v959 = vmul.f32 %v903, %v953
        %v960 = vmul.f32 %v904, %v955
        %v961 = vmul.f32 %v905, %v957
        %v962 = vmul.f32 %v930, %v958
        %v963 = vmul.f32 %v931, %v959
        %v964 = vmul.f32 %v932, %v960
        %v965 = vmul.f32 %v933, %v961
        %967 = vset.pattern.permute.xlu0 0
        %968 = vperm.xlu0 %967, %v628
        %v969 = vpop.permute.xlu0 %968
        %v971 = vlaneseq
        %v972 = vshrl.u32 %v971, 7
        %v973 = vsub.s32 0, %v972
        %v974 = vrot.slane %v962, %v973
        %v975 = vlaneseq
        %v976 = vshrl.u32 %v975, 7
        %v977 = vsub.s32 0, %v976
        %v978 = vrot.slane %v963, %v977
        %v979 = vlaneseq
        %v980 = vshrl.u32 %v979, 7
        %v981 = vsub.s32 0, %v980
        %v982 = vrot.slane %v964, %v981
        %v983 = vlaneseq
        %v984 = vshrl.u32 %v983, 7
        %v985 = vsub.s32 0, %v984
        %v986 = vrot.slane %v965, %v985
        %v987 = vmul.f32 %v969, %v974
        %v988 = vmul.f32 %v969, %v978
        %v989 = vmul.f32 %v969, %v982
        %v990 = vmul.f32 %v969, %v986
        %991 = vset.pattern.permute.xlu0 1
        %992 = vperm.xlu0 %991, %v628
        %v993 = vpop.permute.xlu0 %992
        %v995 = vlaneseq
        %v996 = vshrl.u32 %v995, 7
        %v997 = vsub.s32 1, %v996
        %v998 = vrot.slane %v962, %v997
        %v999 = vlaneseq
        %v1000 = vshrl.u32 %v999, 7
        %v1001 = vsub.s32 1, %v1000
        %v1002 = vrot.slane %v963, %v1001
        %v1003 = vlaneseq
        %v1004 = vshrl.u32 %v1003, 7
        %v1005 = vsub.s32 1, %v1004
        %v1006 = vrot.slane %v964, %v1005
        %v1007 = vlaneseq
        %v1008 = vshrl.u32 %v1007, 7
        %v1009 = vsub.s32 1, %v1008
        %v1010 = vrot.slane %v965, %v1009
        %v1011 = vmul.f32 %v993, %v998
        %v1012 = vmul.f32 %v993, %v1002
        %v1013 = vmul.f32 %v993, %v1006
        %v1014 = vmul.f32 %v993, %v1010
        %v1015 = vadd.f32 %v987, %v1011
        %v1016 = vadd.f32 %v988, %v1012
        %v1017 = vadd.f32 %v989, %v1013
        %v1018 = vadd.f32 %v990, %v1014
        %1019 = vset.pattern.permute.xlu0 2
        %1020 = vperm.xlu0 %1019, %v628
        %v1021 = vpop.permute.xlu0 %1020
        %v1023 = vlaneseq
        %v1024 = vshrl.u32 %v1023, 7
        %v1025 = vsub.s32 2, %v1024
        %v1026 = vrot.slane %v962, %v1025
        %v1027 = vlaneseq
        %v1028 = vshrl.u32 %v1027, 7
        %v1029 = vsub.s32 2, %v1028
        %v1030 = vrot.slane %v963, %v1029
        %v1031 = vlaneseq
        %v1032 = vshrl.u32 %v1031, 7
        %v1033 = vsub.s32 2, %v1032
        %v1034 = vrot.slane %v964, %v1033
        %v1035 = vlaneseq
        %v1036 = vshrl.u32 %v1035, 7
        %v1037 = vsub.s32 2, %v1036
        %v1038 = vrot.slane %v965, %v1037
        %v1039 = vmul.f32 %v1021, %v1026
        %v1040 = vmul.f32 %v1021, %v1030
        %v1041 = vmul.f32 %v1021, %v1034
        %v1042 = vmul.f32 %v1021, %v1038
        %v1043 = vadd.f32 %v1015, %v1039
        %v1044 = vadd.f32 %v1016, %v1040
        %v1045 = vadd.f32 %v1017, %v1041
        %v1046 = vadd.f32 %v1018, %v1042
        %1047 = vset.pattern.permute.xlu0 3
        %1048 = vperm.xlu0 %1047, %v628
        %v1049 = vpop.permute.xlu0 %1048
        %v1051 = vlaneseq
        %v1052 = vshrl.u32 %v1051, 7
        %v1053 = vsub.s32 3, %v1052
        %v1054 = vrot.slane %v962, %v1053
        %v1055 = vlaneseq
        %v1056 = vshrl.u32 %v1055, 7
        %v1057 = vsub.s32 3, %v1056
        %v1058 = vrot.slane %v963, %v1057
        %v1059 = vlaneseq
        %v1060 = vshrl.u32 %v1059, 7
        %v1061 = vsub.s32 3, %v1060
        %v1062 = vrot.slane %v964, %v1061
        %v1063 = vlaneseq
        %v1064 = vshrl.u32 %v1063, 7
        %v1065 = vsub.s32 3, %v1064
        %v1066 = vrot.slane %v965, %v1065
        %v1067 = vmul.f32 %v1049, %v1054
        %v1068 = vmul.f32 %v1049, %v1058
        %v1069 = vmul.f32 %v1049, %v1062
        %v1070 = vmul.f32 %v1049, %v1066
        %v1071 = vadd.f32 %v1043, %v1067
        %v1072 = vadd.f32 %v1044, %v1068
        %v1073 = vadd.f32 %v1045, %v1069
        %v1074 = vadd.f32 %v1046, %v1070
        %1076 = vset.pattern.permute.xlu0 0
        %1077 = vperm.xlu0 %1076, %v629
        %v1078 = vpop.permute.xlu0 %1077
        %v1080 = vadd.f32 %v1071, %v1078
        %v1081 = vadd.f32 %v1072, %v1078
        %v1082 = vadd.f32 %v1073, %v1078
        %v1083 = vadd.f32 %v1074, %v1078
        %v1084 = vadd.f32 %v614, %v1080
        %v1085 = vadd.f32 %v617, %v1081
        %v1086 = vadd.f32 %v615, %v1082
        %v1087 = vadd.f32 %v620, %v1083
        %s1088 = scalar_lea.vmem %s2, 4
        %v1089 = vld [vmem:[%s1088] sm:$0xf]
        %s1090 = scalar_lea.vmem %s3, 4
        %v1091 = vld [vmem:[%s1090] sm:$0xf]
        %s1092 = scalar_lea.vmem %s4, 4
        %v1093 = vld [vmem:[%s1092] sm:$0xf]
        %s1094 = scalar_lea.vmem %s5, 4
        %v1095 = vld [vmem:[%s1094] sm:$0xf]
        %s1096 = scalar_lea.vmem %s6, 4
        %v1097 = vld [vmem:[%s1096] sm:$0xf]
        %s1098 = scalar_lea.vmem %s7, 4
        %v1099 = vld [vmem:[%s1098] sm:$0xf]
        %s1100 = scalar_lea.vmem %s8, 4
        %v1101 = vld [vmem:[%s1100] sm:$0xf]
        %s1102 = scalar_lea.vmem %s9, 4
        %v1103 = vld [vmem:[%s1102] sm:$0xf]
        %v1104 = vsel %vm630, %v1084, 0.0
        %v1105 = vrot.slane %v1104, 4
        %v1106 = vadd.f32 %v1104, %v1105
        %v1107 = vrot.slane %v1106, 2
        %v1108 = vadd.f32 %v1106, %v1107
        %v1109 = vrot.slane %v1108, 1
        %v1110 = vadd.f32 %v1108, %v1109
        %v1111 = vsel %vm630, %v1085, 0.0
        %v1112 = vrot.slane %v1111, 4
        %v1113 = vadd.f32 %v1111, %v1112
        %v1114 = vrot.slane %v1113, 2
        %v1115 = vadd.f32 %v1113, %v1114
        %v1116 = vrot.slane %v1115, 1
        %v1117 = vadd.f32 %v1115, %v1116
        %v1118 = vsel %vm630, %v1086, 0.0
        %v1119 = vrot.slane %v1118, 4
        %v1120 = vadd.f32 %v1118, %v1119
        %v1121 = vrot.slane %v1120, 2
        %v1122 = vadd.f32 %v1120, %v1121
        %v1123 = vrot.slane %v1122, 1
        %v1124 = vadd.f32 %v1122, %v1123
        %v1125 = vsel %vm630, %v1087, 0.0
        %v1126 = vrot.slane %v1125, 4
        %v1127 = vadd.f32 %v1125, %v1126
        %v1128 = vrot.slane %v1127, 2
        %v1129 = vadd.f32 %v1127, %v1128
        %v1130 = vrot.slane %v1129, 1
        %v1131 = vadd.f32 %v1129, %v1130
        %v1132 = vmul.f32 %v1110, %v659
        %v1133 = vmul.f32 %v1117, %v659
        %v1134 = vmul.f32 %v1124, %v659
        %v1135 = vmul.f32 %v1131, %v659
        %v1136 = vsub.f32 %v1084, %v1132
        %v1137 = vsub.f32 %v1085, %v1133
        %v1138 = vsub.f32 %v1086, %v1134
        %v1139 = vsub.f32 %v1087, %v1135
        %v1140 = vmul.f32 %v1136, %v1136
        %v1141 = vmul.f32 %v1137, %v1137
        %v1142 = vmul.f32 %v1138, %v1138
        %v1143 = vmul.f32 %v1139, %v1139
        %v1144 = vsel %vm630, %v1140, 0.0
        %v1145 = vrot.slane %v1144, 4
        %v1146 = vadd.f32 %v1144, %v1145
        %v1147 = vrot.slane %v1146, 2
        %v1148 = vadd.f32 %v1146, %v1147
        %v1149 = vrot.slane %v1148, 1
        %v1150 = vadd.f32 %v1148, %v1149
        %v1151 = vsel %vm630, %v1141, 0.0
        %v1152 = vrot.slane %v1151, 4
        %v1153 = vadd.f32 %v1151, %v1152
        %v1154 = vrot.slane %v1153, 2
        %v1155 = vadd.f32 %v1153, %v1154
        %v1156 = vrot.slane %v1155, 1
        %v1157 = vadd.f32 %v1155, %v1156
        %v1158 = vsel %vm630, %v1142, 0.0
        %v1159 = vrot.slane %v1158, 4
        %v1160 = vadd.f32 %v1158, %v1159
        %v1161 = vrot.slane %v1160, 2
        %v1162 = vadd.f32 %v1160, %v1161
        %v1163 = vrot.slane %v1162, 1
        %v1164 = vadd.f32 %v1162, %v1163
        %v1165 = vsel %vm630, %v1143, 0.0
        %v1166 = vrot.slane %v1165, 4
        %v1167 = vadd.f32 %v1165, %v1166
        %v1168 = vrot.slane %v1167, 2
        %v1169 = vadd.f32 %v1167, %v1168
        %v1170 = vrot.slane %v1169, 1
        %v1171 = vadd.f32 %v1169, %v1170
        %v1172 = vmul.f32 %v1150, %v659
        %v1173 = vmul.f32 %v1157, %v659
        %v1174 = vmul.f32 %v1164, %v659
        %v1175 = vmul.f32 %v1171, %v659
        %v1176 = vadd.f32 %v1172, 1e-05
        %v1177 = vadd.f32 %v1173, 1e-05
        %v1178 = vadd.f32 %v1174, 1e-05
        %v1179 = vadd.f32 %v1175, 1e-05
        %v1180 = vrsqrt.pop %v1176
        %v1181 = vrsqrt.pop %v1177
        %v1182 = vrsqrt.pop %v1178
        %v1183 = vrsqrt.pop %v1179
        %v1184 = vmul.f32 %v1136, %v1180
        %v1185 = vmul.f32 %v1137, %v1181
        %v1186 = vmul.f32 %v1138, %v1182
        %v1187 = vmul.f32 %v1139, %v1183
        %1189 = vset.pattern.permute.xlu0 0
        %1190 = vperm.xlu0 %1189, %v1089
        %v1191 = vpop.permute.xlu0 %1190
        %v1193 = vmul.f32 %v1184, %v1191
        %v1194 = vmul.f32 %v1185, %v1191
        %v1195 = vmul.f32 %v1186, %v1191
        %v1196 = vmul.f32 %v1187, %v1191
        %1198 = vset.pattern.permute.xlu0 0
        %1199 = vperm.xlu0 %1198, %v1091
        %v1200 = vpop.permute.xlu0 %1199
        %v1202 = vadd.f32 %v1193, %v1200
        %v1203 = vadd.f32 %v1194, %v1200
        %v1204 = vadd.f32 %v1195, %v1200
        %v1205 = vadd.f32 %v1196, %v1200
        %1207 = vset.pattern.permute.xlu0 0
        %1208 = vperm.xlu0 %1207, %v1093
        %v1209 = vpop.permute.xlu0 %1208
        %v1211 = vlaneseq
        %v1212 = vshrl.u32 %v1211, 7
        %v1213 = vsub.s32 0, %v1212
        %v1214 = vrot.slane %v1202, %v1213
        %v1215 = vlaneseq
        %v1216 = vshrl.u32 %v1215, 7
        %v1217 = vsub.s32 0, %v1216
        %v1218 = vrot.slane %v1203, %v1217
        %v1219 = vlaneseq
        %v1220 = vshrl.u32 %v1219, 7
        %v1221 = vsub.s32 0, %v1220
        %v1222 = vrot.slane %v1204, %v1221
        %v1223 = vlaneseq
        %v1224 = vshrl.u32 %v1223, 7
        %v1225 = vsub.s32 0, %v1224
        %v1226 = vrot.slane %v1205, %v1225
        %v1227 = vmul.f32 %v1209, %v1214
        %v1228 = vmul.f32 %v1209, %v1218
        %v1229 = vmul.f32 %v1209, %v1222
        %v1230 = vmul.f32 %v1209, %v1226
        %1231 = vset.pattern.permute.xlu0 1
        %1232 = vperm.xlu0 %1231, %v1093
        %v1233 = vpop.permute.xlu0 %1232
        %v1235 = vlaneseq
        %v1236 = vshrl.u32 %v1235, 7
        %v1237 = vsub.s32 1, %v1236
        %v1238 = vrot.slane %v1202, %v1237
        %v1239 = vlaneseq
        %v1240 = vshrl.u32 %v1239, 7
        %v1241 = vsub.s32 1, %v1240
        %v1242 = vrot.slane %v1203, %v1241
        %v1243 = vlaneseq
        %v1244 = vshrl.u32 %v1243, 7
        %v1245 = vsub.s32 1, %v1244
        %v1246 = vrot.slane %v1204, %v1245
        %v1247 = vlaneseq
        %v1248 = vshrl.u32 %v1247, 7
        %v1249 = vsub.s32 1, %v1248
        %v1250 = vrot.slane %v1205, %v1249
        %v1251 = vmul.f32 %v1233, %v1238
        %v1252 = vmul.f32 %v1233, %v1242
        %v1253 = vmul.f32 %v1233, %v1246
        %v1254 = vmul.f32 %v1233, %v1250
        %v1255 = vadd.f32 %v1227, %v1251
        %v1256 = vadd.f32 %v1228, %v1252
        %v1257 = vadd.f32 %v1229, %v1253
        %v1258 = vadd.f32 %v1230, %v1254
        %1259 = vset.pattern.permute.xlu0 2
        %1260 = vperm.xlu0 %1259, %v1093
        %v1261 = vpop.permute.xlu0 %1260
        %v1263 = vlaneseq
        %v1264 = vshrl.u32 %v1263, 7
        %v1265 = vsub.s32 2, %v1264
        %v1266 = vrot.slane %v1202, %v1265
        %v1267 = vlaneseq
        %v1268 = vshrl.u32 %v1267, 7
        %v1269 = vsub.s32 2, %v1268
        %v1270 = vrot.slane %v1203, %v1269
        %v1271 = vlaneseq
        %v1272 = vshrl.u32 %v1271, 7
        %v1273 = vsub.s32 2, %v1272
        %v1274 = vrot.slane %v1204, %v1273
        %v1275 = vlaneseq
        %v1276 = vshrl.u32 %v1275, 7
        %v1277 = vsub.s32 2, %v1276
        %v1278 = vrot.slane %v1205, %v1277
        %v1279 = vmul.f32 %v1261, %v1266
        %v1280 = vmul.f32 %v1261, %v1270
        %v1281 = vmul.f32 %v1261, %v1274
        %v1282 = vmul.f32 %v1261, %v1278
        %v1283 = vadd.f32 %v1255, %v1279
        %v1284 = vadd.f32 %v1256, %v1280
        %v1285 = vadd.f32 %v1257, %v1281
        %v1286 = vadd.f32 %v1258, %v1282
        %1287 = vset.pattern.permute.xlu0 3
        %1288 = vperm.xlu0 %1287, %v1093
        %v1289 = vpop.permute.xlu0 %1288
        %v1291 = vlaneseq
        %v1292 = vshrl.u32 %v1291, 7
        %v1293 = vsub.s32 3, %v1292
        %v1294 = vrot.slane %v1202, %v1293
        %v1295 = vlaneseq
        %v1296 = vshrl.u32 %v1295, 7
        %v1297 = vsub.s32 3, %v1296
        %v1298 = vrot.slane %v1203, %v1297
        %v1299 = vlaneseq
        %v1300 = vshrl.u32 %v1299, 7
        %v1301 = vsub.s32 3, %v1300
        %v1302 = vrot.slane %v1204, %v1301
        %v1303 = vlaneseq
        %v1304 = vshrl.u32 %v1303, 7
        %v1305 = vsub.s32 3, %v1304
        %v1306 = vrot.slane %v1205, %v1305
        %v1307 = vmul.f32 %v1289, %v1294
        %v1308 = vmul.f32 %v1289, %v1298
        %v1309 = vmul.f32 %v1289, %v1302
        %v1310 = vmul.f32 %v1289, %v1306
        %v1311 = vadd.f32 %v1283, %v1307
        %v1312 = vadd.f32 %v1284, %v1308
        %v1313 = vadd.f32 %v1285, %v1309
        %v1314 = vadd.f32 %v1286, %v1310
        %1316 = vset.pattern.permute.xlu0 0
        %1317 = vperm.xlu0 %1316, %v1095
        %v1318 = vpop.permute.xlu0 %1317
        %v1320 = vadd.f32 %v1311, %v1318
        %v1321 = vadd.f32 %v1312, %v1318
        %v1322 = vadd.f32 %v1313, %v1318
        %v1323 = vadd.f32 %v1314, %v1318
        %1325 = vset.pattern.permute.xlu0 0
        %1326 = vperm.xlu0 %1325, %v1097
        %v1327 = vpop.permute.xlu0 %1326
        %v1329 = vmul.f32 %v1327, %v1214
        %v1330 = vmul.f32 %v1327, %v1218
        %v1331 = vmul.f32 %v1327, %v1222
        %v1332 = vmul.f32 %v1327, %v1226
        %1333 = vset.pattern.permute.xlu0 1
        %1334 = vperm.xlu0 %1333, %v1097
        %v1335 = vpop.permute.xlu0 %1334
        %v1337 = vmul.f32 %v1335, %v1238
        %v1338 = vmul.f32 %v1335, %v1242
        %v1339 = vmul.f32 %v1335, %v1246
        %v1340 = vmul.f32 %v1335, %v1250
        %v1341 = vadd.f32 %v1329, %v1337
        %v1342 = vadd.f32 %v1330, %v1338
        %v1343 = vadd.f32 %v1331, %v1339
        %v1344 = vadd.f32 %v1332, %v1340
        %1345 = vset.pattern.permute.xlu0 2
        %1346 = vperm.xlu0 %1345, %v1097
        %v1347 = vpop.permute.xlu0 %1346
        %v1349 = vmul.f32 %v1347, %v1266
        %v1350 = vmul.f32 %v1347, %v1270
        %v1351 = vmul.f32 %v1347, %v1274
        %v1352 = vmul.f32 %v1347, %v1278
        %v1353 = vadd.f32 %v1341, %v1349
        %v1354 = vadd.f32 %v1342, %v1350
        %v1355 = vadd.f32 %v1343, %v1351
        %v1356 = vadd.f32 %v1344, %v1352
        %1357 = vset.pattern.permute.xlu0 3
        %1358 = vperm.xlu0 %1357, %v1097
        %v1359 = vpop.permute.xlu0 %1358
        %v1361 = vmul.f32 %v1359, %v1294
        %v1362 = vmul.f32 %v1359, %v1298
        %v1363 = vmul.f32 %v1359, %v1302
        %v1364 = vmul.f32 %v1359, %v1306
        %v1365 = vadd.f32 %v1353, %v1361
        %v1366 = vadd.f32 %v1354, %v1362
        %v1367 = vadd.f32 %v1355, %v1363
        %v1368 = vadd.f32 %v1356, %v1364
        %1370 = vset.pattern.permute.xlu0 0
        %1371 = vperm.xlu0 %1370, %v1099
        %v1372 = vpop.permute.xlu0 %1371
        %v1374 = vadd.f32 %v1365, %v1372
        %v1375 = vadd.f32 %v1366, %v1372
        %v1376 = vadd.f32 %v1367, %v1372
        %v1377 = vadd.f32 %v1368, %v1372
        %v1378 = vxor.u32 %v1320, 2147483648
        %v1379 = vxor.u32 %v1321, 2147483648
        %v1380 = vxor.u32 %v1322, 2147483648
        %v1381 = vxor.u32 %v1323, 2147483648
        %v1382 = vmul.f32 %v1378, 1.442695
        %v1383 = vpow.pop %v1382
        %v1384 = vmul.f32 %v1379, 1.442695
        %v1385 = vpow.pop %v1384
        %v1386 = vmul.f32 %v1380, 1.442695
        %v1387 = vpow.pop %v1386
        %v1388 = vmul.f32 %v1381, 1.442695
        %v1389 = vpow.pop %v1388
        %v1390 = vadd.f32 %v1383, 1.0
        %v1391 = vadd.f32 %v1385, 1.0
        %v1392 = vadd.f32 %v1387, 1.0
        %v1393 = vadd.f32 %v1389, 1.0
        %v1394 = vrcp.pop %v1390
        %v1395 = vmul.f32 1.0, %v1394
        %v1396 = vrcp.pop %v1391
        %v1397 = vmul.f32 1.0, %v1396
        %v1398 = vrcp.pop %v1392
        %v1399 = vmul.f32 1.0, %v1398
        %v1400 = vrcp.pop %v1393
        %v1401 = vmul.f32 1.0, %v1400
        %v1402 = vmul.f32 %v1320, %v1395
        %v1403 = vmul.f32 %v1321, %v1397
        %v1404 = vmul.f32 %v1322, %v1399
        %v1405 = vmul.f32 %v1323, %v1401
        %v1406 = vxor.u32 %v1374, 2147483648
        %v1407 = vxor.u32 %v1375, 2147483648
        %v1408 = vxor.u32 %v1376, 2147483648
        %v1409 = vxor.u32 %v1377, 2147483648
        %v1410 = vmul.f32 %v1406, 1.442695
        %v1411 = vpow.pop %v1410
        %v1412 = vmul.f32 %v1407, 1.442695
        %v1413 = vpow.pop %v1412
        %v1414 = vmul.f32 %v1408, 1.442695
        %v1415 = vpow.pop %v1414
        %v1416 = vmul.f32 %v1409, 1.442695
        %v1417 = vpow.pop %v1416
        %v1418 = vadd.f32 %v1411, 1.0
        %v1419 = vadd.f32 %v1413, 1.0
        %v1420 = vadd.f32 %v1415, 1.0
        %v1421 = vadd.f32 %v1417, 1.0
        %v1422 = vrcp.pop %v1418
        %v1423 = vmul.f32 1.0, %v1422
        %v1424 = vrcp.pop %v1419
        %v1425 = vmul.f32 1.0, %v1424
        %v1426 = vrcp.pop %v1420
        %v1427 = vmul.f32 1.0, %v1426
        %v1428 = vrcp.pop %v1421
        %v1429 = vmul.f32 1.0, %v1428
        %v1430 = vmul.f32 %v1374, %v1423
        %v1431 = vmul.f32 %v1375, %v1425
        %v1432 = vmul.f32 %v1376, %v1427
        %v1433 = vmul.f32 %v1377, %v1429
        %v1434 = vmul.f32 %v1402, %v1430
        %v1435 = vmul.f32 %v1403, %v1431
        %v1436 = vmul.f32 %v1404, %v1432
        %v1437 = vmul.f32 %v1405, %v1433
        %1439 = vset.pattern.permute.xlu0 0
        %1440 = vperm.xlu0 %1439, %v1101
        %v1441 = vpop.permute.xlu0 %1440
        %v1443 = vlaneseq
        %v1444 = vshrl.u32 %v1443, 7
        %v1445 = vsub.s32 0, %v1444
        %v1446 = vrot.slane %v1434, %v1445
        %v1447 = vlaneseq
        %v1448 = vshrl.u32 %v1447, 7
        %v1449 = vsub.s32 0, %v1448
        %v1450 = vrot.slane %v1435, %v1449
        %v1451 = vlaneseq
        %v1452 = vshrl.u32 %v1451, 7
        %v1453 = vsub.s32 0, %v1452
        %v1454 = vrot.slane %v1436, %v1453
        %v1455 = vlaneseq
        %v1456 = vshrl.u32 %v1455, 7
        %v1457 = vsub.s32 0, %v1456
        %v1458 = vrot.slane %v1437, %v1457
        %v1459 = vmul.f32 %v1441, %v1446
        %v1460 = vmul.f32 %v1441, %v1450
        %v1461 = vmul.f32 %v1441, %v1454
        %v1462 = vmul.f32 %v1441, %v1458
        %1463 = vset.pattern.permute.xlu0 1
        %1464 = vperm.xlu0 %1463, %v1101
        %v1465 = vpop.permute.xlu0 %1464
        %v1467 = vlaneseq
        %v1468 = vshrl.u32 %v1467, 7
        %v1469 = vsub.s32 1, %v1468
        %v1470 = vrot.slane %v1434, %v1469
        %v1471 = vlaneseq
        %v1472 = vshrl.u32 %v1471, 7
        %v1473 = vsub.s32 1, %v1472
        %v1474 = vrot.slane %v1435, %v1473
        %v1475 = vlaneseq
        %v1476 = vshrl.u32 %v1475, 7
        %v1477 = vsub.s32 1, %v1476
        %v1478 = vrot.slane %v1436, %v1477
        %v1479 = vlaneseq
        %v1480 = vshrl.u32 %v1479, 7
        %v1481 = vsub.s32 1, %v1480
        %v1482 = vrot.slane %v1437, %v1481
        %v1483 = vmul.f32 %v1465, %v1470
        %v1484 = vmul.f32 %v1465, %v1474
        %v1485 = vmul.f32 %v1465, %v1478
        %v1486 = vmul.f32 %v1465, %v1482
        %v1487 = vadd.f32 %v1459, %v1483
        %v1488 = vadd.f32 %v1460, %v1484
        %v1489 = vadd.f32 %v1461, %v1485
        %v1490 = vadd.f32 %v1462, %v1486
        %1491 = vset.pattern.permute.xlu0 2
        %1492 = vperm.xlu0 %1491, %v1101
        %v1493 = vpop.permute.xlu0 %1492
        %v1495 = vlaneseq
        %v1496 = vshrl.u32 %v1495, 7
        %v1497 = vsub.s32 2, %v1496
        %v1498 = vrot.slane %v1434, %v1497
        %v1499 = vlaneseq
        %v1500 = vshrl.u32 %v1499, 7
        %v1501 = vsub.s32 2, %v1500
        %v1502 = vrot.slane %v1435, %v1501
        %v1503 = vlaneseq
        %v1504 = vshrl.u32 %v1503, 7
        %v1505 = vsub.s32 2, %v1504
        %v1506 = vrot.slane %v1436, %v1505
        %v1507 = vlaneseq
        %v1508 = vshrl.u32 %v1507, 7
        %v1509 = vsub.s32 2, %v1508
        %v1510 = vrot.slane %v1437, %v1509
        %v1511 = vmul.f32 %v1493, %v1498
        %v1512 = vmul.f32 %v1493, %v1502
        %v1513 = vmul.f32 %v1493, %v1506
        %v1514 = vmul.f32 %v1493, %v1510
        %v1515 = vadd.f32 %v1487, %v1511
        %v1516 = vadd.f32 %v1488, %v1512
        %v1517 = vadd.f32 %v1489, %v1513
        %v1518 = vadd.f32 %v1490, %v1514
        %1519 = vset.pattern.permute.xlu0 3
        %1520 = vperm.xlu0 %1519, %v1101
        %v1521 = vpop.permute.xlu0 %1520
        %v1523 = vlaneseq
        %v1524 = vshrl.u32 %v1523, 7
        %v1525 = vsub.s32 3, %v1524
        %v1526 = vrot.slane %v1434, %v1525
        %v1527 = vlaneseq
        %v1528 = vshrl.u32 %v1527, 7
        %v1529 = vsub.s32 3, %v1528
        %v1530 = vrot.slane %v1435, %v1529
        %v1531 = vlaneseq
        %v1532 = vshrl.u32 %v1531, 7
        %v1533 = vsub.s32 3, %v1532
        %v1534 = vrot.slane %v1436, %v1533
        %v1535 = vlaneseq
        %v1536 = vshrl.u32 %v1535, 7
        %v1537 = vsub.s32 3, %v1536
        %v1538 = vrot.slane %v1437, %v1537
        %v1539 = vmul.f32 %v1521, %v1526
        %v1540 = vmul.f32 %v1521, %v1530
        %v1541 = vmul.f32 %v1521, %v1534
        %v1542 = vmul.f32 %v1521, %v1538
        %v1543 = vadd.f32 %v1515, %v1539
        %v1544 = vadd.f32 %v1516, %v1540
        %v1545 = vadd.f32 %v1517, %v1541
        %v1546 = vadd.f32 %v1518, %v1542
        %1548 = vset.pattern.permute.xlu0 0
        %1549 = vperm.xlu0 %1548, %v1103
        %v1550 = vpop.permute.xlu0 %1549
        %v1552 = vadd.f32 %v1543, %v1550
        %v1553 = vadd.f32 %v1544, %v1550
        %v1554 = vadd.f32 %v1545, %v1550
        %v1555 = vadd.f32 %v1546, %v1550
        %v1556 = vadd.f32 %v1084, %v1552
        %v1557 = vadd.f32 %v1085, %v1553
        %v1558 = vadd.f32 %v1086, %v1554
        %v1559 = vadd.f32 %v1087, %v1555
        %v1560 = vsub.f32 %v1556, %v1558
        %v1561 = vsub.f32 %v1557, %v1559
        %v1562 = vand.u32 2147483647, %v1560
        %v1563 = vand.u32 2147483647, %v1561
        %v1564 = vadd.f32 %v1556, %v1558
        %v1565 = vadd.f32 %v1557, %v1559
        %v1566 = vsel %vm630, %v1562, 0.0
        %v1567 = vrot.slane %v1566, 4
        %v1568 = vadd.f32 %v1566, %v1567
        %v1569 = vrot.slane %v1568, 2
        %v1570 = vadd.f32 %v1568, %v1569
        %v1571 = vrot.slane %v1570, 1
        %v1572 = vadd.f32 %v1570, %v1571
        %v1573 = vsel %vm630, %v1563, 0.0
        %v1574 = vrot.slane %v1573, 4
        %v1575 = vadd.f32 %v1573, %v1574
        %v1576 = vrot.slane %v1575, 2
        %v1577 = vadd.f32 %v1575, %v1576
        %v1578 = vrot.slane %v1577, 1
        %v1579 = vadd.f32 %v1577, %v1578
        %v1580 = vsel %vm630, %v1564, 0.0
        %v1581 = vrot.slane %v1580, 4
        %v1582 = vadd.f32 %v1580, %v1581
        %v1583 = vrot.slane %v1582, 2
        %v1584 = vadd.f32 %v1582, %v1583
        %v1585 = vrot.slane %v1584, 1
        %v1586 = vadd.f32 %v1584, %v1585
        %v1587 = vsel %vm630, %v1565, 0.0
        %v1588 = vrot.slane %v1587, 4
        %v1589 = vadd.f32 %v1587, %v1588
        %v1590 = vrot.slane %v1589, 2
        %v1591 = vadd.f32 %v1589, %v1590
        %v1592 = vrot.slane %v1591, 1
        %v1593 = vadd.f32 %v1591, %v1592
        %v1594 = vadd.f32 %v1572, %v1586
        %v1595 = vadd.f32 %v1579, %v1593
        %v1596 = vrcp.pop 8.0
        %v1597 = vmul.f32 %v1594, %v1596
        %v1598 = vmul.f32 %v1595, %v1596
        %v1599 = vsub.f32 %v1562, %v1597
        %v1600 = vsub.f32 %v1563, %v1598
        %v1601 = vmul.f32 %v1599, %v1599
        %v1602 = vmul.f32 %v1600, %v1600
        %v1603 = vsel %vm630, %v1601, 0.0
        %v1604 = vrot.slane %v1603, 4
        %v1605 = vadd.f32 %v1603, %v1604
        %v1606 = vrot.slane %v1605, 2
        %v1607 = vadd.f32 %v1605, %v1606
        %v1608 = vrot.slane %v1607, 1
        %v1609 = vadd.f32 %v1607, %v1608
        %v1610 = vsel %vm630, %v1602, 0.0
        %v1611 = vrot.slane %v1610, 4
        %v1612 = vadd.f32 %v1610, %v1611
        %v1613 = vrot.slane %v1612, 2
        %v1614 = vadd.f32 %v1612, %v1613
        %v1615 = vrot.slane %v1614, 1
        %v1616 = vadd.f32 %v1614, %v1615
        %v1617 = vsub.f32 %v1564, %v1597
        %v1618 = vsub.f32 %v1565, %v1598
        %v1619 = vmul.f32 %v1617, %v1617
        %v1620 = vmul.f32 %v1618, %v1618
        %v1621 = vsel %vm630, %v1619, 0.0
        %v1622 = vrot.slane %v1621, 4
        %v1623 = vadd.f32 %v1621, %v1622
        %v1624 = vrot.slane %v1623, 2
        %v1625 = vadd.f32 %v1623, %v1624
        %v1626 = vrot.slane %v1625, 1
        %v1627 = vadd.f32 %v1625, %v1626
        %v1628 = vsel %vm630, %v1620, 0.0
        %v1629 = vrot.slane %v1628, 4
        %v1630 = vadd.f32 %v1628, %v1629
        %v1631 = vrot.slane %v1630, 2
        %v1632 = vadd.f32 %v1630, %v1631
        %v1633 = vrot.slane %v1632, 1
        %v1634 = vadd.f32 %v1632, %v1633
        %v1635 = vadd.f32 %v1609, %v1627
        %v1636 = vadd.f32 %v1616, %v1634
        %v1637 = vmul.f32 %v1635, %v1596
        %v1638 = vmul.f32 %v1636, %v1596
        %v1639 = vadd.f32 %v1637, 1e-05
        %v1640 = vadd.f32 %v1638, 1e-05
        %v1641 = vrsqrt.pop %v1639
        %v1642 = vrsqrt.pop %v1640
        %v1643 = vmul.f32 %v1599, %v1641
        %v1644 = vmul.f32 %v1600, %v1642
        %v1645 = vld [vmem:[%s10] sm:$0xf]
        %1647 = vset.pattern.permute.xlu0 0
        %1648 = vperm.xlu0 %1647, %v1645
        %v1649 = vpop.permute.xlu0 %1648
        %v1651 = vmul.f32 %v1643, %v1649
        %v1652 = vmul.f32 %v1644, %v1649
        %v1653 = vld [vmem:[%s12] sm:$0xf]
        %1655 = vset.pattern.permute.xlu0 0
        %1656 = vperm.xlu0 %1655, %v1653
        %v1657 = vpop.permute.xlu0 %1656
        %v1659 = vadd.f32 %v1651, %v1657
        %v1660 = vadd.f32 %v1652, %v1657
        %v1661 = vmul.f32 %v1617, %v1641
        %v1662 = vmul.f32 %v1618, %v1642
        %v1663 = vld [vmem:[%s11] sm:$0xf]
        %1665 = vset.pattern.permute.xlu0 0
        %1666 = vperm.xlu0 %1665, %v1663
        %v1667 = vpop.permute.xlu0 %1666
        %v1669 = vmul.f32 %v1661, %v1667
        %v1670 = vmul.f32 %v1662, %v1667
        %v1671 = vld [vmem:[%s13] sm:$0xf]
        %1673 = vset.pattern.permute.xlu0 0
        %1674 = vperm.xlu0 %1673, %v1671
        %v1675 = vpop.permute.xlu0 %1674
        %v1677 = vadd.f32 %v1669, %v1675
        %v1678 = vadd.f32 %v1670, %v1675
        %v1679 = vld [vmem:[%s14] sm:$0xf]
        %1681 = vset.pattern.permute.xlu0 0
        %1682 = vperm.xlu0 %1681, %v1679
        %v1683 = vpop.permute.xlu0 %1682
        %v1685 = vlaneseq
        %v1686 = vshrl.u32 %v1685, 7
        %v1687 = vsub.s32 0, %v1686
        %v1688 = vrot.slane %v1659, %v1687
        %v1689 = vlaneseq
        %v1690 = vshrl.u32 %v1689, 7
        %v1691 = vsub.s32 0, %v1690
        %v1692 = vrot.slane %v1660, %v1691
        %v1693 = vmul.f32 %v1683, %v1688
        %v1694 = vmul.f32 %v1683, %v1692
        %1695 = vset.pattern.permute.xlu0 1
        %1696 = vperm.xlu0 %1695, %v1679
        %v1697 = vpop.permute.xlu0 %1696
        %v1699 = vlaneseq
        %v1700 = vshrl.u32 %v1699, 7
        %v1701 = vsub.s32 1, %v1700
        %v1702 = vrot.slane %v1659, %v1701
        %v1703 = vlaneseq
        %v1704 = vshrl.u32 %v1703, 7
        %v1705 = vsub.s32 1, %v1704
        %v1706 = vrot.slane %v1660, %v1705
        %v1707 = vmul.f32 %v1697, %v1702
        %v1708 = vmul.f32 %v1697, %v1706
        %v1709 = vadd.f32 %v1693, %v1707
        %v1710 = vadd.f32 %v1694, %v1708
        %1711 = vset.pattern.permute.xlu0 2
        %1712 = vperm.xlu0 %1711, %v1679
        %v1713 = vpop.permute.xlu0 %1712
        %v1715 = vlaneseq
        %v1716 = vshrl.u32 %v1715, 7
        %v1717 = vsub.s32 2, %v1716
        %v1718 = vrot.slane %v1659, %v1717
        %v1719 = vlaneseq
        %v1720 = vshrl.u32 %v1719, 7
        %v1721 = vsub.s32 2, %v1720
        %v1722 = vrot.slane %v1660, %v1721
        %v1723 = vmul.f32 %v1713, %v1718
        %v1724 = vmul.f32 %v1713, %v1722
        %v1725 = vadd.f32 %v1709, %v1723
        %v1726 = vadd.f32 %v1710, %v1724
        %1727 = vset.pattern.permute.xlu0 3
        %1728 = vperm.xlu0 %1727, %v1679
        %v1729 = vpop.permute.xlu0 %1728
        %v1731 = vlaneseq
        %v1732 = vshrl.u32 %v1731, 7
        %v1733 = vsub.s32 3, %v1732
        %v1734 = vrot.slane %v1659, %v1733
        %v1735 = vlaneseq
        %v1736 = vshrl.u32 %v1735, 7
        %v1737 = vsub.s32 3, %v1736
        %v1738 = vrot.slane %v1660, %v1737
        %v1739 = vmul.f32 %v1729, %v1734
        %v1740 = vmul.f32 %v1729, %v1738
        %v1741 = vadd.f32 %v1725, %v1739
        %v1742 = vadd.f32 %v1726, %v1740
        %v1743 = vld [vmem:[%s15] sm:$0xf]
        %1745 = vset.pattern.permute.xlu0 0
        %1746 = vperm.xlu0 %1745, %v1743
        %v1747 = vpop.permute.xlu0 %1746
        %v1749 = vlaneseq
        %v1750 = vshrl.u32 %v1749, 7
        %v1751 = vsub.s32 0, %v1750
        %v1752 = vrot.slane %v1677, %v1751
        %v1753 = vlaneseq
        %v1754 = vshrl.u32 %v1753, 7
        %v1755 = vsub.s32 0, %v1754
        %v1756 = vrot.slane %v1678, %v1755
        %v1757 = vmul.f32 %v1747, %v1752
        %v1758 = vmul.f32 %v1747, %v1756
        %1759 = vset.pattern.permute.xlu0 1
        %1760 = vperm.xlu0 %1759, %v1743
        %v1761 = vpop.permute.xlu0 %1760
        %v1763 = vlaneseq
        %v1764 = vshrl.u32 %v1763, 7
        %v1765 = vsub.s32 1, %v1764
        %v1766 = vrot.slane %v1677, %v1765
        %v1767 = vlaneseq
        %v1768 = vshrl.u32 %v1767, 7
        %v1769 = vsub.s32 1, %v1768
        %v1770 = vrot.slane %v1678, %v1769
        %v1771 = vmul.f32 %v1761, %v1766
        %v1772 = vmul.f32 %v1761, %v1770
        %v1773 = vadd.f32 %v1757, %v1771
        %v1774 = vadd.f32 %v1758, %v1772
        %1775 = vset.pattern.permute.xlu0 2
        %1776 = vperm.xlu0 %1775, %v1743
        %v1777 = vpop.permute.xlu0 %1776
        %v1779 = vlaneseq
        %v1780 = vshrl.u32 %v1779, 7
        %v1781 = vsub.s32 2, %v1780
        %v1782 = vrot.slane %v1677, %v1781
        %v1783 = vlaneseq
        %v1784 = vshrl.u32 %v1783, 7
        %v1785 = vsub.s32 2, %v1784
        %v1786 = vrot.slane %v1678, %v1785
        %v1787 = vmul.f32 %v1777, %v1782
        %v1788 = vmul.f32 %v1777, %v1786
        %v1789 = vadd.f32 %v1773, %v1787
        %v1790 = vadd.f32 %v1774, %v1788
        %1791 = vset.pattern.permute.xlu0 3
        %1792 = vperm.xlu0 %1791, %v1743
        %v1793 = vpop.permute.xlu0 %1792
        %v1795 = vlaneseq
        %v1796 = vshrl.u32 %v1795, 7
        %v1797 = vsub.s32 3, %v1796
        %v1798 = vrot.slane %v1677, %v1797
        %v1799 = vlaneseq
        %v1800 = vshrl.u32 %v1799, 7
        %v1801 = vsub.s32 3, %v1800
        %v1802 = vrot.slane %v1678, %v1801
        %v1803 = vmul.f32 %v1793, %v1798
        %v1804 = vmul.f32 %v1793, %v1802
        %v1805 = vadd.f32 %v1789, %v1803
        %v1806 = vadd.f32 %v1790, %v1804
        %v1807 = vadd.f32 %v1741, %v1805
        %v1808 = vadd.f32 %v1742, %v1806
        %v1809 = vld [vmem:[%s16] sm:$0xf]
        %1811 = vset.pattern.permute.xlu0 0
        %1812 = vperm.xlu0 %1811, %v1809
        %v1813 = vpop.permute.xlu0 %1812
        %v1815 = vadd.f32 %v1807, %v1813
        %v1816 = vadd.f32 %v1808, %v1813
        %v1819 = vcombine.low %v1815, %v1816
        %1821 = vst [vmem:[%s592] sm:$0xff] %v1819
        %s1822 = sand.u32 %s424, 1
        %s1823 = scalar_lea.sflag [#allocation3], %s1822
        %s1824 = sand.u32 %s424, 1
        %s1825 = smul.addr %s1824, 8
        %s1826 = scalar_lea.vmem [#allocation2], %s1825
        // Predicated region
        $region89: #{_encoder_pallas.1} parent=87 // pred_check
          %p1827 = pneg %p434
        $region90: #{_encoder_pallas.1} parent=87 // pred_check_branch
          %1829 = sbr.rel (%p1827) target = $region92
        $region91: #{_encoder_pallas.1} parent=87 // pred_region
          %s1830 = smul.u32 2, %s36
          %s1832 = ssub.s32 128, 128
          %1833 = vsyncadd %s1823, %s1832
          %s1834 = smul.addr %s35, 2
          %s1835 = sadd.s32 %s1830, %s1834
          %s1836 = smul.addr %s1835, 64
          %s1837 = scalar_lea.hbm %s17, %s1836
          %s1839 = sshll.u32 %s1826, 4
          %s1840 = int_to_ptr.vmem [resolvable:$true] %s1839
          %1842 = dma.vmem_to_hbm [thread:$0]  %s1840, 128, %s1837, %s1823
        $region92: #{_encoder_pallas.1} parent=87 // pred_fallthru
          _
      $region88: #{_encoder_pallas.1} parent=5 // pred_fallthru
        _
      %p1843 = scmp.le.s32.totalorder 2, %s26
      // Predicated region
      $region93: #{_encoder_pallas.1} parent=5 // pred_check
        %p1844 = pneg %p1843
      $region94: #{_encoder_pallas.1} parent=5 // pred_check_branch
        %1846 = sbr.rel (%p1844) target = $region96
      $region95: #{_encoder_pallas.1} parent=5 // pred_region
        %s1847 = ssub.s32 %s26, 2
        // Predicated region
        $region97: #{_encoder_pallas.1} parent=95 // pred_check
          %p1848 = pneg %p440
        $region98: #{_encoder_pallas.1} parent=95 // pred_check_branch
          %1850 = sbr.rel (%p1848) target = $region100
        $region99: #{_encoder_pallas.1} parent=95 // pred_region
          %s1851 = sand.u32 %s425, 1
          %s1852 = scalar_lea.sflag [#allocation3], %s1851
          %s1853 = sand.u32 %s425, 1
          %s1854 = smul.addr %s1853, 8
          %s1855 = scalar_lea.vmem [#allocation2], %s1854
          %1856 = dma.done %s1852, 128
        $region100: #{_encoder_pallas.1} parent=95 // pred_fallthru
          _
      $region96: #{_encoder_pallas.1} parent=5 // pred_fallthru
        _
    $region6: #{_encoder_pallas.1} parent=1 // loop_footer
      %s30 = sadd.s32 1, %s26
    $region7: #{_encoder_pallas.1} parent=1 // loop_footer_branch
      %25 = sbr.rel target = $region3
    $region8: #{_encoder_pallas.1} parent=1 // loop_exit
      _
    %1857 = vsyncpa [#allocation3], 1
    %s1858 = scalar_lea.sflag [#allocation3], 1
    %1859 = vsyncpa %s1858, 1

// kernel: _encoder_pallas.1
$region0: #{_encoder_pallas.1}
  #allocation0 [shape = 'u32[]', space=smem, size = 0x4, offset = 0x4, fixed_abs, tag = 'smem constant byte address 0x4 - core index']
  #allocation1 [shape = 'u32[144,128]{1,0:T(1,128)}', space=vmem, size = 0x12000, scoped, tag = 'internal scratch']
  %s0 = inlined_call_operand.vmem [shape: f32[2,4,256], index: 0, kind: input, shape index: {}]
  %s1 = inlined_call_operand.vmem [shape: f32[2,4,256], index: 1, kind: input, shape index: {}]
  %s2 = inlined_call_operand.vmem [shape: f32[2,4,1], index: 2, kind: input, shape index: {}]
  %s3 = inlined_call_operand.vmem [shape: f32[2,4,1], index: 3, kind: input, shape index: {}]
  %s4 = inlined_call_operand.vmem [shape: f32[2,4,4], index: 4, kind: input, shape index: {}]
  %s5 = inlined_call_operand.vmem [shape: f32[2,4,1], index: 5, kind: input, shape index: {}]
  %s6 = inlined_call_operand.vmem [shape: f32[2,4,4], index: 6, kind: input, shape index: {}]
  %s7 = inlined_call_operand.vmem [shape: f32[2,4,1], index: 7, kind: input, shape index: {}]
  %s8 = inlined_call_operand.vmem [shape: f32[2,4,4], index: 8, kind: input, shape index: {}]
  %s9 = inlined_call_operand.vmem [shape: f32[2,4,1], index: 9, kind: input, shape index: {}]
  %s10 = inlined_call_operand.vmem [shape: f32[4,1], index: 10, kind: input, shape index: {}]
  %s11 = inlined_call_operand.vmem [shape: f32[4,1], index: 11, kind: input, shape index: {}]
  %s12 = inlined_call_operand.vmem [shape: f32[4,1], index: 12, kind: input, shape index: {}]
  %s13 = inlined_call_operand.vmem [shape: f32[4,1], index: 13, kind: input, shape index: {}]
  %s14 = inlined_call_operand.vmem [shape: f32[4,4], index: 14, kind: input, shape index: {}]
  %s15 = inlined_call_operand.vmem [shape: f32[4,4], index: 15, kind: input, shape index: {}]
  %s16 = inlined_call_operand.vmem [shape: f32[4,1], index: 16, kind: input, shape index: {}]
  %s17 = inlined_call_operand.hbm [shape: f32[2,4,256], index: 17, kind: output, shape index: {}]
  %s18 = sld [smem:[#allocation0]]
  $region101: #{_encoder_pallas.1} parent=0
    _
  %s20 = ssub.s32 1, %s18
  %s21 = scalar_select 0, %s20, %s18
  $region1: #{_encoder_pallas.1} parent=0
    #allocation2 [shape = 'u8[8192]{0}', space=vmem, size = 0x2000, scoped, tag = 'output window, operand 0']
    #allocation3 [shape = 's32[2]{0}', space=sflag, size = 0x8, scoped, tag = 'scoped memory for _encoder_pallas.1']
    %22 = vsyncpa [#allocation3], 0
    %s23 = scalar_lea.sflag [#allocation3], 1
    %24 = vsyncpa %s23, 0
    loop: start=0, step=1, limit=4
    $region2: #{_encoder_pallas.1} parent=1 // loop_pre_header
      _
    $region3: #{_encoder_pallas.1} parent=1 // loop_header
      %s26 = sphi 0, %s30
      %p27 = scmp.ge.s32.totalorder %s26, 4
      %s33 = sphi 0, %s45
      %s34 = sphi 0, %s41
      %s35 = sphi 0, %s33
      %s36 = sphi 0, %s34
      %s37 = sphi 0, %s35
      %s38 = sphi 0, %s36
      %s50 = sphi 0, %s52
      %s53 = sphi 0, %s50
      %s54 = sphi 0, %s53
      %s70 = sphi 0, %s54
      %s78 = sphi 0, %s80
      %s81 = sphi 0, %s78
      %s82 = sphi 0, %s81
      %s98 = sphi 0, %s82
      %s102 = sphi 0, %s102
      %s104 = sphi 0, %s102
      %s105 = sphi 0, %s104
      %s119 = sphi 0, %s105
      %s123 = sphi 0, %s123
      %s125 = sphi 0, %s123
      %s126 = sphi 0, %s125
      %s140 = sphi 0, %s126
      %s144 = sphi 0, %s144
      %s146 = sphi 0, %s144
      %s147 = sphi 0, %s146
      %s161 = sphi 0, %s147
      %s165 = sphi 0, %s165
      %s167 = sphi 0, %s165
      %s168 = sphi 0, %s167
      %s182 = sphi 0, %s168
      %s186 = sphi 0, %s186
      %s188 = sphi 0, %s186
      %s189 = sphi 0, %s188
      %s203 = sphi 0, %s189
      %s207 = sphi 0, %s207
      %s209 = sphi 0, %s207
      %s210 = sphi 0, %s209
      %s224 = sphi 0, %s210
      %s228 = sphi 0, %s228
      %s230 = sphi 0, %s228
      %s231 = sphi 0, %s230
      %s245 = sphi 0, %s231
      %s249 = sphi 0, %s249
      %s251 = sphi 0, %s249
      %s252 = sphi 0, %s251
      %s266 = sphi 0, %s252
      %s270 = sphi 0, %s270
      %s272 = sphi 0, %s270
      %s273 = sphi 0, %s272
      %s287 = sphi 0, %s273
      %s291 = sphi 0, %s291
      %s293 = sphi 0, %s291
      %s294 = sphi 0, %s293
      %s308 = sphi 0, %s294
      %s312 = sphi 0, %s312
      %s314 = sphi 0, %s312
      %s315 = sphi 0, %s314
      %s329 = sphi 0, %s315
      %s333 = sphi 0, %s333
      %s335 = sphi 0, %s333
      %s336 = sphi 0, %s335
      %s350 = sphi 0, %s336
      %s354 = sphi 0, %s354
      %s356 = sphi 0, %s354
      %s357 = sphi 0, %s356
      %s371 = sphi 0, %s357
      %s375 = sphi 0, %s375
      %s377 = sphi 0, %s375
      %s378 = sphi 0, %s377
      %s392 = sphi 0, %s378
      %s396 = sphi 0, %s396
      %s398 = sphi 0, %s396
      %s399 = sphi 0, %s398
      %s413 = sphi 0, %s399
      %s421 = sphi 0, %s423
      %s424 = sphi 0, %s421
      %s425 = sphi 0, %s424
      %s441 = sphi 0, %s425
    $region4: #{_encoder_pallas.1} parent=1 // loop_header_branch
      %29 = sbr.rel (%p27) target = $region8
    $region5: #{_encoder_pallas.1} parent=1 // loop_body
      %s31 = ssub.s32 %s26, 1
      %s32 = ssub.s32 %s26, 2
      %s39 = sadd.s32 1, %s34
      %p40 = scmp.ge.s32.totalorder %s39, 1
      %s41 = scalar_select %p40, 0, %s39
      %s42 = sadd.s32 1, %s33
      %s43 = scalar_select %p40, %s42, %s33
      %p44 = scmp.ge.s32.totalorder %s43, 2
      %s45 = scalar_select %p44, 0, %s43
      %s46 = ssub.s32 %s33, %s45
      %s47 = ssub.s32 %s34, %s41
      %s48 = sor.u32 %s46, %s47
      %p49 = scmp.eq.s32.totalorder %s48, 0
      %s51 = sadd.s32 %s50, 1
      %s52 = scalar_select %p49, %s50, %s51
      %p55 = pneg %p49
      %p56 = scmp.eq.s32.totalorder %s26, 1
      %p57 = por %p55, %p56
      %p58 = scmp.ne.s32.totalorder %s50, %s53
      %p59 = scmp.eq.s32.totalorder %s26, 0
      %p60 = por %p58, %p59
      %p61 = scmp.ne.s32.totalorder %s50, %s53
      %p62 = scmp.eq.s32.totalorder %s31, 1
      %p63 = por %p61, %p62
      %p64 = scmp.ne.s32.totalorder %s53, %s54
      %p65 = scmp.eq.s32.totalorder %s31, 0
      %p66 = por %p64, %p65
      %p67 = scmp.ne.s32.totalorder %s53, %s54
      %p68 = scmp.eq.s32.totalorder %s32, 1
      %p69 = por %p67, %p68
      %p71 = scmp.ne.s32.totalorder %s54, %s70
      %p72 = scmp.eq.s32.totalorder %s32, 0
      %p73 = por %p71, %p72
      %s74 = ssub.s32 %s33, %s45
      %s75 = ssub.s32 %s34, %s41
      %s76 = sor.u32 %s74, %s75
      %p77 = scmp.eq.s32.totalorder %s76, 0
      %s79 = sadd.s32 %s78, 1
      %s80 = scalar_select %p77, %s78, %s79
      %p83 = pneg %p77
      %p84 = scmp.eq.s32.totalorder %s26, 1
      %p85 = por %p83, %p84
      %p86 = scmp.ne.s32.totalorder %s78, %s81
      %p87 = scmp.eq.s32.totalorder %s26, 0
      %p88 = por %p86, %p87
      %p89 = scmp.ne.s32.totalorder %s78, %s81
      %p90 = scmp.eq.s32.totalorder %s31, 1
      %p91 = por %p89, %p90
      %p92 = scmp.ne.s32.totalorder %s81, %s82
      %p93 = scmp.eq.s32.totalorder %s31, 0
      %p94 = por %p92, %p93
      %p95 = scmp.ne.s32.totalorder %s81, %s82
      %p96 = scmp.eq.s32.totalorder %s32, 1
      %p97 = por %p95, %p96
      %p99 = scmp.ne.s32.totalorder %s82, %s98
      %p100 = scmp.eq.s32.totalorder %s32, 0
      %p101 = por %p99, %p100
      %s103 = sadd.s32 %s102, 1
      %p106 = scmp.eq.s32.totalorder %s26, 1
      %p107 = scmp.ne.s32.totalorder %s102, %s104
      %p108 = scmp.eq.s32.totalorder %s26, 0
      %p109 = por %p107, %p108
      %p110 = scmp.ne.s32.totalorder %s102, %s104
      %p111 = scmp.eq.s32.totalorder %s31, 1
      %p112 = por %p110, %p111
      %p113 = scmp.ne.s32.totalorder %s104, %s105
      %p114 = scmp.eq.s32.totalorder %s31, 0
      %p115 = por %p113, %p114
      %p116 = scmp.ne.s32.totalorder %s104, %s105
      %p117 = scmp.eq.s32.totalorder %s32, 1
      %p118 = por %p116, %p117
      %p120 = scmp.ne.s32.totalorder %s105, %s119
      %p121 = scmp.eq.s32.totalorder %s32, 0
      %p122 = por %p120, %p121
      %s124 = sadd.s32 %s123, 1
      %p127 = scmp.eq.s32.totalorder %s26, 1
      %p128 = scmp.ne.s32.totalorder %s123, %s125
      %p129 = scmp.eq.s32.totalorder %s26, 0
      %p130 = por %p128, %p129
      %p131 = scmp.ne.s32.totalorder %s123, %s125
      %p132 = scmp.eq.s32.totalorder %s31, 1
      %p133 = por %p131, %p132
      %p134 = scmp.ne.s32.totalorder %s125, %s126
      %p135 = scmp.eq.s32.totalorder %s31, 0
      %p136 = por %p134, %p135
      %p137 = scmp.ne.s32.totalorder %s125, %s126
      %p138 = scmp.eq.s32.totalorder %s32, 1
      %p139 = por %p137, %p138
      %p141 = scmp.ne.s32.totalorder %s126, %s140
      %p142 = scmp.eq.s32.totalorder %s32, 0
      %p143 = por %p141, %p142
      %s145 = sadd.s32 %s144, 1
      %p148 = scmp.eq.s32.totalorder %s26, 1
      %p149 = scmp.ne.s32.totalorder %s144, %s146
      %p150 = scmp.eq.s32.totalorder %s26, 0
      %p151 = por %p149, %p150
      %p152 = scmp.ne.s32.totalorder %s144, %s146
      %p153 = scmp.eq.s32.totalorder %s31, 1
      %p154 = por %p152, %p153
      %p155 = scmp.ne.s32.totalorder %s146, %s147
      %p156 = scmp.eq.s32.totalorder %s31, 0
      %p157 = por %p155, %p156
      %p158 = scmp.ne.s32.totalorder %s146, %s147
      %p159 = scmp.eq.s32.totalorder %s32, 1
      %p160 = por %p158, %p159
      %p162 = scmp.ne.s32.totalorder %s147, %s161
      %p163 = scmp.eq.s32.totalorder %s32, 0
      %p164 = por %p162, %p163
      %s166 = sadd.s32 %s165, 1
      %p169 = scmp.eq.s32.totalorder %s26, 1
      %p170 = scmp.ne.s32.totalorder %s165, %s167
      %p171 = scmp.eq.s32.totalorder %s26, 0
      %p172 = por %p170, %p171
      %p173 = scmp.ne.s32.totalorder %s165, %s167
      %p174 = scmp.eq.s32.totalorder %s31, 1
      %p175 = por %p173, %p174
      %p176 = scmp.ne.s32.totalorder %s167, %s168
      %p177 = scmp.eq.s32.totalorder %s31, 0
      %p178 = por %p176, %p177
      %p179 = scmp.ne.s32.totalorder %s167, %s168
      %p180 = scmp.eq.s32.totalorder %s32, 1
      %p181 = por %p179, %p180
      %p183 = scmp.ne.s32.totalorder %s168, %s182
      %p184 = scmp.eq.s32.totalorder %s32, 0
      %p185 = por %p183, %p184
      %s187 = sadd.s32 %s186, 1
      %p190 = scmp.eq.s32.totalorder %s26, 1
      %p191 = scmp.ne.s32.totalorder %s186, %s188
      %p192 = scmp.eq.s32.totalorder %s26, 0
      %p193 = por %p191, %p192
      %p194 = scmp.ne.s32.totalorder %s186, %s188
      %p195 = scmp.eq.s32.totalorder %s31, 1
      %p196 = por %p194, %p195
      %p197 = scmp.ne.s32.totalorder %s188, %s189
      %p198 = scmp.eq.s32.totalorder %s31, 0
      %p199 = por %p197, %p198
      %p200 = scmp.ne.s32.totalorder %s188, %s189
      %p201 = scmp.eq.s32.totalorder %s32, 1
      %p202 = por %p200, %p201
      %p204 = scmp.ne.s32.totalorder %s189, %s203
      %p205 = scmp.eq.s32.totalorder %s32, 0
      %p206 = por %p204, %p205
      %s208 = sadd.s32 %s207, 1
      %p211 = scmp.eq.s32.totalorder %s26, 1
      %p212 = scmp.ne.s32.totalorder %s207, %s209
      %p213 = scmp.eq.s32.totalorder %s26, 0
      %p214 = por %p212, %p213
      %p215 = scmp.ne.s32.totalorder %s207, %s209
      %p216 = scmp.eq.s32.totalorder %s31, 1
      %p217 = por %p215, %p216
      %p218 = scmp.ne.s32.totalorder %s209, %s210
      %p219 = scmp.eq.s32.totalorder %s31, 0
      %p220 = por %p218, %p219
      %p221 = scmp.ne.s32.totalorder %s209, %s210
      %p222 = scmp.eq.s32.totalorder %s32, 1
      %p223 = por %p221, %p222
      %p225 = scmp.ne.s32.totalorder %s210, %s224
      %p226 = scmp.eq.s32.totalorder %s32, 0
      %p227 = por %p225, %p226
      %s229 = sadd.s32 %s228, 1
      %p232 = scmp.eq.s32.totalorder %s26, 1
      %p233 = scmp.ne.s32.totalorder %s228, %s230
      %p234 = scmp.eq.s32.totalorder %s26, 0
      %p235 = por %p233, %p234
      %p236 = scmp.ne.s32.totalorder %s228, %s230
      %p237 = scmp.eq.s32.totalorder %s31, 1
      %p238 = por %p236, %p237
      %p239 = scmp.ne.s32.totalorder %s230, %s231
      %p240 = scmp.eq.s32.totalorder %s31, 0
      %p241 = por %p239, %p240
      %p242 = scmp.ne.s32.totalorder %s230, %s231
      %p243 = scmp.eq.s32.totalorder %s32, 1
      %p244 = por %p242, %p243
      %p246 = scmp.ne.s32.totalorder %s231, %s245
      %p247 = scmp.eq.s32.totalorder %s32, 0
      %p248 = por %p246, %p247
      %s250 = sadd.s32 %s249, 1
      %p253 = scmp.eq.s32.totalorder %s26, 1
      %p254 = scmp.ne.s32.totalorder %s249, %s251
      %p255 = scmp.eq.s32.totalorder %s26, 0
      %p256 = por %p254, %p255
      %p257 = scmp.ne.s32.totalorder %s249, %s251
      %p258 = scmp.eq.s32.totalorder %s31, 1
      %p259 = por %p257, %p258
      %p260 = scmp.ne.s32.totalorder %s251, %s252
      %p261 = scmp.eq.s32.totalorder %s31, 0
      %p262 = por %p260, %p261
      %p263 = scmp.ne.s32.totalorder %s251, %s252
      %p264 = scmp.eq.s32.totalorder %s32, 1
      %p265 = por %p263, %p264
      %p267 = scmp.ne.s32.totalorder %s252, %s266
      %p268 = scmp.eq.s32.totalorder %s32, 0
      %p269 = por %p267, %p268
      %s271 = sadd.s32 %s270, 1
      %p274 = scmp.eq.s32.totalorder %s26, 1
      %p275 = scmp.ne.s32.totalorder %s270, %s272
      %p276 = scmp.eq.s32.totalorder %s26, 0
      %p277 = por %p275, %p276
      %p278 = scmp.ne.s32.totalorder %s270, %s272
      %p279 = scmp.eq.s32.totalorder %s31, 1
      %p280 = por %p278, %p279
      %p281 = scmp.ne.s32.totalorder %s272, %s273
      %p282 = scmp.eq.s32.totalorder %s31, 0
      %p283 = por %p281, %p282
      %p284 = scmp.ne.s32.totalorder %s272, %s273
      %p285 = scmp.eq.s32.totalorder %s32, 1
      %p286 = por %p284, %p285
      %p288 = scmp.ne.s32.totalorder %s273, %s287
      %p289 = scmp.eq.s32.totalorder %s32, 0
      %p290 = por %p288, %p289
      %s292 = sadd.s32 %s291, 1
      %p295 = scmp.eq.s32.totalorder %s26, 1
      %p296 = scmp.ne.s32.totalorder %s291, %s293
      %p297 = scmp.eq.s32.totalorder %s26, 0
      %p298 = por %p296, %p297
      %p299 = scmp.ne.s32.totalorder %s291, %s293
      %p300 = scmp.eq.s32.totalorder %s31, 1
      %p301 = por %p299, %p300
      %p302 = scmp.ne.s32.totalorder %s293, %s294
      %p303 = scmp.eq.s32.totalorder %s31, 0
      %p304 = por %p302, %p303
      %p305 = scmp.ne.s32.totalorder %s293, %s294
      %p306 = scmp.eq.s32.totalorder %s32, 1
      %p307 = por %p305, %p306
      %p309 = scmp.ne.s32.totalorder %s294, %s308
      %p310 = scmp.eq.s32.totalorder %s32, 0
      %p311 = por %p309, %p310
      %s313 = sadd.s32 %s312, 1
      %p316 = scmp.eq.s32.totalorder %s26, 1
      %p317 = scmp.ne.s32.totalorder %s312, %s314
      %p318 = scmp.eq.s32.totalorder %s26, 0
      %p319 = por %p317, %p318
      %p320 = scmp.ne.s32.totalorder %s312, %s314
      %p321 = scmp.eq.s32.totalorder %s31, 1
      %p322 = por %p320, %p321
      %p323 = scmp.ne.s32.totalorder %s314, %s315
      %p324 = scmp.eq.s32.totalorder %s31, 0
      %p325 = por %p323, %p324
      %p326 = scmp.ne.s32.totalorder %s314, %s315
      %p327 = scmp.eq.s32.totalorder %s32, 1
      %p328 = por %p326, %p327
      %p330 = scmp.ne.s32.totalorder %s315, %s329
      %p331 = scmp.eq.s32.totalorder %s32, 0
      %p332 = por %p330, %p331
      %s334 = sadd.s32 %s333, 1
      %p337 = scmp.eq.s32.totalorder %s26, 1
      %p338 = scmp.ne.s32.totalorder %s333, %s335
      %p339 = scmp.eq.s32.totalorder %s26, 0
      %p340 = por %p338, %p339
      %p341 = scmp.ne.s32.totalorder %s333, %s335
      %p342 = scmp.eq.s32.totalorder %s31, 1
      %p343 = por %p341, %p342
      %p344 = scmp.ne.s32.totalorder %s335, %s336
      %p345 = scmp.eq.s32.totalorder %s31, 0
      %p346 = por %p344, %p345
      %p347 = scmp.ne.s32.totalorder %s335, %s336
      %p348 = scmp.eq.s32.totalorder %s32, 1
      %p349 = por %p347, %p348
      %p351 = scmp.ne.s32.totalorder %s336, %s350
      %p352 = scmp.eq.s32.totalorder %s32, 0
      %p353 = por %p351, %p352
      %s355 = sadd.s32 %s354, 1
      %p358 = scmp.eq.s32.totalorder %s26, 1
      %p359 = scmp.ne.s32.totalorder %s354, %s356
      %p360 = scmp.eq.s32.totalorder %s26, 0
      %p361 = por %p359, %p360
      %p362 = scmp.ne.s32.totalorder %s354, %s356
      %p363 = scmp.eq.s32.totalorder %s31, 1
      %p364 = por %p362, %p363
      %p365 = scmp.ne.s32.totalorder %s356, %s357
      %p366 = scmp.eq.s32.totalorder %s31, 0
      %p367 = por %p365, %p366
      %p368 = scmp.ne.s32.totalorder %s356, %s357
      %p369 = scmp.eq.s32.totalorder %s32, 1
      %p370 = por %p368, %p369
      %p372 = scmp.ne.s32.totalorder %s357, %s371
      %p373 = scmp.eq.s32.totalorder %s32, 0
      %p374 = por %p372, %p373
      %s376 = sadd.s32 %s375, 1
      %p379 = scmp.eq.s32.totalorder %s26, 1
      %p380 = scmp.ne.s32.totalorder %s375, %s377
      %p381 = scmp.eq.s32.totalorder %s26, 0
      %p382 = por %p380, %p381
      %p383 = scmp.ne.s32.totalorder %s375, %s377
      %p384 = scmp.eq.s32.totalorder %s31, 1
      %p385 = por %p383, %p384
      %p386 = scmp.ne.s32.totalorder %s377, %s378
      %p387 = scmp.eq.s32.totalorder %s31, 0
      %p388 = por %p386, %p387
      %p389 = scmp.ne.s32.totalorder %s377, %s378
      %p390 = scmp.eq.s32.totalorder %s32, 1
      %p391 = por %p389, %p390
      %p393 = scmp.ne.s32.totalorder %s378, %s392
      %p394 = scmp.eq.s32.totalorder %s32, 0
      %p395 = por %p393, %p394
      %s397 = sadd.s32 %s396, 1
      %p400 = scmp.eq.s32.totalorder %s26, 1
      %p401 = scmp.ne.s32.totalorder %s396, %s398
      %p402 = scmp.eq.s32.totalorder %s26, 0
      %p403 = por %p401, %p402
      %p404 = scmp.ne.s32.totalorder %s396, %s398
      %p405 = scmp.eq.s32.totalorder %s31, 1
      %p406 = por %p404, %p405
      %p407 = scmp.ne.s32.totalorder %s398, %s399
      %p408 = scmp.eq.s32.totalorder %s31, 0
      %p409 = por %p407, %p408
      %p410 = scmp.ne.s32.totalorder %s398, %s399
      %p411 = scmp.eq.s32.totalorder %s32, 1
      %p412 = por %p410, %p411
      %p414 = scmp.ne.s32.totalorder %s399, %s413
      %p415 = scmp.eq.s32.totalorder %s32, 0
      %p416 = por %p414, %p415
      %s417 = ssub.s32 %s33, %s45
      %s418 = ssub.s32 %s34, %s41
      %s419 = sor.u32 %s417, %s418
      %p420 = scmp.eq.s32.totalorder %s419, 0
      %s422 = sadd.s32 %s421, 1
      %s423 = scalar_select %p420, %s421, %s422
      %p426 = pneg %p420
      %p427 = scmp.eq.s32.totalorder %s26, 1
      %p428 = por %p426, %p427
      %p429 = scmp.ne.s32.totalorder %s421, %s424
      %p430 = scmp.eq.s32.totalorder %s26, 0
      %p431 = por %p429, %p430
      %p432 = scmp.ne.s32.totalorder %s421, %s424
      %p433 = scmp.eq.s32.totalorder %s31, 1
      %p434 = por %p432, %p433
      %p435 = scmp.ne.s32.totalorder %s424, %s425
      %p436 = scmp.eq.s32.totalorder %s31, 0
      %p437 = por %p435, %p436
      %p438 = scmp.ne.s32.totalorder %s424, %s425
      %p439 = scmp.eq.s32.totalorder %s32, 1
      %p440 = por %p438, %p439
      %p442 = scmp.ne.s32.totalorder %s425, %s441
      %p443 = scmp.eq.s32.totalorder %s32, 0
      %p444 = por %p442, %p443
      %p445 = scmp.le.s32.totalorder 1, %s26
      %p446 = scmp.lt.s32.totalorder %s26, 3
      %p447 = pnand %p445, %p446
      %p448 = pneg %p447
      // Predicated region
      $region9: #{_encoder_pallas.1} parent=5 // pred_check
        _
      $region10: #{_encoder_pallas.1} parent=5 // pred_check_branch
        %450 = sbr.rel (%p447) target = $region12
      $region11: #{_encoder_pallas.1} parent=5 // pred_region
        %s451 = ssub.s32 %s26, 1
        // Predicated region
        $region13: #{_encoder_pallas.1} parent=11 // pred_check
          %p452 = pneg %p115
        $region14: #{_encoder_pallas.1} parent=11 // pred_check_branch
          %454 = sbr.rel (%p452) target = $region16
        $region15: #{_encoder_pallas.1} parent=11 // pred_region
          _
        $region16: #{_encoder_pallas.1} parent=11 // pred_fallthru
          _
        // Predicated region
        $region17: #{_encoder_pallas.1} parent=11 // pred_check
          %p455 = pneg %p136
        $region18: #{_encoder_pallas.1} parent=11 // pred_check_branch
          %457 = sbr.rel (%p455) target = $region20
        $region19: #{_encoder_pallas.1} parent=11 // pred_region
          _
        $region20: #{_encoder_pallas.1} parent=11 // pred_fallthru
          _
        // Predicated region
        $region21: #{_encoder_pallas.1} parent=11 // pred_check
          %p458 = pneg %p157
        $region22: #{_encoder_pallas.1} parent=11 // pred_check_branch
          %460 = sbr.rel (%p458) target = $region24
        $region23: #{_encoder_pallas.1} parent=11 // pred_region
          _
        $region24: #{_encoder_pallas.1} parent=11 // pred_fallthru
          _
        // Predicated region
        $region25: #{_encoder_pallas.1} parent=11 // pred_check
          %p461 = pneg %p178
        $region26: #{_encoder_pallas.1} parent=11 // pred_check_branch
          %463 = sbr.rel (%p461) target = $region28
        $region27: #{_encoder_pallas.1} parent=11 // pred_region
          _
        $region28: #{_encoder_pallas.1} parent=11 // pred_fallthru
          _
        // Predicated region
        $region29: #{_encoder_pallas.1} parent=11 // pred_check
          %p464 = pneg %p199
        $region30: #{_encoder_pallas.1} parent=11 // pred_check_branch
          %466 = sbr.rel (%p464) target = $region32
        $region31: #{_encoder_pallas.1} parent=11 // pred_region
          _
        $region32: #{_encoder_pallas.1} parent=11 // pred_fallthru
          _
        // Predicated region
        $region33: #{_encoder_pallas.1} parent=11 // pred_check
          %p467 = pneg %p220
        $region34: #{_encoder_pallas.1} parent=11 // pred_check_branch
          %469 = sbr.rel (%p467) target = $region36
        $region35: #{_encoder_pallas.1} parent=11 // pred_region
          _
        $region36: #{_encoder_pallas.1} parent=11 // pred_fallthru
          _
        // Predicated region
        $region37: #{_encoder_pallas.1} parent=11 // pred_check
          %p470 = pneg %p241
        $region38: #{_encoder_pallas.1} parent=11 // pred_check_branch
          %472 = sbr.rel (%p470) target = $region40
        $region39: #{_encoder_pallas.1} parent=11 // pred_region
          _
        $region40: #{_encoder_pallas.1} parent=11 // pred_fallthru
          _
        // Predicated region
        $region41: #{_encoder_pallas.1} parent=11 // pred_check
          %p473 = pneg %p262
        $region42: #{_encoder_pallas.1} parent=11 // pred_check_branch
          %475 = sbr.rel (%p473) target = $region44
        $region43: #{_encoder_pallas.1} parent=11 // pred_region
          _
        $region44: #{_encoder_pallas.1} parent=11 // pred_fallthru
          _
        // Predicated region
        $region45: #{_encoder_pallas.1} parent=11 // pred_check
          %p476 = pneg %p283
        $region46: #{_encoder_pallas.1} parent=11 // pred_check_branch
          %478 = sbr.rel (%p476) target = $region48
        $region47: #{_encoder_pallas.1} parent=11 // pred_region
          _
        $region48: #{_encoder_pallas.1} parent=11 // pred_fallthru
          _
        // Predicated region
        $region49: #{_encoder_pallas.1} parent=11 // pred_check
          %p479 = pneg %p304
        $region50: #{_encoder_pallas.1} parent=11 // pred_check_branch
          %481 = sbr.rel (%p479) target = $region52
        $region51: #{_encoder_pallas.1} parent=11 // pred_region
          _
        $region52: #{_encoder_pallas.1} parent=11 // pred_fallthru
          _
        // Predicated region
        $region53: #{_encoder_pallas.1} parent=11 // pred_check
          %p482 = pneg %p325
        $region54: #{_encoder_pallas.1} parent=11 // pred_check_branch
          %484 = sbr.rel (%p482) target = $region56
        $region55: #{_encoder_pallas.1} parent=11 // pred_region
          _
        $region56: #{_encoder_pallas.1} parent=11 // pred_fallthru
          _
        // Predicated region
        $region57: #{_encoder_pallas.1} parent=11 // pred_check
          %p485 = pneg %p346
        $region58: #{_encoder_pallas.1} parent=11 // pred_check_branch
          %487 = sbr.rel (%p485) target = $region60
        $region59: #{_encoder_pallas.1} parent=11 // pred_region
          _
        $region60: #{_encoder_pallas.1} parent=11 // pred_fallthru
          _
        // Predicated region
        $region61: #{_encoder_pallas.1} parent=11 // pred_check
          %p488 = pneg %p367
        $region62: #{_encoder_pallas.1} parent=11 // pred_check_branch
          %490 = sbr.rel (%p488) target = $region64
        $region63: #{_encoder_pallas.1} parent=11 // pred_region
          _
        $region64: #{_encoder_pallas.1} parent=11 // pred_fallthru
          _
        // Predicated region
        $region65: #{_encoder_pallas.1} parent=11 // pred_check
          %p491 = pneg %p388
        $region66: #{_encoder_pallas.1} parent=11 // pred_check_branch
          %493 = sbr.rel (%p491) target = $region68
        $region67: #{_encoder_pallas.1} parent=11 // pred_region
          _
        $region68: #{_encoder_pallas.1} parent=11 // pred_fallthru
          _
        // Predicated region
        $region69: #{_encoder_pallas.1} parent=11 // pred_check
          %p494 = pneg %p409
        $region70: #{_encoder_pallas.1} parent=11 // pred_check_branch
          %496 = sbr.rel (%p494) target = $region72
        $region71: #{_encoder_pallas.1} parent=11 // pred_region
          _
        $region72: #{_encoder_pallas.1} parent=11 // pred_fallthru
          _
      $region12: #{_encoder_pallas.1} parent=5 // pred_fallthru
        _
      %p497 = scmp.lt.s32.totalorder %s26, 2
      // Predicated region
      $region73: #{_encoder_pallas.1} parent=5 // pred_check
        %p498 = pneg %p497
      $region74: #{_encoder_pallas.1} parent=5 // pred_check_branch
        %500 = sbr.rel (%p498) target = $region76
      $region75: #{_encoder_pallas.1} parent=5 // pred_region
        // Predicated region
        $region77: #{_encoder_pallas.1} parent=75 // pred_check
          %p501 = pneg %p60
        $region78: #{_encoder_pallas.1} parent=75 // pred_check_branch
          %503 = sbr.rel (%p501) target = $region80
        $region79: #{_encoder_pallas.1} parent=75 // pred_region
          %s504 = smul.u32 2, %s34
          %p505 = scmp.lt.s32.totalorder %s33, 1
          %s506 = scalar_select %p505, %s33, 1
          %p507 = scmp.lt.s32.totalorder %s504, 1
          %s508 = scalar_select %p507, %s504, 1
          %s509 = smul.addr %s506, 2
          %s510 = sadd.s32 %s508, %s509
          %s511 = smul.addr %s510, 4
          %s512 = scalar_lea.vmem %s0, %s511
          %s513 = smul.u32 2, %s34
        $region80: #{_encoder_pallas.1} parent=75 // pred_fallthru
          _
        // Predicated region
        $region81: #{_encoder_pallas.1} parent=75 // pred_check
          %p514 = pneg %p88
        $region82: #{_encoder_pallas.1} parent=75 // pred_check_branch
          %516 = sbr.rel (%p514) target = $region84
        $region83: #{_encoder_pallas.1} parent=75 // pred_region
          %s517 = smul.u32 2, %s34
          %p518 = scmp.lt.s32.totalorder %s33, 1
          %s519 = scalar_select %p518, %s33, 1
          %p520 = scmp.lt.s32.totalorder %s517, 1
          %s521 = scalar_select %p520, %s517, 1
          %s522 = smul.addr %s519, 2
          %s523 = sadd.s32 %s521, %s522
          %s524 = smul.addr %s523, 4
          %s525 = scalar_lea.vmem %s1, %s524
          %s526 = smul.u32 2, %s34
        $region84: #{_encoder_pallas.1} parent=75 // pred_fallthru
          _
      $region76: #{_encoder_pallas.1} parent=5 // pred_fallthru
        _
      %p527 = scmp.le.s32.totalorder 1, %s26
      %p528 = scmp.lt.s32.totalorder %s26, 3
      %p529 = pnand %p527, %p528
      %p530 = pneg %p529
      // Predicated region
      $region85: #{_encoder_pallas.1} parent=5 // pred_check
        _
      $region86: #{_encoder_pallas.1} parent=5 // pred_check_branch
        %532 = sbr.rel (%p529) target = $region88
      $region87: #{_encoder_pallas.1} parent=5 // pred_region
        %s533 = ssub.s32 %s26, 1
        %s534 = smul.u32 2, %s36
        %p535 = scmp.lt.s32.totalorder %s35, 1
        %s536 = scalar_select %p535, %s35, 1
        %p537 = scmp.lt.s32.totalorder %s534, 1
        %s538 = scalar_select %p537, %s534, 1
        %s539 = smul.addr %s536, 2
        %s540 = sadd.s32 %s538, %s539
        %s541 = smul.addr %s540, 4
        %s542 = scalar_lea.vmem %s0, %s541
        %p543 = pneg %p66
        %p544 = pneg %p63
        %s545 = smul.u32 2, %s36
        %p546 = scmp.lt.s32.totalorder %s35, 1
        %s547 = scalar_select %p546, %s35, 1
        %p548 = scmp.lt.s32.totalorder %s545, 1
        %s549 = scalar_select %p548, %s545, 1
        %s550 = smul.addr %s547, 2
        %s551 = sadd.s32 %s549, %s550
        %s552 = smul.addr %s551, 4
        %s553 = scalar_lea.vmem %s1, %s552
        %p554 = pneg %p94
        %p555 = pneg %p91
        %p556 = pneg %p115
        %p557 = pneg %p112
        %p558 = pneg %p136
        %p559 = pneg %p133
        %p560 = pneg %p157
        %p561 = pneg %p154
        %p562 = pneg %p178
        %p563 = pneg %p175
        %p564 = pneg %p199
        %p565 = pneg %p196
        %p566 = pneg %p220
        %p567 = pneg %p217
        %p568 = pneg %p241
        %p569 = pneg %p238
        %p570 = pneg %p262
        %p571 = pneg %p259
        %p572 = pneg %p283
        %p573 = pneg %p280
        %p574 = pneg %p304
        %p575 = pneg %p301
        %p576 = pneg %p325
        %p577 = pneg %p322
        %p578 = pneg %p346
        %p579 = pneg %p343
        %p580 = pneg %p367
        %p581 = pneg %p364
        %p582 = pneg %p388
        %p583 = pneg %p385
        %p584 = pneg %p409
        %p585 = pneg %p406
        %p586 = pneg %p437
        %p587 = pneg %p434
        %s588 = sand.u32 %s424, 1
        %s589 = scalar_lea.sflag [#allocation3], %s588
        %s590 = sand.u32 %s424, 1
        %s591 = smul.addr %s590, 8
        %s592 = scalar_lea.vmem [#allocation2], %s591
        %s593 = smul.u32 2, %s36
        %p594 = scmp.lt.s32.totalorder %s35, 1
        %s595 = scalar_select %p594, %s35, 1
        %p596 = scmp.lt.s32.totalorder %s593, 1
        %s597 = scalar_select %p596, %s593, 1
        %s598 = smul.addr %s595, 2
        %s599 = sadd.s32 %s597, %s598
        %s600 = smul.addr %s599, 4
        %s601 = scalar_lea.vmem %s0, %s600
        %s602 = smul.u32 2, %s36
        %s603 = smul.u32 2, %s36
        %p604 = scmp.lt.s32.totalorder %s35, 1
        %s605 = scalar_select %p604, %s35, 1
        %p606 = scmp.lt.s32.totalorder %s603, 1
        %s607 = scalar_select %p606, %s603, 1
        %s608 = smul.addr %s605, 2
        %s609 = sadd.s32 %s607, %s608
        %s610 = smul.addr %s609, 4
        %s611 = scalar_lea.vmem %s1, %s610
        %s612 = smul.u32 2, %s36
        %s613 = smul.u32 2, %s36
        %v614 = vld [vmem:[%s601] sm:$0xff]
        %v615 = vld [vmem:[%s611] sm:$0xff]
        %v617 = vcombine.high %v614, %v614
        %v620 = vcombine.high %v615, %v615
        %v622 = vld [vmem:[%s2] sm:$0xf]
        %v623 = vld [vmem:[%s3] sm:$0xf]
        %v624 = vld [vmem:[%s4] sm:$0xf]
        %v625 = vld [vmem:[%s5] sm:$0xf]
        %v626 = vld [vmem:[%s6] sm:$0xf]
        %v627 = vld [vmem:[%s7] sm:$0xf]
        %v628 = vld [vmem:[%s8] sm:$0xf]
        %v629 = vld [vmem:[%s9] sm:$0xf]
        %vm630 = vcmask 1043456
        %v631 = vsel %vm630, %v614, 0.0
        %v632 = vrot.slane %v631, 4
        %v633 = vadd.f32 %v631, %v632
        %v634 = vrot.slane %v633, 2
        %v635 = vadd.f32 %v633, %v634
        %v636 = vrot.slane %v635, 1
        %v637 = vadd.f32 %v635, %v636
        %v638 = vsel %vm630, %v617, 0.0
        %v639 = vrot.slane %v638, 4
        %v640 = vadd.f32 %v638, %v639
        %v641 = vrot.slane %v640, 2
        %v642 = vadd.f32 %v640, %v641
        %v643 = vrot.slane %v642, 1
        %v644 = vadd.f32 %v642, %v643
        %v645 = vsel %vm630, %v615, 0.0
        %v646 = vrot.slane %v645, 4
        %v647 = vadd.f32 %v645, %v646
        %v648 = vrot.slane %v647, 2
        %v649 = vadd.f32 %v647, %v648
        %v650 = vrot.slane %v649, 1
        %v651 = vadd.f32 %v649, %v650
        %v652 = vsel %vm630, %v620, 0.0
        %v653 = vrot.slane %v652, 4
        %v654 = vadd.f32 %v652, %v653
        %v655 = vrot.slane %v654, 2
        %v656 = vadd.f32 %v654, %v655
        %v657 = vrot.slane %v656, 1
        %v658 = vadd.f32 %v656, %v657
        %v659 = vrcp.pop 4.0
        %v660 = vmul.f32 %v637, %v659
        %v661 = vmul.f32 %v644, %v659
        %v662 = vmul.f32 %v651, %v659
        %v663 = vmul.f32 %v658, %v659
        %v664 = vsub.f32 %v614, %v660
        %v665 = vsub.f32 %v617, %v661
        %v666 = vsub.f32 %v615, %v662
        %v667 = vsub.f32 %v620, %v663
        %v668 = vmul.f32 %v664, %v664
        %v669 = vmul.f32 %v665, %v665
        %v670 = vmul.f32 %v666, %v666
        %v671 = vmul.f32 %v667, %v667
        %v672 = vsel %vm630, %v668, 0.0
        %v673 = vrot.slane %v672, 4
        %v674 = vadd.f32 %v672, %v673
        %v675 = vrot.slane %v674, 2
        %v676 = vadd.f32 %v674, %v675
        %v677 = vrot.slane %v676, 1
        %v678 = vadd.f32 %v676, %v677
        %v679 = vsel %vm630, %v669, 0.0
        %v680 = vrot.slane %v679, 4
        %v681 = vadd.f32 %v679, %v680
        %v682 = vrot.slane %v681, 2
        %v683 = vadd.f32 %v681, %v682
        %v684 = vrot.slane %v683, 1
        %v685 = vadd.f32 %v683, %v684
        %v686 = vsel %vm630, %v670, 0.0
        %v687 = vrot.slane %v686, 4
        %v688 = vadd.f32 %v686, %v687
        %v689 = vrot.slane %v688, 2
        %v690 = vadd.f32 %v688, %v689
        %v691 = vrot.slane %v690, 1
        %v692 = vadd.f32 %v690, %v691
        %v693 = vsel %vm630, %v671, 0.0
        %v694 = vrot.slane %v693, 4
        %v695 = vadd.f32 %v693, %v694
        %v696 = vrot.slane %v695, 2
        %v697 = vadd.f32 %v695, %v696
        %v698 = vrot.slane %v697, 1
        %v699 = vadd.f32 %v697, %v698
        %v700 = vmul.f32 %v678, %v659
        %v701 = vmul.f32 %v685, %v659
        %v702 = vmul.f32 %v692, %v659
        %v703 = vmul.f32 %v699, %v659
        %v704 = vadd.f32 %v700, 1e-05
        %v705 = vadd.f32 %v701, 1e-05
        %v706 = vadd.f32 %v702, 1e-05
        %v707 = vadd.f32 %v703, 1e-05
        %v708 = vrsqrt.pop %v704
        %v709 = vrsqrt.pop %v705
        %v710 = vrsqrt.pop %v706
        %v711 = vrsqrt.pop %v707
        %v712 = vmul.f32 %v664, %v708
        %v713 = vmul.f32 %v665, %v709
        %v714 = vmul.f32 %v666, %v710
        %v715 = vmul.f32 %v667, %v711
        %717 = vset.pattern.permute.xlu0 0
        %718 = vperm.xlu0 %717, %v622
        %v719 = vpop.permute.xlu0 %718
        %v721 = vmul.f32 %v712, %v719
        %v722 = vmul.f32 %v713, %v719
        %v723 = vmul.f32 %v714, %v719
        %v724 = vmul.f32 %v715, %v719
        %726 = vset.pattern.permute.xlu0 0
        %727 = vperm.xlu0 %726, %v623
        %v728 = vpop.permute.xlu0 %727
        %v730 = vadd.f32 %v721, %v728
        %v731 = vadd.f32 %v722, %v728
        %v732 = vadd.f32 %v723, %v728
        %v733 = vadd.f32 %v724, %v728
        %735 = vset.pattern.permute.xlu0 0
        %736 = vperm.xlu0 %735, %v624
        %v737 = vpop.permute.xlu0 %736
        %v739 = vlaneseq
        %v740 = vshrl.u32 %v739, 7
        %v741 = vsub.s32 0, %v740
        %v742 = vrot.slane %v730, %v741
        %v743 = vlaneseq
        %v744 = vshrl.u32 %v743, 7
        %v745 = vsub.s32 0, %v744
        %v746 = vrot.slane %v731, %v745
        %v747 = vlaneseq
        %v748 = vshrl.u32 %v747, 7
        %v749 = vsub.s32 0, %v748
        %v750 = vrot.slane %v732, %v749
        %v751 = vlaneseq
        %v752 = vshrl.u32 %v751, 7
        %v753 = vsub.s32 0, %v752
        %v754 = vrot.slane %v733, %v753
        %v755 = vmul.f32 %v737, %v742
        %v756 = vmul.f32 %v737, %v746
        %v757 = vmul.f32 %v737, %v750
        %v758 = vmul.f32 %v737, %v754
        %759 = vset.pattern.permute.xlu0 1
        %760 = vperm.xlu0 %759, %v624
        %v761 = vpop.permute.xlu0 %760
        %v763 = vlaneseq
        %v764 = vshrl.u32 %v763, 7
        %v765 = vsub.s32 1, %v764
        %v766 = vrot.slane %v730, %v765
        %v767 = vlaneseq
        %v768 = vshrl.u32 %v767, 7
        %v769 = vsub.s32 1, %v768
        %v770 = vrot.slane %v731, %v769
        %v771 = vlaneseq
        %v772 = vshrl.u32 %v771, 7
        %v773 = vsub.s32 1, %v772
        %v774 = vrot.slane %v732, %v773
        %v775 = vlaneseq
        %v776 = vshrl.u32 %v775, 7
        %v777 = vsub.s32 1, %v776
        %v778 = vrot.slane %v733, %v777
        %v779 = vmul.f32 %v761, %v766
        %v780 = vmul.f32 %v761, %v770
        %v781 = vmul.f32 %v761, %v774
        %v782 = vmul.f32 %v761, %v778
        %v783 = vadd.f32 %v755, %v779
        %v784 = vadd.f32 %v756, %v780
        %v785 = vadd.f32 %v757, %v781
        %v786 = vadd.f32 %v758, %v782
        %787 = vset.pattern.permute.xlu0 2
        %788 = vperm.xlu0 %787, %v624
        %v789 = vpop.permute.xlu0 %788
        %v791 = vlaneseq
        %v792 = vshrl.u32 %v791, 7
        %v793 = vsub.s32 2, %v792
        %v794 = vrot.slane %v730, %v793
        %v795 = vlaneseq
        %v796 = vshrl.u32 %v795, 7
        %v797 = vsub.s32 2, %v796
        %v798 = vrot.slane %v731, %v797
        %v799 = vlaneseq
        %v800 = vshrl.u32 %v799, 7
        %v801 = vsub.s32 2, %v800
        %v802 = vrot.slane %v732, %v801
        %v803 = vlaneseq
        %v804 = vshrl.u32 %v803, 7
        %v805 = vsub.s32 2, %v804
        %v806 = vrot.slane %v733, %v805
        %v807 = vmul.f32 %v789, %v794
        %v808 = vmul.f32 %v789, %v798
        %v809 = vmul.f32 %v789, %v802
        %v810 = vmul.f32 %v789, %v806
        %v811 = vadd.f32 %v783, %v807
        %v812 = vadd.f32 %v784, %v808
        %v813 = vadd.f32 %v785, %v809
        %v814 = vadd.f32 %v786, %v810
        %815 = vset.pattern.permute.xlu0 3
        %816 = vperm.xlu0 %815, %v624
        %v817 = vpop.permute.xlu0 %816
        %v819 = vlaneseq
        %v820 = vshrl.u32 %v819, 7
        %v821 = vsub.s32 3, %v820
        %v822 = vrot.slane %v730, %v821
        %v823 = vlaneseq
        %v824 = vshrl.u32 %v823, 7
        %v825 = vsub.s32 3, %v824
        %v826 = vrot.slane %v731, %v825
        %v827 = vlaneseq
        %v828 = vshrl.u32 %v827, 7
        %v829 = vsub.s32 3, %v828
        %v830 = vrot.slane %v732, %v829
        %v831 = vlaneseq
        %v832 = vshrl.u32 %v831, 7
        %v833 = vsub.s32 3, %v832
        %v834 = vrot.slane %v733, %v833
        %v835 = vmul.f32 %v817, %v822
        %v836 = vmul.f32 %v817, %v826
        %v837 = vmul.f32 %v817, %v830
        %v838 = vmul.f32 %v817, %v834
        %v839 = vadd.f32 %v811, %v835
        %v840 = vadd.f32 %v812, %v836
        %v841 = vadd.f32 %v813, %v837
        %v842 = vadd.f32 %v814, %v838
        %844 = vset.pattern.permute.xlu0 0
        %845 = vperm.xlu0 %844, %v625
        %v846 = vpop.permute.xlu0 %845
        %v848 = vadd.f32 %v839, %v846
        %v849 = vadd.f32 %v840, %v846
        %v850 = vadd.f32 %v841, %v846
        %v851 = vadd.f32 %v842, %v846
        %853 = vset.pattern.permute.xlu0 0
        %854 = vperm.xlu0 %853, %v626
        %v855 = vpop.permute.xlu0 %854
        %v857 = vmul.f32 %v855, %v742
        %v858 = vmul.f32 %v855, %v746
        %v859 = vmul.f32 %v855, %v750
        %v860 = vmul.f32 %v855, %v754
        %861 = vset.pattern.permute.xlu0 1
        %862 = vperm.xlu0 %861, %v626
        %v863 = vpop.permute.xlu0 %862
        %v865 = vmul.f32 %v863, %v766
        %v866 = vmul.f32 %v863, %v770
        %v867 = vmul.f32 %v863, %v774
        %v868 = vmul.f32 %v863, %v778
        %v869 = vadd.f32 %v857, %v865
        %v870 = vadd.f32 %v858, %v866
        %v871 = vadd.f32 %v859, %v867
        %v872 = vadd.f32 %v860, %v868
        %873 = vset.pattern.permute.xlu0 2
        %874 = vperm.xlu0 %873, %v626
        %v875 = vpop.permute.xlu0 %874
        %v877 = vmul.f32 %v875, %v794
        %v878 = vmul.f32 %v875, %v798
        %v879 = vmul.f32 %v875, %v802
        %v880 = vmul.f32 %v875, %v806
        %v881 = vadd.f32 %v869, %v877
        %v882 = vadd.f32 %v870, %v878
        %v883 = vadd.f32 %v871, %v879
        %v884 = vadd.f32 %v872, %v880
        %885 = vset.pattern.permute.xlu0 3
        %886 = vperm.xlu0 %885, %v626
        %v887 = vpop.permute.xlu0 %886
        %v889 = vmul.f32 %v887, %v822
        %v890 = vmul.f32 %v887, %v826
        %v891 = vmul.f32 %v887, %v830
        %v892 = vmul.f32 %v887, %v834
        %v893 = vadd.f32 %v881, %v889
        %v894 = vadd.f32 %v882, %v890
        %v895 = vadd.f32 %v883, %v891
        %v896 = vadd.f32 %v884, %v892
        %898 = vset.pattern.permute.xlu0 0
        %899 = vperm.xlu0 %898, %v627
        %v900 = vpop.permute.xlu0 %899
        %v902 = vadd.f32 %v893, %v900
        %v903 = vadd.f32 %v894, %v900
        %v904 = vadd.f32 %v895, %v900
        %v905 = vadd.f32 %v896, %v900
        %v906 = vxor.u32 %v848, 2147483648
        %v907 = vxor.u32 %v849, 2147483648
        %v908 = vxor.u32 %v850, 2147483648
        %v909 = vxor.u32 %v851, 2147483648
        %v910 = vmul.f32 %v906, 1.442695
        %v911 = vpow.pop %v910
        %v912 = vmul.f32 %v907, 1.442695
        %v913 = vpow.pop %v912
        %v914 = vmul.f32 %v908, 1.442695
        %v915 = vpow.pop %v914
        %v916 = vmul.f32 %v909, 1.442695
        %v917 = vpow.pop %v916
        %v918 = vadd.f32 %v911, 1.0
        %v919 = vadd.f32 %v913, 1.0
        %v920 = vadd.f32 %v915, 1.0
        %v921 = vadd.f32 %v917, 1.0
        %v922 = vrcp.pop %v918
        %v923 = vmul.f32 1.0, %v922
        %v924 = vrcp.pop %v919
        %v925 = vmul.f32 1.0, %v924
        %v926 = vrcp.pop %v920
        %v927 = vmul.f32 1.0, %v926
        %v928 = vrcp.pop %v921
        %v929 = vmul.f32 1.0, %v928
        %v930 = vmul.f32 %v848, %v923
        %v931 = vmul.f32 %v849, %v925
        %v932 = vmul.f32 %v850, %v927
        %v933 = vmul.f32 %v851, %v929
        %v934 = vxor.u32 %v902, 2147483648
        %v935 = vxor.u32 %v903, 2147483648
        %v936 = vxor.u32 %v904, 2147483648
        %v937 = vxor.u32 %v905, 2147483648
        %v938 = vmul.f32 %v934, 1.442695
        %v939 = vpow.pop %v938
        %v940 = vmul.f32 %v935, 1.442695
        %v941 = vpow.pop %v940
        %v942 = vmul.f32 %v936, 1.442695
        %v943 = vpow.pop %v942
        %v944 = vmul.f32 %v937, 1.442695
        %v945 = vpow.pop %v944
        %v946 = vadd.f32 %v939, 1.0
        %v947 = vadd.f32 %v941, 1.0
        %v948 = vadd.f32 %v943, 1.0
        %v949 = vadd.f32 %v945, 1.0
        %v950 = vrcp.pop %v946
        %v951 = vmul.f32 1.0, %v950
        %v952 = vrcp.pop %v947
        %v953 = vmul.f32 1.0, %v952
        %v954 = vrcp.pop %v948
        %v955 = vmul.f32 1.0, %v954
        %v956 = vrcp.pop %v949
        %v957 = vmul.f32 1.0, %v956
        %v958 = vmul.f32 %v902, %v951
        %v959 = vmul.f32 %v903, %v953
        %v960 = vmul.f32 %v904, %v955
        %v961 = vmul.f32 %v905, %v957
        %v962 = vmul.f32 %v930, %v958
        %v963 = vmul.f32 %v931, %v959
        %v964 = vmul.f32 %v932, %v960
        %v965 = vmul.f32 %v933, %v961
        %967 = vset.pattern.permute.xlu0 0
        %968 = vperm.xlu0 %967, %v628
        %v969 = vpop.permute.xlu0 %968
        %v971 = vlaneseq
        %v972 = vshrl.u32 %v971, 7
        %v973 = vsub.s32 0, %v972
        %v974 = vrot.slane %v962, %v973
        %v975 = vlaneseq
        %v976 = vshrl.u32 %v975, 7
        %v977 = vsub.s32 0, %v976
        %v978 = vrot.slane %v963, %v977
        %v979 = vlaneseq
        %v980 = vshrl.u32 %v979, 7
        %v981 = vsub.s32 0, %v980
        %v982 = vrot.slane %v964, %v981
        %v983 = vlaneseq
        %v984 = vshrl.u32 %v983, 7
        %v985 = vsub.s32 0, %v984
        %v986 = vrot.slane %v965, %v985
        %v987 = vmul.f32 %v969, %v974
        %v988 = vmul.f32 %v969, %v978
        %v989 = vmul.f32 %v969, %v982
        %v990 = vmul.f32 %v969, %v986
        %991 = vset.pattern.permute.xlu0 1
        %992 = vperm.xlu0 %991, %v628
        %v993 = vpop.permute.xlu0 %992
        %v995 = vlaneseq
        %v996 = vshrl.u32 %v995, 7
        %v997 = vsub.s32 1, %v996
        %v998 = vrot.slane %v962, %v997
        %v999 = vlaneseq
        %v1000 = vshrl.u32 %v999, 7
        %v1001 = vsub.s32 1, %v1000
        %v1002 = vrot.slane %v963, %v1001
        %v1003 = vlaneseq
        %v1004 = vshrl.u32 %v1003, 7
        %v1005 = vsub.s32 1, %v1004
        %v1006 = vrot.slane %v964, %v1005
        %v1007 = vlaneseq
        %v1008 = vshrl.u32 %v1007, 7
        %v1009 = vsub.s32 1, %v1008
        %v1010 = vrot.slane %v965, %v1009
        %v1011 = vmul.f32 %v993, %v998
        %v1012 = vmul.f32 %v993, %v1002
        %v1013 = vmul.f32 %v993, %v1006
        %v1014 = vmul.f32 %v993, %v1010
        %v1015 = vadd.f32 %v987, %v1011
        %v1016 = vadd.f32 %v988, %v1012
        %v1017 = vadd.f32 %v989, %v1013
        %v1018 = vadd.f32 %v990, %v1014
        %1019 = vset.pattern.permute.xlu0 2
        %1020 = vperm.xlu0 %1019, %v628
        %v1021 = vpop.permute.xlu0 %1020
        %v1023 = vlaneseq
        %v1024 = vshrl.u32 %v1023, 7
        %v1025 = vsub.s32 2, %v1024
        %v1026 = vrot.slane %v962, %v1025
        %v1027 = vlaneseq
        %v1028 = vshrl.u32 %v1027, 7
        %v1029 = vsub.s32 2, %v1028
        %v1030 = vrot.slane %v963, %v1029
        %v1031 = vlaneseq
        %v1032 = vshrl.u32 %v1031, 7
        %v1033 = vsub.s32 2, %v1032
        %v1034 = vrot.slane %v964, %v1033
        %v1035 = vlaneseq
        %v1036 = vshrl.u32 %v1035, 7
        %v1037 = vsub.s32 2, %v1036
        %v1038 = vrot.slane %v965, %v1037
        %v1039 = vmul.f32 %v1021, %v1026
        %v1040 = vmul.f32 %v1021, %v1030
        %v1041 = vmul.f32 %v1021, %v1034
        %v1042 = vmul.f32 %v1021, %v1038
        %v1043 = vadd.f32 %v1015, %v1039
        %v1044 = vadd.f32 %v1016, %v1040
        %v1045 = vadd.f32 %v1017, %v1041
        %v1046 = vadd.f32 %v1018, %v1042
        %1047 = vset.pattern.permute.xlu0 3
        %1048 = vperm.xlu0 %1047, %v628
        %v1049 = vpop.permute.xlu0 %1048
        %v1051 = vlaneseq
        %v1052 = vshrl.u32 %v1051, 7
        %v1053 = vsub.s32 3, %v1052
        %v1054 = vrot.slane %v962, %v1053
        %v1055 = vlaneseq
        %v1056 = vshrl.u32 %v1055, 7
        %v1057 = vsub.s32 3, %v1056
        %v1058 = vrot.slane %v963, %v1057
        %v1059 = vlaneseq
        %v1060 = vshrl.u32 %v1059, 7
        %v1061 = vsub.s32 3, %v1060
        %v1062 = vrot.slane %v964, %v1061
        %v1063 = vlaneseq
        %v1064 = vshrl.u32 %v1063, 7
        %v1065 = vsub.s32 3, %v1064
        %v1066 = vrot.slane %v965, %v1065
        %v1067 = vmul.f32 %v1049, %v1054
        %v1068 = vmul.f32 %v1049, %v1058
        %v1069 = vmul.f32 %v1049, %v1062
        %v1070 = vmul.f32 %v1049, %v1066
        %v1071 = vadd.f32 %v1043, %v1067
        %v1072 = vadd.f32 %v1044, %v1068
        %v1073 = vadd.f32 %v1045, %v1069
        %v1074 = vadd.f32 %v1046, %v1070
        %1076 = vset.pattern.permute.xlu0 0
        %1077 = vperm.xlu0 %1076, %v629
        %v1078 = vpop.permute.xlu0 %1077
        %v1080 = vadd.f32 %v1071, %v1078
        %v1081 = vadd.f32 %v1072, %v1078
        %v1082 = vadd.f32 %v1073, %v1078
        %v1083 = vadd.f32 %v1074, %v1078
        %v1084 = vadd.f32 %v614, %v1080
        %v1085 = vadd.f32 %v617, %v1081
        %v1086 = vadd.f32 %v615, %v1082
        %v1087 = vadd.f32 %v620, %v1083
        %s1088 = scalar_lea.vmem %s2, 4
        %v1089 = vld [vmem:[%s1088] sm:$0xf]
        %s1090 = scalar_lea.vmem %s3, 4
        %v1091 = vld [vmem:[%s1090] sm:$0xf]
        %s1092 = scalar_lea.vmem %s4, 4
        %v1093 = vld [vmem:[%s1092] sm:$0xf]
        %s1094 = scalar_lea.vmem %s5, 4
        %v1095 = vld [vmem:[%s1094] sm:$0xf]
        %s1096 = scalar_lea.vmem %s6, 4
        %v1097 = vld [vmem:[%s1096] sm:$0xf]
        %s1098 = scalar_lea.vmem %s7, 4
        %v1099 = vld [vmem:[%s1098] sm:$0xf]
        %s1100 = scalar_lea.vmem %s8, 4
        %v1101 = vld [vmem:[%s1100] sm:$0xf]
        %s1102 = scalar_lea.vmem %s9, 4
        %v1103 = vld [vmem:[%s1102] sm:$0xf]
        %v1104 = vsel %vm630, %v1084, 0.0
        %v1105 = vrot.slane %v1104, 4
        %v1106 = vadd.f32 %v1104, %v1105
        %v1107 = vrot.slane %v1106, 2
        %v1108 = vadd.f32 %v1106, %v1107
        %v1109 = vrot.slane %v1108, 1
        %v1110 = vadd.f32 %v1108, %v1109
        %v1111 = vsel %vm630, %v1085, 0.0
        %v1112 = vrot.slane %v1111, 4
        %v1113 = vadd.f32 %v1111, %v1112
        %v1114 = vrot.slane %v1113, 2
        %v1115 = vadd.f32 %v1113, %v1114
        %v1116 = vrot.slane %v1115, 1
        %v1117 = vadd.f32 %v1115, %v1116
        %v1118 = vsel %vm630, %v1086, 0.0
        %v1119 = vrot.slane %v1118, 4
        %v1120 = vadd.f32 %v1118, %v1119
        %v1121 = vrot.slane %v1120, 2
        %v1122 = vadd.f32 %v1120, %v1121
        %v1123 = vrot.slane %v1122, 1
        %v1124 = vadd.f32 %v1122, %v1123
        %v1125 = vsel %vm630, %v1087, 0.0
        %v1126 = vrot.slane %v1125, 4
        %v1127 = vadd.f32 %v1125, %v1126
        %v1128 = vrot.slane %v1127, 2
        %v1129 = vadd.f32 %v1127, %v1128
        %v1130 = vrot.slane %v1129, 1
        %v1131 = vadd.f32 %v1129, %v1130
        %v1132 = vmul.f32 %v1110, %v659
        %v1133 = vmul.f32 %v1117, %v659
        %v1134 = vmul.f32 %v1124, %v659
        %v1135 = vmul.f32 %v1131, %v659
        %v1136 = vsub.f32 %v1084, %v1132
        %v1137 = vsub.f32 %v1085, %v1133
        %v1138 = vsub.f32 %v1086, %v1134
        %v1139 = vsub.f32 %v1087, %v1135
        %v1140 = vmul.f32 %v1136, %v1136
        %v1141 = vmul.f32 %v1137, %v1137
        %v1142 = vmul.f32 %v1138, %v1138
        %v1143 = vmul.f32 %v1139, %v1139
        %v1144 = vsel %vm630, %v1140, 0.0
        %v1145 = vrot.slane %v1144, 4
        %v1146 = vadd.f32 %v1144, %v1145
        %v1147 = vrot.slane %v1146, 2
        %v1148 = vadd.f32 %v1146, %v1147
        %v1149 = vrot.slane %v1148, 1
        %v1150 = vadd.f32 %v1148, %v1149
        %v1151 = vsel %vm630, %v1141, 0.0
        %v1152 = vrot.slane %v1151, 4
        %v1153 = vadd.f32 %v1151, %v1152
        %v1154 = vrot.slane %v1153, 2
        %v1155 = vadd.f32 %v1153, %v1154
        %v1156 = vrot.slane %v1155, 1
        %v1157 = vadd.f32 %v1155, %v1156
        %v1158 = vsel %vm630, %v1142, 0.0
        %v1159 = vrot.slane %v1158, 4
        %v1160 = vadd.f32 %v1158, %v1159
        %v1161 = vrot.slane %v1160, 2
        %v1162 = vadd.f32 %v1160, %v1161
        %v1163 = vrot.slane %v1162, 1
        %v1164 = vadd.f32 %v1162, %v1163
        %v1165 = vsel %vm630, %v1143, 0.0
        %v1166 = vrot.slane %v1165, 4
        %v1167 = vadd.f32 %v1165, %v1166
        %v1168 = vrot.slane %v1167, 2
        %v1169 = vadd.f32 %v1167, %v1168
        %v1170 = vrot.slane %v1169, 1
        %v1171 = vadd.f32 %v1169, %v1170
        %v1172 = vmul.f32 %v1150, %v659
        %v1173 = vmul.f32 %v1157, %v659
        %v1174 = vmul.f32 %v1164, %v659
        %v1175 = vmul.f32 %v1171, %v659
        %v1176 = vadd.f32 %v1172, 1e-05
        %v1177 = vadd.f32 %v1173, 1e-05
        %v1178 = vadd.f32 %v1174, 1e-05
        %v1179 = vadd.f32 %v1175, 1e-05
        %v1180 = vrsqrt.pop %v1176
        %v1181 = vrsqrt.pop %v1177
        %v1182 = vrsqrt.pop %v1178
        %v1183 = vrsqrt.pop %v1179
        %v1184 = vmul.f32 %v1136, %v1180
        %v1185 = vmul.f32 %v1137, %v1181
        %v1186 = vmul.f32 %v1138, %v1182
        %v1187 = vmul.f32 %v1139, %v1183
        %1189 = vset.pattern.permute.xlu0 0
        %1190 = vperm.xlu0 %1189, %v1089
        %v1191 = vpop.permute.xlu0 %1190
        %v1193 = vmul.f32 %v1184, %v1191
        %v1194 = vmul.f32 %v1185, %v1191
        %v1195 = vmul.f32 %v1186, %v1191
        %v1196 = vmul.f32 %v1187, %v1191
        %1198 = vset.pattern.permute.xlu0 0
        %1199 = vperm.xlu0 %1198, %v1091
        %v1200 = vpop.permute.xlu0 %1199
        %v1202 = vadd.f32 %v1193, %v1200
        %v1203 = vadd.f32 %v1194, %v1200
        %v1204 = vadd.f32 %v1195, %v1200
        %v1205 = vadd.f32 %v1196, %v1200
        %1207 = vset.pattern.permute.xlu0 0
        %1208 = vperm.xlu0 %1207, %v1093
        %v1209 = vpop.permute.xlu0 %1208
        %v1211 = vlaneseq
        %v1212 = vshrl.u32 %v1211, 7
        %v1213 = vsub.s32 0, %v1212
        %v1214 = vrot.slane %v1202, %v1213
        %v1215 = vlaneseq
        %v1216 = vshrl.u32 %v1215, 7
        %v1217 = vsub.s32 0, %v1216
        %v1218 = vrot.slane %v1203, %v1217
        %v1219 = vlaneseq
        %v1220 = vshrl.u32 %v1219, 7
        %v1221 = vsub.s32 0, %v1220
        %v1222 = vrot.slane %v1204, %v1221
        %v1223 = vlaneseq
        %v1224 = vshrl.u32 %v1223, 7
        %v1225 = vsub.s32 0, %v1224
        %v1226 = vrot.slane %v1205, %v1225
        %v1227 = vmul.f32 %v1209, %v1214
        %v1228 = vmul.f32 %v1209, %v1218
        %v1229 = vmul.f32 %v1209, %v1222
        %v1230 = vmul.f32 %v1209, %v1226
        %1231 = vset.pattern.permute.xlu0 1
        %1232 = vperm.xlu0 %1231, %v1093
        %v1233 = vpop.permute.xlu0 %1232
        %v1235 = vlaneseq
        %v1236 = vshrl.u32 %v1235, 7
        %v1237 = vsub.s32 1, %v1236
        %v1238 = vrot.slane %v1202, %v1237
        %v1239 = vlaneseq
        %v1240 = vshrl.u32 %v1239, 7
        %v1241 = vsub.s32 1, %v1240
        %v1242 = vrot.slane %v1203, %v1241
        %v1243 = vlaneseq
        %v1244 = vshrl.u32 %v1243, 7
        %v1245 = vsub.s32 1, %v1244
        %v1246 = vrot.slane %v1204, %v1245
        %v1247 = vlaneseq
        %v1248 = vshrl.u32 %v1247, 7
        %v1249 = vsub.s32 1, %v1248
        %v1250 = vrot.slane %v1205, %v1249
        %v1251 = vmul.f32 %v1233, %v1238
        %v1252 = vmul.f32 %v1233, %v1242
        %v1253 = vmul.f32 %v1233, %v1246
        %v1254 = vmul.f32 %v1233, %v1250
        %v1255 = vadd.f32 %v1227, %v1251
        %v1256 = vadd.f32 %v1228, %v1252
        %v1257 = vadd.f32 %v1229, %v1253
        %v1258 = vadd.f32 %v1230, %v1254
        %1259 = vset.pattern.permute.xlu0 2
        %1260 = vperm.xlu0 %1259, %v1093
        %v1261 = vpop.permute.xlu0 %1260
        %v1263 = vlaneseq
        %v1264 = vshrl.u32 %v1263, 7
        %v1265 = vsub.s32 2, %v1264
        %v1266 = vrot.slane %v1202, %v1265
        %v1267 = vlaneseq
        %v1268 = vshrl.u32 %v1267, 7
        %v1269 = vsub.s32 2, %v1268
        %v1270 = vrot.slane %v1203, %v1269
        %v1271 = vlaneseq
        %v1272 = vshrl.u32 %v1271, 7
        %v1273 = vsub.s32 2, %v1272
        %v1274 = vrot.slane %v1204, %v1273
        %v1275 = vlaneseq
        %v1276 = vshrl.u32 %v1275, 7
        %v1277 = vsub.s32 2, %v1276
        %v1278 = vrot.slane %v1205, %v1277
        %v1279 = vmul.f32 %v1261, %v1266
        %v1280 = vmul.f32 %v1261, %v1270
        %v1281 = vmul.f32 %v1261, %v1274
        %v1282 = vmul.f32 %v1261, %v1278
        %v1283 = vadd.f32 %v1255, %v1279
        %v1284 = vadd.f32 %v1256, %v1280
        %v1285 = vadd.f32 %v1257, %v1281
        %v1286 = vadd.f32 %v1258, %v1282
        %1287 = vset.pattern.permute.xlu0 3
        %1288 = vperm.xlu0 %1287, %v1093
        %v1289 = vpop.permute.xlu0 %1288
        %v1291 = vlaneseq
        %v1292 = vshrl.u32 %v1291, 7
        %v1293 = vsub.s32 3, %v1292
        %v1294 = vrot.slane %v1202, %v1293
        %v1295 = vlaneseq
        %v1296 = vshrl.u32 %v1295, 7
        %v1297 = vsub.s32 3, %v1296
        %v1298 = vrot.slane %v1203, %v1297
        %v1299 = vlaneseq
        %v1300 = vshrl.u32 %v1299, 7
        %v1301 = vsub.s32 3, %v1300
        %v1302 = vrot.slane %v1204, %v1301
        %v1303 = vlaneseq
        %v1304 = vshrl.u32 %v1303, 7
        %v1305 = vsub.s32 3, %v1304
        %v1306 = vrot.slane %v1205, %v1305
        %v1307 = vmul.f32 %v1289, %v1294
        %v1308 = vmul.f32 %v1289, %v1298
        %v1309 = vmul.f32 %v1289, %v1302
        %v1310 = vmul.f32 %v1289, %v1306
        %v1311 = vadd.f32 %v1283, %v1307
        %v1312 = vadd.f32 %v1284, %v1308
        %v1313 = vadd.f32 %v1285, %v1309
        %v1314 = vadd.f32 %v1286, %v1310
        %1316 = vset.pattern.permute.xlu0 0
        %1317 = vperm.xlu0 %1316, %v1095
        %v1318 = vpop.permute.xlu0 %1317
        %v1320 = vadd.f32 %v1311, %v1318
        %v1321 = vadd.f32 %v1312, %v1318
        %v1322 = vadd.f32 %v1313, %v1318
        %v1323 = vadd.f32 %v1314, %v1318
        %1325 = vset.pattern.permute.xlu0 0
        %1326 = vperm.xlu0 %1325, %v1097
        %v1327 = vpop.permute.xlu0 %1326
        %v1329 = vmul.f32 %v1327, %v1214
        %v1330 = vmul.f32 %v1327, %v1218
        %v1331 = vmul.f32 %v1327, %v1222
        %v1332 = vmul.f32 %v1327, %v1226
        %1333 = vset.pattern.permute.xlu0 1
        %1334 = vperm.xlu0 %1333, %v1097
        %v1335 = vpop.permute.xlu0 %1334
        %v1337 = vmul.f32 %v1335, %v1238
        %v1338 = vmul.f32 %v1335, %v1242
        %v1339 = vmul.f32 %v1335, %v1246
        %v1340 = vmul.f32 %v1335, %v1250
        %v1341 = vadd.f32 %v1329, %v1337
        %v1342 = vadd.f32 %v1330, %v1338
        %v1343 = vadd.f32 %v1331, %v1339
        %v1344 = vadd.f32 %v1332, %v1340
        %1345 = vset.pattern.permute.xlu0 2
        %1346 = vperm.xlu0 %1345, %v1097
        %v1347 = vpop.permute.xlu0 %1346
        %v1349 = vmul.f32 %v1347, %v1266
        %v1350 = vmul.f32 %v1347, %v1270
        %v1351 = vmul.f32 %v1347, %v1274
        %v1352 = vmul.f32 %v1347, %v1278
        %v1353 = vadd.f32 %v1341, %v1349
        %v1354 = vadd.f32 %v1342, %v1350
        %v1355 = vadd.f32 %v1343, %v1351
        %v1356 = vadd.f32 %v1344, %v1352
        %1357 = vset.pattern.permute.xlu0 3
        %1358 = vperm.xlu0 %1357, %v1097
        %v1359 = vpop.permute.xlu0 %1358
        %v1361 = vmul.f32 %v1359, %v1294
        %v1362 = vmul.f32 %v1359, %v1298
        %v1363 = vmul.f32 %v1359, %v1302
        %v1364 = vmul.f32 %v1359, %v1306
        %v1365 = vadd.f32 %v1353, %v1361
        %v1366 = vadd.f32 %v1354, %v1362
        %v1367 = vadd.f32 %v1355, %v1363
        %v1368 = vadd.f32 %v1356, %v1364
        %1370 = vset.pattern.permute.xlu0 0
        %1371 = vperm.xlu0 %1370, %v1099
        %v1372 = vpop.permute.xlu0 %1371
        %v1374 = vadd.f32 %v1365, %v1372
        %v1375 = vadd.f32 %v1366, %v1372
        %v1376 = vadd.f32 %v1367, %v1372
        %v1377 = vadd.f32 %v1368, %v1372
        %v1378 = vxor.u32 %v1320, 2147483648
        %v1379 = vxor.u32 %v1321, 2147483648
        %v1380 = vxor.u32 %v1322, 2147483648
        %v1381 = vxor.u32 %v1323, 2147483648
        %v1382 = vmul.f32 %v1378, 1.442695
        %v1383 = vpow.pop %v1382
        %v1384 = vmul.f32 %v1379, 1.442695
        %v1385 = vpow.pop %v1384
        %v1386 = vmul.f32 %v1380, 1.442695
        %v1387 = vpow.pop %v1386
        %v1388 = vmul.f32 %v1381, 1.442695
        %v1389 = vpow.pop %v1388
        %v1390 = vadd.f32 %v1383, 1.0
        %v1391 = vadd.f32 %v1385, 1.0
        %v1392 = vadd.f32 %v1387, 1.0
        %v1393 = vadd.f32 %v1389, 1.0
        %v1394 = vrcp.pop %v1390
        %v1395 = vmul.f32 1.0, %v1394
        %v1396 = vrcp.pop %v1391
        %v1397 = vmul.f32 1.0, %v1396
        %v1398 = vrcp.pop %v1392
        %v1399 = vmul.f32 1.0, %v1398
        %v1400 = vrcp.pop %v1393
        %v1401 = vmul.f32 1.0, %v1400
        %v1402 = vmul.f32 %v1320, %v1395
        %v1403 = vmul.f32 %v1321, %v1397
        %v1404 = vmul.f32 %v1322, %v1399
        %v1405 = vmul.f32 %v1323, %v1401
        %v1406 = vxor.u32 %v1374, 2147483648
        %v1407 = vxor.u32 %v1375, 2147483648
        %v1408 = vxor.u32 %v1376, 2147483648
        %v1409 = vxor.u32 %v1377, 2147483648
        %v1410 = vmul.f32 %v1406, 1.442695
        %v1411 = vpow.pop %v1410
        %v1412 = vmul.f32 %v1407, 1.442695
        %v1413 = vpow.pop %v1412
        %v1414 = vmul.f32 %v1408, 1.442695
        %v1415 = vpow.pop %v1414
        %v1416 = vmul.f32 %v1409, 1.442695
        %v1417 = vpow.pop %v1416
        %v1418 = vadd.f32 %v1411, 1.0
        %v1419 = vadd.f32 %v1413, 1.0
        %v1420 = vadd.f32 %v1415, 1.0
        %v1421 = vadd.f32 %v1417, 1.0
        %v1422 = vrcp.pop %v1418
        %v1423 = vmul.f32 1.0, %v1422
        %v1424 = vrcp.pop %v1419
        %v1425 = vmul.f32 1.0, %v1424
        %v1426 = vrcp.pop %v1420
        %v1427 = vmul.f32 1.0, %v1426
        %v1428 = vrcp.pop %v1421
        %v1429 = vmul.f32 1.0, %v1428
        %v1430 = vmul.f32 %v1374, %v1423
        %v1431 = vmul.f32 %v1375, %v1425
        %v1432 = vmul.f32 %v1376, %v1427
        %v1433 = vmul.f32 %v1377, %v1429
        %v1434 = vmul.f32 %v1402, %v1430
        %v1435 = vmul.f32 %v1403, %v1431
        %v1436 = vmul.f32 %v1404, %v1432
        %v1437 = vmul.f32 %v1405, %v1433
        %1439 = vset.pattern.permute.xlu0 0
        %1440 = vperm.xlu0 %1439, %v1101
        %v1441 = vpop.permute.xlu0 %1440
        %v1443 = vlaneseq
        %v1444 = vshrl.u32 %v1443, 7
        %v1445 = vsub.s32 0, %v1444
        %v1446 = vrot.slane %v1434, %v1445
        %v1447 = vlaneseq
        %v1448 = vshrl.u32 %v1447, 7
        %v1449 = vsub.s32 0, %v1448
        %v1450 = vrot.slane %v1435, %v1449
        %v1451 = vlaneseq
        %v1452 = vshrl.u32 %v1451, 7
        %v1453 = vsub.s32 0, %v1452
        %v1454 = vrot.slane %v1436, %v1453
        %v1455 = vlaneseq
        %v1456 = vshrl.u32 %v1455, 7
        %v1457 = vsub.s32 0, %v1456
        %v1458 = vrot.slane %v1437, %v1457
        %v1459 = vmul.f32 %v1441, %v1446
        %v1460 = vmul.f32 %v1441, %v1450
        %v1461 = vmul.f32 %v1441, %v1454
        %v1462 = vmul.f32 %v1441, %v1458
        %1463 = vset.pattern.permute.xlu0 1
        %1464 = vperm.xlu0 %1463, %v1101
        %v1465 = vpop.permute.xlu0 %1464
        %v1467 = vlaneseq
        %v1468 = vshrl.u32 %v1467, 7
        %v1469 = vsub.s32 1, %v1468
        %v1470 = vrot.slane %v1434, %v1469
        %v1471 = vlaneseq
        %v1472 = vshrl.u32 %v1471, 7
        %v1473 = vsub.s32 1, %v1472
        %v1474 = vrot.slane %v1435, %v1473
        %v1475 = vlaneseq
        %v1476 = vshrl.u32 %v1475, 7
        %v1477 = vsub.s32 1, %v1476
        %v1478 = vrot.slane %v1436, %v1477
        %v1479 = vlaneseq
        %v1480 = vshrl.u32 %v1479, 7
        %v1481 = vsub.s32 1, %v1480
        %v1482 = vrot.slane %v1437, %v1481
        %v1483 = vmul.f32 %v1465, %v1470
        %v1484 = vmul.f32 %v1465, %v1474
        %v1485 = vmul.f32 %v1465, %v1478
        %v1486 = vmul.f32 %v1465, %v1482
        %v1487 = vadd.f32 %v1459, %v1483
        %v1488 = vadd.f32 %v1460, %v1484
        %v1489 = vadd.f32 %v1461, %v1485
        %v1490 = vadd.f32 %v1462, %v1486
        %1491 = vset.pattern.permute.xlu0 2
        %1492 = vperm.xlu0 %1491, %v1101
        %v1493 = vpop.permute.xlu0 %1492
        %v1495 = vlaneseq
        %v1496 = vshrl.u32 %v1495, 7
        %v1497 = vsub.s32 2, %v1496
        %v1498 = vrot.slane %v1434, %v1497
        %v1499 = vlaneseq
        %v1500 = vshrl.u32 %v1499, 7
        %v1501 = vsub.s32 2, %v1500
        %v1502 = vrot.slane %v1435, %v1501
        %v1503 = vlaneseq
        %v1504 = vshrl.u32 %v1503, 7
        %v1505 = vsub.s32 2, %v1504
        %v1506 = vrot.slane %v1436, %v1505
        %v1507 = vlaneseq
        %v1508 = vshrl.u32 %v1507, 7
        %v1509 = vsub.s32 2, %v1508
        %v1510 = vrot.slane %v1437, %v1509
        %v1511 = vmul.f32 %v1493, %v1498
        %v1512 = vmul.f32 %v1493, %v1502
        %v1513 = vmul.f32 %v1493, %v1506
        %v1514 = vmul.f32 %v1493, %v1510
        %v1515 = vadd.f32 %v1487, %v1511
        %v1516 = vadd.f32 %v1488, %v1512
        %v1517 = vadd.f32 %v1489, %v1513
        %v1518 = vadd.f32 %v1490, %v1514
        %1519 = vset.pattern.permute.xlu0 3
        %1520 = vperm.xlu0 %1519, %v1101
        %v1521 = vpop.permute.xlu0 %1520
        %v1523 = vlaneseq
        %v1524 = vshrl.u32 %v1523, 7
        %v1525 = vsub.s32 3, %v1524
        %v1526 = vrot.slane %v1434, %v1525
        %v1527 = vlaneseq
        %v1528 = vshrl.u32 %v1527, 7
        %v1529 = vsub.s32 3, %v1528
        %v1530 = vrot.slane %v1435, %v1529
        %v1531 = vlaneseq
        %v1532 = vshrl.u32 %v1531, 7
        %v1533 = vsub.s32 3, %v1532
        %v1534 = vrot.slane %v1436, %v1533
        %v1535 = vlaneseq
        %v1536 = vshrl.u32 %v1535, 7
        %v1537 = vsub.s32 3, %v1536
        %v1538 = vrot.slane %v1437, %v1537
        %v1539 = vmul.f32 %v1521, %v1526
        %v1540 = vmul.f32 %v1521, %v1530
        %v1541 = vmul.f32 %v1521, %v1534
        %v1542 = vmul.f32 %v1521, %v1538
        %v1543 = vadd.f32 %v1515, %v1539
        %v1544 = vadd.f32 %v1516, %v1540
        %v1545 = vadd.f32 %v1517, %v1541
        %v1546 = vadd.f32 %v1518, %v1542
        %1548 = vset.pattern.permute.xlu0 0
        %1549 = vperm.xlu0 %1548, %v1103
        %v1550 = vpop.permute.xlu0 %1549
        %v1552 = vadd.f32 %v1543, %v1550
        %v1553 = vadd.f32 %v1544, %v1550
        %v1554 = vadd.f32 %v1545, %v1550
        %v1555 = vadd.f32 %v1546, %v1550
        %v1556 = vadd.f32 %v1084, %v1552
        %v1557 = vadd.f32 %v1085, %v1553
        %v1558 = vadd.f32 %v1086, %v1554
        %v1559 = vadd.f32 %v1087, %v1555
        %v1560 = vsub.f32 %v1556, %v1558
        %v1561 = vsub.f32 %v1557, %v1559
        %v1562 = vand.u32 2147483647, %v1560
        %v1563 = vand.u32 2147483647, %v1561
        %v1564 = vadd.f32 %v1556, %v1558
        %v1565 = vadd.f32 %v1557, %v1559
        %v1566 = vsel %vm630, %v1562, 0.0
        %v1567 = vrot.slane %v1566, 4
        %v1568 = vadd.f32 %v1566, %v1567
        %v1569 = vrot.slane %v1568, 2
        %v1570 = vadd.f32 %v1568, %v1569
        %v1571 = vrot.slane %v1570, 1
        %v1572 = vadd.f32 %v1570, %v1571
        %v1573 = vsel %vm630, %v1563, 0.0
        %v1574 = vrot.slane %v1573, 4
        %v1575 = vadd.f32 %v1573, %v1574
        %v1576 = vrot.slane %v1575, 2
        %v1577 = vadd.f32 %v1575, %v1576
        %v1578 = vrot.slane %v1577, 1
        %v1579 = vadd.f32 %v1577, %v1578
        %v1580 = vsel %vm630, %v1564, 0.0
        %v1581 = vrot.slane %v1580, 4
        %v1582 = vadd.f32 %v1580, %v1581
        %v1583 = vrot.slane %v1582, 2
        %v1584 = vadd.f32 %v1582, %v1583
        %v1585 = vrot.slane %v1584, 1
        %v1586 = vadd.f32 %v1584, %v1585
        %v1587 = vsel %vm630, %v1565, 0.0
        %v1588 = vrot.slane %v1587, 4
        %v1589 = vadd.f32 %v1587, %v1588
        %v1590 = vrot.slane %v1589, 2
        %v1591 = vadd.f32 %v1589, %v1590
        %v1592 = vrot.slane %v1591, 1
        %v1593 = vadd.f32 %v1591, %v1592
        %v1594 = vadd.f32 %v1572, %v1586
        %v1595 = vadd.f32 %v1579, %v1593
        %v1596 = vrcp.pop 8.0
        %v1597 = vmul.f32 %v1594, %v1596
        %v1598 = vmul.f32 %v1595, %v1596
        %v1599 = vsub.f32 %v1562, %v1597
        %v1600 = vsub.f32 %v1563, %v1598
        %v1601 = vmul.f32 %v1599, %v1599
        %v1602 = vmul.f32 %v1600, %v1600
        %v1603 = vsel %vm630, %v1601, 0.0
        %v1604 = vrot.slane %v1603, 4
        %v1605 = vadd.f32 %v1603, %v1604
        %v1606 = vrot.slane %v1605, 2
        %v1607 = vadd.f32 %v1605, %v1606
        %v1608 = vrot.slane %v1607, 1
        %v1609 = vadd.f32 %v1607, %v1608
        %v1610 = vsel %vm630, %v1602, 0.0
        %v1611 = vrot.slane %v1610, 4
        %v1612 = vadd.f32 %v1610, %v1611
        %v1613 = vrot.slane %v1612, 2
        %v1614 = vadd.f32 %v1612, %v1613
        %v1615 = vrot.slane %v1614, 1
        %v1616 = vadd.f32 %v1614, %v1615
        %v1617 = vsub.f32 %v1564, %v1597
        %v1618 = vsub.f32 %v1565, %v1598
        %v1619 = vmul.f32 %v1617, %v1617
        %v1620 = vmul.f32 %v1618, %v1618
        %v1621 = vsel %vm630, %v1619, 0.0
        %v1622 = vrot.slane %v1621, 4
        %v1623 = vadd.f32 %v1621, %v1622
        %v1624 = vrot.slane %v1623, 2
        %v1625 = vadd.f32 %v1623, %v1624
        %v1626 = vrot.slane %v1625, 1
        %v1627 = vadd.f32 %v1625, %v1626
        %v1628 = vsel %vm630, %v1620, 0.0
        %v1629 = vrot.slane %v1628, 4
        %v1630 = vadd.f32 %v1628, %v1629
        %v1631 = vrot.slane %v1630, 2
        %v1632 = vadd.f32 %v1630, %v1631
        %v1633 = vrot.slane %v1632, 1
        %v1634 = vadd.f32 %v1632, %v1633
        %v1635 = vadd.f32 %v1609, %v1627
        %v1636 = vadd.f32 %v1616, %v1634
        %v1637 = vmul.f32 %v1635, %v1596
        %v1638 = vmul.f32 %v1636, %v1596
        %v1639 = vadd.f32 %v1637, 1e-05
        %v1640 = vadd.f32 %v1638, 1e-05
        %v1641 = vrsqrt.pop %v1639
        %v1642 = vrsqrt.pop %v1640
        %v1643 = vmul.f32 %v1599, %v1641
        %v1644 = vmul.f32 %v1600, %v1642
        %v1645 = vld [vmem:[%s10] sm:$0xf]
        %1647 = vset.pattern.permute.xlu0 0
        %1648 = vperm.xlu0 %1647, %v1645
        %v1649 = vpop.permute.xlu0 %1648
        %v1651 = vmul.f32 %v1643, %v1649
        %v1652 = vmul.f32 %v1644, %v1649
        %v1653 = vld [vmem:[%s12] sm:$0xf]
        %1655 = vset.pattern.permute.xlu0 0
        %1656 = vperm.xlu0 %1655, %v1653
        %v1657 = vpop.permute.xlu0 %1656
        %v1659 = vadd.f32 %v1651, %v1657
        %v1660 = vadd.f32 %v1652, %v1657
        %v1661 = vmul.f32 %v1617, %v1641
        %v1662 = vmul.f32 %v1618, %v1642
        %v1663 = vld [vmem:[%s11] sm:$0xf]
        %1665 = vset.pattern.permute.xlu0 0
        %1666 = vperm.xlu0 %1665, %v1663
        %v1667 = vpop.permute.xlu0 %1666
        %v1669 = vmul.f32 %v1661, %v1667
        %v1670 = vmul.f32 %v1662, %v1667
        %v1671 = vld [vmem:[%s13] sm:$0xf]
        %1673 = vset.pattern.permute.xlu0 0
        %1674 = vperm.xlu0 %1673, %v1671
        %v1675 = vpop.permute.xlu0 %1674
        %v1677 = vadd.f32 %v1669, %v1675
        %v1678 = vadd.f32 %v1670, %v1675
        %v1679 = vld [vmem:[%s14] sm:$0xf]
        %1681 = vset.pattern.permute.xlu0 0
        %1682 = vperm.xlu0 %1681, %v1679
        %v1683 = vpop.permute.xlu0 %1682
        %v1685 = vlaneseq
        %v1686 = vshrl.u32 %v1685, 7
        %v1687 = vsub.s32 0, %v1686
        %v1688 = vrot.slane %v1659, %v1687
        %v1689 = vlaneseq
        %v1690 = vshrl.u32 %v1689, 7
        %v1691 = vsub.s32 0, %v1690
        %v1692 = vrot.slane %v1660, %v1691
        %v1693 = vmul.f32 %v1683, %v1688
        %v1694 = vmul.f32 %v1683, %v1692
        %1695 = vset.pattern.permute.xlu0 1
        %1696 = vperm.xlu0 %1695, %v1679
        %v1697 = vpop.permute.xlu0 %1696
        %v1699 = vlaneseq
        %v1700 = vshrl.u32 %v1699, 7
        %v1701 = vsub.s32 1, %v1700
        %v1702 = vrot.slane %v1659, %v1701
        %v1703 = vlaneseq
        %v1704 = vshrl.u32 %v1703, 7
        %v1705 = vsub.s32 1, %v1704
        %v1706 = vrot.slane %v1660, %v1705
        %v1707 = vmul.f32 %v1697, %v1702
        %v1708 = vmul.f32 %v1697, %v1706
        %v1709 = vadd.f32 %v1693, %v1707
        %v1710 = vadd.f32 %v1694, %v1708
        %1711 = vset.pattern.permute.xlu0 2
        %1712 = vperm.xlu0 %1711, %v1679
        %v1713 = vpop.permute.xlu0 %1712
        %v1715 = vlaneseq
        %v1716 = vshrl.u32 %v1715, 7
        %v1717 = vsub.s32 2, %v1716
        %v1718 = vrot.slane %v1659, %v1717
        %v1719 = vlaneseq
        %v1720 = vshrl.u32 %v1719, 7
        %v1721 = vsub.s32 2, %v1720
        %v1722 = vrot.slane %v1660, %v1721
        %v1723 = vmul.f32 %v1713, %v1718
        %v1724 = vmul.f32 %v1713, %v1722
        %v1725 = vadd.f32 %v1709, %v1723
        %v1726 = vadd.f32 %v1710, %v1724
        %1727 = vset.pattern.permute.xlu0 3
        %1728 = vperm.xlu0 %1727, %v1679
        %v1729 = vpop.permute.xlu0 %1728
        %v1731 = vlaneseq
        %v1732 = vshrl.u32 %v1731, 7
        %v1733 = vsub.s32 3, %v1732
        %v1734 = vrot.slane %v1659, %v1733
        %v1735 = vlaneseq
        %v1736 = vshrl.u32 %v1735, 7
        %v1737 = vsub.s32 3, %v1736
        %v1738 = vrot.slane %v1660, %v1737
        %v1739 = vmul.f32 %v1729, %v1734
        %v1740 = vmul.f32 %v1729, %v1738
        %v1741 = vadd.f32 %v1725, %v1739
        %v1742 = vadd.f32 %v1726, %v1740
        %v1743 = vld [vmem:[%s15] sm:$0xf]
        %1745 = vset.pattern.permute.xlu0 0
        %1746 = vperm.xlu0 %1745, %v1743
        %v1747 = vpop.permute.xlu0 %1746
        %v1749 = vlaneseq
        %v1750 = vshrl.u32 %v1749, 7
        %v1751 = vsub.s32 0, %v1750
        %v1752 = vrot.slane %v1677, %v1751
        %v1753 = vlaneseq
        %v1754 = vshrl.u32 %v1753, 7
        %v1755 = vsub.s32 0, %v1754
        %v1756 = vrot.slane %v1678, %v1755
        %v1757 = vmul.f32 %v1747, %v1752
        %v1758 = vmul.f32 %v1747, %v1756
        %1759 = vset.pattern.permute.xlu0 1
        %1760 = vperm.xlu0 %1759, %v1743
        %v1761 = vpop.permute.xlu0 %1760
        %v1763 = vlaneseq
        %v1764 = vshrl.u32 %v1763, 7
        %v1765 = vsub.s32 1, %v1764
        %v1766 = vrot.slane %v1677, %v1765
        %v1767 = vlaneseq
        %v1768 = vshrl.u32 %v1767, 7
        %v1769 = vsub.s32 1, %v1768
        %v1770 = vrot.slane %v1678, %v1769
        %v1771 = vmul.f32 %v1761, %v1766
        %v1772 = vmul.f32 %v1761, %v1770
        %v1773 = vadd.f32 %v1757, %v1771
        %v1774 = vadd.f32 %v1758, %v1772
        %1775 = vset.pattern.permute.xlu0 2
        %1776 = vperm.xlu0 %1775, %v1743
        %v1777 = vpop.permute.xlu0 %1776
        %v1779 = vlaneseq
        %v1780 = vshrl.u32 %v1779, 7
        %v1781 = vsub.s32 2, %v1780
        %v1782 = vrot.slane %v1677, %v1781
        %v1783 = vlaneseq
        %v1784 = vshrl.u32 %v1783, 7
        %v1785 = vsub.s32 2, %v1784
        %v1786 = vrot.slane %v1678, %v1785
        %v1787 = vmul.f32 %v1777, %v1782
        %v1788 = vmul.f32 %v1777, %v1786
        %v1789 = vadd.f32 %v1773, %v1787
        %v1790 = vadd.f32 %v1774, %v1788
        %1791 = vset.pattern.permute.xlu0 3
        %1792 = vperm.xlu0 %1791, %v1743
        %v1793 = vpop.permute.xlu0 %1792
        %v1795 = vlaneseq
        %v1796 = vshrl.u32 %v1795, 7
        %v1797 = vsub.s32 3, %v1796
        %v1798 = vrot.slane %v1677, %v1797
        %v1799 = vlaneseq
        %v1800 = vshrl.u32 %v1799, 7
        %v1801 = vsub.s32 3, %v1800
        %v1802 = vrot.slane %v1678, %v1801
        %v1803 = vmul.f32 %v1793, %v1798
        %v1804 = vmul.f32 %v1793, %v1802
        %v1805 = vadd.f32 %v1789, %v1803
        %v1806 = vadd.f32 %v1790, %v1804
        %v1807 = vadd.f32 %v1741, %v1805
        %v1808 = vadd.f32 %v1742, %v1806
        %v1809 = vld [vmem:[%s16] sm:$0xf]
        %1811 = vset.pattern.permute.xlu0 0
        %1812 = vperm.xlu0 %1811, %v1809
        %v1813 = vpop.permute.xlu0 %1812
        %v1815 = vadd.f32 %v1807, %v1813
        %v1816 = vadd.f32 %v1808, %v1813
        %v1819 = vcombine.low %v1815, %v1816
        %1821 = vst [vmem:[%s592] sm:$0xff] %v1819
        %s1822 = sand.u32 %s424, 1
        %s1823 = scalar_lea.sflag [#allocation3], %s1822
        %s1824 = sand.u32 %s424, 1
        %s1825 = smul.addr %s1824, 8
        %s1826 = scalar_lea.vmem [#allocation2], %s1825
        // Predicated region
        $region89: #{_encoder_pallas.1} parent=87 // pred_check
          %p1827 = pneg %p434
        $region90: #{_encoder_pallas.1} parent=87 // pred_check_branch
          %1829 = sbr.rel (%p1827) target = $region92
        $region91: #{_encoder_pallas.1} parent=87 // pred_region
          %s1830 = smul.u32 2, %s36
          %s1832 = ssub.s32 128, 128
          %1833 = vsyncadd %s1823, %s1832
          %s1834 = smul.addr %s35, 2
          %s1835 = sadd.s32 %s1830, %s1834
          %s1836 = smul.addr %s1835, 64
          %s1837 = scalar_lea.hbm %s17, %s1836
          %s1839 = sshll.u32 %s1826, 4
          %s1840 = int_to_ptr.vmem [resolvable:$true] %s1839
          %1842 = dma.vmem_to_hbm [thread:$0]  %s1840, 128, %s1837, %s1823
        $region92: #{_encoder_pallas.1} parent=87 // pred_fallthru
          _
      $region88: #{_encoder_pallas.1} parent=5 // pred_fallthru
        _
      %p1843 = scmp.le.s32.totalorder 2, %s26
      // Predicated region
      $region93: #{_encoder_pallas.1} parent=5 // pred_check
        %p1844 = pneg %p1843
      $region94: #{_encoder_pallas.1} parent=5 // pred_check_branch
        %1846 = sbr.rel (%p1844) target = $region96
      $region95: #{_encoder_pallas.1} parent=5 // pred_region
        %s1847 = ssub.s32 %s26, 2
        // Predicated region
        $region97: #{_encoder_pallas.1} parent=95 // pred_check
          %p1848 = pneg %p440
        $region98: #{_encoder_pallas.1} parent=95 // pred_check_branch
          %1850 = sbr.rel (%p1848) target = $region100
        $region99: #{_encoder_pallas.1} parent=95 // pred_region
          %s1851 = sand.u32 %s425, 1
          %s1852 = scalar_lea.sflag [#allocation3], %s1851
          %s1853 = sand.u32 %s425, 1
          %s1854 = smul.addr %s1853, 8
          %s1855 = scalar_lea.vmem [#allocation2], %s1854
          %1856 = dma.done %s1852, 128
        $region100: #{_encoder_pallas.1} parent=95 // pred_fallthru
          _
      $region96: #{_encoder_pallas.1} parent=5 // pred_fallthru
        _
    $region6: #{_encoder_pallas.1} parent=1 // loop_footer
      %s30 = sadd.s32 1, %s26
    $region7: #{_encoder_pallas.1} parent=1 // loop_footer_branch
      %25 = sbr.rel target = $region3
    $region8: #{_encoder_pallas.1} parent=1 // loop_exit
      _
    %1857 = vsyncpa [#allocation3], 1
    %s1858 = scalar_lea.sflag [#allocation3], 1
    %1859 = vsyncpa %s1858, 1

</llo_original>
